<compile_context>
chip_gen: v7x
topology: tpu7x:2x2x1
jax: 0.10.0
libtpu: 0.0.40
codegen_flags: <defaults>
</compile_context>

<pallas_src>
import jax
import jax.numpy as jnp
from jax.experimental import pallas as pl
from jax.experimental.pallas import tpu as pltpu

HEAD_HIDDEN = 64      # hidden width of every output MLP head (fixed by the module)
_NUM_STAGES = 4       # 0,1,2 = SAGEConv layers; 3 = GAT attention + pool + heads
_NEG_INF = -1e30


# ---------------------------------------------------------------------------
# Fused kernel.  Grid = (stage, row_tile); adjacency / mask streamed per tile.
# ---------------------------------------------------------------------------
def _fused_forward_kernel(
    x_ref, adj_ref, mask_ref, pool_ref,
    w_s1, b_s1, w_s2, b_s2, w_s3, b_s3,
    w_g, a_bd, b_g, w1h, b1h, w2h, b2h,
    emb_ref, out_ref,
    h1_ref, h2_ref, xh_ref, adst_ref, aT_ref, gat_ref,
):
    f32, bf16 = jnp.float32, jnp.bfloat16
    stage = pl.program_id(0)
    tile = pl.program_id(1)
    n_tiles = pl.num_programs(1)
    tile_n = adj_ref.shape[0]
    heads = a_bd.shape[1] // 2
    out_c = b_g.shape[1]
    row0 = pl.multiple_of(tile * tile_n, tile_n)
    rows = pl.ds(row0, tile_n)

    def sage_tile(h_full, h_tile, w_ref, b_ref):
        # mean aggregation: streamed bf16 (TILE_N, N) adjacency row-tile @ full h.
        agg = jnp.dot(adj_ref[...], h_full.astype(bf16), preferred_element_type=f32)
        # fused [lin_l | lin_r]: single MXU op on concat([agg, h_root]).
        cat = jnp.concatenate([agg, h_tile], axis=-1)
        return jnp.maximum(
            jnp.dot(cat, w_ref[...], preferred_element_type=f32) + b_ref[...], 0.0)

    @pl.when(stage == 0)
    def _():
        h1_ref[rows, :] = sage_tile(x_ref[...], x_ref[rows, :], w_s1, b_s1)

    @pl.when(stage == 1)
    def _():
        h2_ref[rows, :] = sage_tile(h1_ref[...], h1_ref[rows, :], w_s2, b_s2)

    @pl.when(stage == 2)
    def _():
        h3 = sage_tile(h2_ref[...], h2_ref[rows, :], w_s3, b_s3)
        # GAT projection (all heads as one wide matmul) fused into this stage.
        xh = jnp.dot(h3, w_g[...], preferred_element_type=f32)     # (T, heads*out_c)
        xh_ref[rows, :] = xh.astype(bf16)
        # Merged per-head attention scores: columns [0:heads]=src, [heads:2h]=dst.
        a = jnp.dot(xh, a_bd[...], preferred_element_type=f32)     # (T, 2*heads)
        adst_ref[rows, :] = a[:, heads:]
        aT_ref[:, rows] = a.T      # rows [0, heads) hold a_src^T for lane broadcast

    @pl.when(stage == 3)
    def _():
        mask_bias = mask_ref[...].astype(f32)     # additive: 0 on edges/self, -1e30 off
        xh_all = xh_ref[...]                      # (N, heads*out_c) bf16
        a_dst_tile = adst_ref[rows, :]            # (T, heads)
        a_srcT = aT_ref[...]                      # (2*heads, N)
        acc = jnp.zeros((tile_n, out_c), f32)
        for hh in range(heads):
            e = a_dst_tile[:, hh:hh + 1] + a_srcT[hh:hh + 1, :]          # (T, N)
            e = jnp.maximum(e, 0.2 * e) + mask_bias                      # LeakyReLU + mask
            # Self-loops guarantee a finite row max, masked entries underflow to 0.
            p = jnp.exp(e - jnp.max(e, axis=-1, keepdims=True))
            inv = pl.reciprocal(jnp.sum(p, axis=-1, keepdims=True), approx=True)
            c = jnp.dot(p.astype(jnp.bfloat16),
                        xh_all[:, hh * out_c:(hh + 1) * out_c],
                        preferred_element_type=f32)                      # (T, out_c)
            acc = acc + c * inv                  # normalize AFTER the matmul
        gat_ref[rows, :] = acc * (1.0 / heads) + b_g[...]

        # Final pooling + fused MLP heads only on the very last grid step.
        @pl.when(tile == n_tiles - 1)
        def _():
            pooled = jnp.dot(pool_ref[...], gat_ref[...], preferred_element_type=f32)
            emb_ref[...] = pooled
            z = jnp.maximum(
                jnp.dot(pooled, w1h[...], preferred_element_type=f32) + b1h[...], 0.0)
            out_ref[...] = jnp.dot(z, w2h[...], preferred_element_type=f32) + b2h[...]


# ---------------------------------------------------------------------------
# Wrapper: grid / BlockSpecs / scratch / compiler params / cost estimate.
# ---------------------------------------------------------------------------
def persuasion_gnn_apply(packed, x, adj_mean, mask_bias, pool, tile_n=128):
    n_pad, d_in = x.shape
    assert n_pad % tile_n == 0 and tile_n % 16 == 0
    n_tiles = n_pad // tile_n
    g = pool.shape[0]
    hidden = packed[1].shape[1]
    heads = packed[7].shape[1] // 2
    out_c = packed[8].shape[1]
    width = packed[12].shape[1]

    def full(arr):
        return pl.BlockSpec(arr.shape, lambda s, i: (0,) * arr.ndim)

    in_specs = (
        [full(x),
         # adjacency row-tiles only needed for the SAGE stages (0..2)
         pl.BlockSpec((tile_n, n_pad), lambda s, i: (jnp.where(s <= 2, i, 0), 0)),
         # GAT mask row-tiles only needed for stage 3
         pl.BlockSpec((tile_n, n_pad), lambda s, i: (jnp.where(s == 3, i, 0), 0)),
         full(pool)]
        + [full(w) for w in packed])

    def nbytes(a):
        return int(a.size) * a.dtype.itemsize

    # VMEM budget: double-buffered streamed tiles + resident weights + scratch.
    est = (2 * 2 * tile_n * n_pad * 2
           + 2 * (nbytes(x) + nbytes(pool))
           + 2 * sum(nbytes(w) for w in packed)
           + n_pad * 128 * 4 * 6)
    vmem_limit = int(min(max(2 * est, 32 * 2**20), 64 * 2**20))

    flops = int(
        2 * n_pad * n_pad * (d_in + 2 * hidden)
        + 2 * n_pad * (2 * d_in * hidden + 2 * hidden * hidden + 2 * hidden * out_c)
        + 2 * n_pad * out_c * heads * out_c
        + 2 * n_pad * heads * out_c * 2 * heads
        + heads * (2 * n_pad * n_pad * out_c + 5 * n_pad * n_pad)
        + 2 * g * n_pad * out_c
        + 2 * g * (out_c * 3 * HEAD_HIDDEN + 3 * HEAD_HIDDEN * width))
    transcendentals = int(heads * n_pad * n_pad)
    bytes_accessed = int(4 * n_pad * n_pad * 2
                         + nbytes(x) + nbytes(pool)
                         + sum(nbytes(w) for w in packed)
                         + 4 * g * (out_c + width))

    grid_spec = pltpu.PrefetchScalarGridSpec(
        num_scalar_prefetch=0,
        grid=(_NUM_STAGES, n_tiles),
        in_specs=in_specs,
        out_specs=(pl.BlockSpec((g, out_c), lambda s, i: (0, 0)),
                   pl.BlockSpec((g, width), lambda s, i: (0, 0))),
        scratch_shapes=[
            pltpu.VMEM((n_pad, hidden), jnp.float32),          # h after conv1
            pltpu.VMEM((n_pad, hidden), jnp.float32),          # h after conv2
            pltpu.VMEM((n_pad, heads * out_c), jnp.bfloat16),  # GAT projected features
            pltpu.VMEM((n_pad, heads), jnp.float32),           # a_dst scores
            pltpu.VMEM((2 * heads, n_pad), jnp.float32),       # [a_src|a_dst]^T
            pltpu.VMEM((n_pad, out_c), jnp.float32),           # GAT output (pre-pool)
        ])

    emb, fused = pl.pallas_call(
        _fused_forward_kernel,
        out_shape=(jax.ShapeDtypeStruct((g, out_c), jnp.float32),
                   jax.ShapeDtypeStruct((g, width), jnp.float32)),
        grid_spec=grid_spec,
        compiler_params=pltpu.CompilerParams(
            dimension_semantics=("arbitrary", "arbitrary"),
            vmem_limit_bytes=vmem_limit),
        cost_estimate=pl.CostEstimate(flops=flops,
                                      transcendentals=transcendentals,
                                      bytes_accessed=bytes_accessed),
    )(x, adj_mean, mask_bias, pool, *packed)
    return emb, fused


def persuasion_gnn_outputs(packed, x, adj_mean, mask_bias, pool, tile_n=128):
    emb, fused = persuasion_gnn_apply(packed, x, adj_mean, mask_bias, pool, tile_n)
    return {'delta': fused[:, 0:1], 'quality': fused[:, 1:2],
            'strategy': fused[:, 2:], 'embeddings': emb}


# ---------------------------------------------------------------------------
# Plain-JAX glue: dense graph operators (bf16), built once per static graph.
# ---------------------------------------------------------------------------
def build_graph_operators(edge_index, num_nodes, n_pad, batch=None, num_graphs=None):
    src, dst = edge_index[0], edge_index[1]
    counts = jnp.zeros((n_pad, n_pad), jnp.float32).at[dst, src].add(1.0)
    deg = jnp.maximum(jnp.sum(counts, axis=1, keepdims=True), 1.0)
    adj_mean = (counts / deg).astype(jnp.bfloat16)            # row-normalized, bf16
    # GAT mask incl. self-loops (binary; duplicate edges collapse vs PyG multigraphs),
    # expressed as an additive bias so the kernel skips the per-head compare/select.
    adj_sl = jnp.maximum((counts > 0).astype(jnp.float32),
                         jnp.eye(n_pad, dtype=jnp.float32))
    mask_bias = jnp.where(adj_sl > 0, 0.0, _NEG_INF).astype(jnp.bfloat16)
    if batch is None:
        # TODO(synk): per-node path should bypass pooling entirely (emb = GAT out).
        pool = jnp.eye(num_nodes, n_pad, dtype=jnp.float32)
    else:
        if num_graphs is None:
            raise ValueError("pass num_graphs explicitly (avoids a device sync)")
        onehot = (batch[None, :] == jnp.arange(num_graphs)[:, None]).astype(jnp.float32)
        onehot = jnp.pad(onehot, ((0, 0), (0, n_pad - num_nodes)))
        pool = onehot / jnp.maximum(jnp.sum(onehot, axis=1, keepdims=True), 1.0)
    return adj_mean, mask_bias, pool


def persuasion_gnn_forward(packed, x, edge_index, batch=None, num_graphs=None,
                           tile_n=128):
    """Convenience path mirroring the PyTorch forward signature."""
    n = x.shape[0]
    n_pad = tile_n * ((n + tile_n - 1) // tile_n)
    adj_mean, mask_bias, pool = build_graph_operators(
        edge_index, n, n_pad, batch, num_graphs)
    x_pad = jnp.pad(x, ((0, n_pad - n), (0, 0)))
    return persuasion_gnn_outputs(packed, x_pad, adj_mean, mask_bias, pool, tile_n)


# ---------------------------------------------------------------------------
# Parameter init (PyTorch-shaped) and packing into kernel operands.
# ---------------------------------------------------------------------------
def init_torch_params(key, input_dim=64, hidden_dim=32, num_strategies=4, heads=4):
    half = hidden_dim // 2
    ks = iter(jax.random.split(key, 32))

    def nrm(shape):
        return 0.1 * jax.random.normal(next(ks), shape, jnp.float32)

    p = {}
    for i, (din, dout) in enumerate(
            [(input_dim, hidden_dim), (hidden_dim, hidden_dim), (hidden_dim, half)],
            start=1):
        p[f'conv{i}_wl'] = nrm((dout, din))     # SAGEConv lin_l.weight
        p[f'conv{i}_wr'] = nrm((dout, din))     # SAGEConv lin_r.weight (no bias)
        p[f'conv{i}_b'] = nrm((dout,))          # SAGEConv lin_l.bias
    p['gat_w'] = nrm((heads * half, half))      # GATConv lin.weight
    p['gat_att_src'] = nrm((1, heads, half))
    p['gat_att_dst'] = nrm((1, heads, half))
    p['gat_b'] = nrm((half,))                   # GATConv bias (concat=False)
    for name, dout in (('delta', 1), ('quality', 1), ('strategy', num_strategies)):
        p[f'{name}_w1'] = nrm((HEAD_HIDDEN, half))
        p[f'{name}_b1'] = nrm((HEAD_HIDDEN,))
        p[f'{name}_w2'] = nrm((dout, HEAD_HIDDEN))
        p[f'{name}_b2'] = nrm((dout,))
    return p


def pack_params(tp, heads, half, num_strategies):
    def stack_sage(wl, wr, b):
        # input is concat([agg, h_root]); weight is [lin_l.T ; lin_r.T].
        return jnp.concatenate([wl.T, wr.T], axis=0), b[None, :]

    w1, b1 = stack_sage(tp['conv1_wl'], tp['conv1_wr'], tp['conv1_b'])
    w2, b2 = stack_sage(tp['conv2_wl'], tp['conv2_wr'], tp['conv2_b'])
    w3, b3 = stack_sage(tp['conv3_wl'], tp['conv3_wr'], tp['conv3_b'])

    # Merged block-diagonal attention-score matrix: columns [0:h]=src, [h:2h]=dst.
    a_bd = jnp.zeros((heads * half, 2 * heads), jnp.float32)
    for h in range(heads):
        a_bd = a_bd.at[h * half:(h + 1) * half, h].set(tp['gat_att_src'][0, h])
        a_bd = a_bd.at[h * half:(h + 1) * half, heads + h].set(tp['gat_att_dst'][0, h])

    # Fused MLP heads: concatenated W1/b1, block-diagonal W2, concatenated b2.
    w1_cat = jnp.concatenate(
        [tp['delta_w1'].T, tp['quality_w1'].T, tp['strategy_w1'].T], axis=1)
    b1_cat = jnp.concatenate(
        [tp['delta_b1'], tp['quality_b1'], tp['strategy_b1']])[None, :]
    width = 2 + num_strategies
    w2_bd = jnp.zeros((3 * HEAD_HIDDEN, width), jnp.float32)
    w2_bd = w2_bd.at[0:HEAD_HIDDEN, 0:1].set(tp['delta_w2'].T)
    w2_bd = w2_bd.at[HEAD_HIDDEN:2 * HEAD_HIDDEN, 1:2].set(tp['quality_w2'].T)
    w2_bd = w2_bd.at[2 * HEAD_HIDDEN:, 2:].set(tp['strategy_w2'].T)
    b2_cat = jnp.concatenate(
        [tp['delta_b2'], tp['quality_b2'], tp['strategy_b2']])[None, :]

    return (w1, b1, w2, b2, w3, b3,
            tp['gat_w'].T, a_bd, tp['gat_b'][None, :],
            w1_cat, b1_cat, w2_bd, b2_cat)


# ---------------------------------------------------------------------------
# Pure-JAX f32 reference (independent of packing / padding) for verification.
# ---------------------------------------------------------------------------
def reference_forward(tp, x, edge_index, batch=None, num_graphs=None):
    n = x.shape[0]
    src, dst = edge_index[0], edge_index[1]
    counts = jnp.zeros((n, n), jnp.float32).at[dst, src].add(1.0)
    adj_mean = counts / jnp.maximum(jnp.sum(counts, axis=1, keepdims=True), 1.0)
    adj_gat = jnp.maximum((counts > 0).astype(jnp.float32),
                          jnp.eye(n, dtype=jnp.float32))

    def sage(h, wl, wr, b):
        return jnp.maximum(adj_mean @ h @ wl.T + h @ wr.T + b[None, :], 0.0)

    h = sage(x, tp['conv1_wl'], tp['conv1_wr'], tp['conv1_b'])
    h = sage(h, tp['conv2_wl'], tp['conv2_wr'], tp['conv2_b'])
    h = sage(h, tp['conv3_wl'], tp['conv3_wr'], tp['conv3_b'])

    heads, half = tp['gat_att_src'].shape[1], tp['gat_att_src'].shape[2]
    xh = (h @ tp['gat_w'].T).reshape(n, heads, half)
    a_src = jnp.einsum('nhc,hc->nh', xh, tp['gat_att_src'][0])
    a_dst = jnp.einsum('nhc,hc->nh', xh, tp['gat_att_dst'][0])
    acc = jnp.zeros((n, half), jnp.float32)
    for hh in range(heads):
        e = a_dst[:, hh:hh + 1] + a_src[None, :, hh]
        e = jnp.where(e > 0, e, 0.2 * e)
        e = jnp.where(adj_gat > 0, e, _NEG_INF)
        p = jnp.exp(e - jnp.max(e, axis=1, keepdims=True))
        p = p / jnp.sum(p, axis=1, keepdims=True)
        acc = acc + p @ xh[:, hh, :]
    h = acc / heads + tp['gat_b'][None, :]

    if batch is None:
        pooled = h
    else:
        onehot = (batch[None, :] == jnp.arange(num_graphs)[:, None]).astype(jnp.float32)
        pool = onehot / jnp.maximum(jnp.sum(onehot, axis=1, keepdims=True), 1.0)
        pooled = pool @ h

    def mlp(z_in, name):
        z = jnp.maximum(z_in @ tp[f'{name}_w1'].T + tp[f'{name}_b1'][None, :], 0.0)
        return z @ tp[f'{name}_w2'].T + tp[f'{name}_b2'][None, :]

    return {'delta': mlp(pooled, 'delta'), 'quality': mlp(pooled, 'quality'),
            'strategy': mlp(pooled, 'strategy'), 'embeddings': pooled}


if __name__ == "__main__":
    INPUT_DIM, HIDDEN_DIM, NUM_STRATEGIES, HEADS = 64, 32, 4, 4
    N_NODES, N_EDGES, N_GRAPHS, TILE_N = 200, 600, 2, 128

    key = jax.random.PRNGKey(0)
    kp, kx, ke = jax.random.split(key, 3)
    tp = init_torch_params(kp, INPUT_DIM, HIDDEN_DIM, NUM_STRATEGIES, HEADS)
    packed = pack_params(tp, heads=HEADS, half=HIDDEN_DIM // 2,
                         num_strategies=NUM_STRATEGIES)

    x = jax.random.normal(kx, (N_NODES, INPUT_DIM), jnp.float32)
    edge_index = jax.random.randint(ke, (2, N_EDGES), 0, N_NODES, dtype=jnp.int32)
    batch = jnp.repeat(jnp.arange(N_GRAPHS, dtype=jnp.int32), N_NODES // N_GRAPHS)

    fwd = jax.jit(persuasion_gnn_forward, static_argnames=("num_graphs", "tile_n"))
    out = jax.block_until_ready(
        fwd(packed, x, edge_index, batch, num_graphs=N_GRAPHS, tile_n=TILE_N))

    ref = reference_forward(tp, x, edge_index, batch=batch, num_graphs=N_GRAPHS)
    # Tolerance covers bf16 matmul inputs (f32 accumulation) + approx reciprocal.
    for k in ('delta', 'quality', 'strategy', 'embeddings'):
        assert out[k].shape == ref[k].shape, (k, out[k].shape, ref[k].shape)
        assert jnp.allclose(out[k], ref[k], atol=2e-2, rtol=2e-2), (
            k, float(jnp.max(jnp.abs(out[k] - ref[k]))))

    print("KERNEL_OK")
</pallas_src>

<mosaic_0001>
module attributes {stable_mosaic.version = 11 : i64} {
  func.func @_fused_forward_kernel(%arg0: i32, %arg1: i32, %arg2: memref<256x64xf32, #tpu.memory_space<vmem>>, %arg3: memref<128x256xbf16, #tpu.memory_space<vmem>>, %arg4: memref<128x256xbf16, #tpu.memory_space<vmem>>, %arg5: memref<2x256xf32, #tpu.memory_space<vmem>>, %arg6: memref<128x32xf32, #tpu.memory_space<vmem>>, %arg7: memref<1x32xf32, #tpu.memory_space<vmem>>, %arg8: memref<64x32xf32, #tpu.memory_space<vmem>>, %arg9: memref<1x32xf32, #tpu.memory_space<vmem>>, %arg10: memref<64x16xf32, #tpu.memory_space<vmem>>, %arg11: memref<1x16xf32, #tpu.memory_space<vmem>>, %arg12: memref<16x64xf32, #tpu.memory_space<vmem>>, %arg13: memref<64x8xf32, #tpu.memory_space<vmem>>, %arg14: memref<1x16xf32, #tpu.memory_space<vmem>>, %arg15: memref<16x192xf32, #tpu.memory_space<vmem>>, %arg16: memref<1x192xf32, #tpu.memory_space<vmem>>, %arg17: memref<192x6xf32, #tpu.memory_space<vmem>>, %arg18: memref<1x6xf32, #tpu.memory_space<vmem>>, %arg19: memref<2x16xf32, #tpu.memory_space<vmem>>, %arg20: memref<2x6xf32, #tpu.memory_space<vmem>>, %arg21: memref<256x32xf32, #tpu.memory_space<vmem>>, %arg22: memref<256x32xf32, #tpu.memory_space<vmem>>, %arg23: memref<256x64xbf16, #tpu.memory_space<vmem>>, %arg24: memref<256x4xf32, #tpu.memory_space<vmem>>, %arg25: memref<8x256xf32, #tpu.memory_space<vmem>>, %arg26: memref<256x16xf32, #tpu.memory_space<vmem>>) attributes {dimension_semantics = [#tpu.dimension_semantics<arbitrary>, #tpu.dimension_semantics<arbitrary>], iteration_bounds = array<i64: 4, 2>, scalar_prefetch = 0 : i64, scratch_operands = 6 : i64, tpu.core_type = #tpu.core_type<tc>, window_params = [{pipeline_mode = #tpu.pipeline_mode<synchronous>, transform_indices = @transform_0, window_bounds = array<i64: 256, 64>}, {transform_indices = @transform_1, window_bounds = array<i64: 128, 256>}, {transform_indices = @transform_2, window_bounds = array<i64: 128, 256>}, {pipeline_mode = #tpu.pipeline_mode<synchronous>, transform_indices = @transform_3, window_bounds = array<i64: 2, 256>}, {pipeline_mode = #tpu.pipeline_mode<synchronous>, transform_indices = @transform_4, window_bounds = array<i64: 128, 32>}, {pipeline_mode = #tpu.pipeline_mode<synchronous>, transform_indices = @transform_5, window_bounds = array<i64: 1, 32>}, {pipeline_mode = #tpu.pipeline_mode<synchronous>, transform_indices = @transform_6, window_bounds = array<i64: 64, 32>}, {pipeline_mode = #tpu.pipeline_mode<synchronous>, transform_indices = @transform_7, window_bounds = array<i64: 1, 32>}, {pipeline_mode = #tpu.pipeline_mode<synchronous>, transform_indices = @transform_8, window_bounds = array<i64: 64, 16>}, {pipeline_mode = #tpu.pipeline_mode<synchronous>, transform_indices = @transform_9, window_bounds = array<i64: 1, 16>}, {pipeline_mode = #tpu.pipeline_mode<synchronous>, transform_indices = @transform_10, window_bounds = array<i64: 16, 64>}, {pipeline_mode = #tpu.pipeline_mode<synchronous>, transform_indices = @transform_11, window_bounds = array<i64: 64, 8>}, {pipeline_mode = #tpu.pipeline_mode<synchronous>, transform_indices = @transform_12, window_bounds = array<i64: 1, 16>}, {pipeline_mode = #tpu.pipeline_mode<synchronous>, transform_indices = @transform_13, window_bounds = array<i64: 16, 192>}, {pipeline_mode = #tpu.pipeline_mode<synchronous>, transform_indices = @transform_14, window_bounds = array<i64: 1, 192>}, {pipeline_mode = #tpu.pipeline_mode<synchronous>, transform_indices = @transform_15, window_bounds = array<i64: 192, 6>}, {pipeline_mode = #tpu.pipeline_mode<synchronous>, transform_indices = @transform_16, window_bounds = array<i64: 1, 6>}, {pipeline_mode = #tpu.pipeline_mode<synchronous>, transform_indices = @transform_17, window_bounds = array<i64: 2, 16>}, {pipeline_mode = #tpu.pipeline_mode<synchronous>, transform_indices = @transform_18, window_bounds = array<i64: 2, 6>}]} {
    %c128_i32 = arith.constant 128 : i32
    %0 = arith.muli %arg1, %c128_i32 : i32
    %1 = tpu.assume_multiple %0, 128 : i32
    %c0_i32 = arith.constant 0 : i32
    %2 = arith.cmpi eq, %arg0, %c0_i32 : i32
    %3 = arith.extui %2 : i1 to i32
    %c0_i32_0 = arith.constant 0 : i32
    %4 = arith.cmpi ne, %3, %c0_i32_0 : i32
    scf.if %4 {
      %c0 = arith.constant 0 : index
      %c0_4 = arith.constant 0 : index
      %14 = vector.load %arg2[%c0, %c0_4] : memref<256x64xf32, #tpu.memory_space<vmem>>, vector<256x64xf32>
      %15 = arith.index_cast %1 : i32 to index
      %c0_5 = arith.constant 0 : index
      %16 = vector.load %arg2[%15, %c0_5] : memref<256x64xf32, #tpu.memory_space<vmem>>, vector<128x64xf32>
      %c0_6 = arith.constant 0 : index
      %c0_7 = arith.constant 0 : index
      %17 = vector.load %arg3[%c0_6, %c0_7] : memref<128x256xbf16, #tpu.memory_space<vmem>>, vector<128x256xbf16>
      %18 = arith.truncf %14 : vector<256x64xf32> to vector<256x64xbf16>
      %cst = arith.constant dense<0.000000e+00> : vector<128x64xf32>
      %19 = tpu.matmul %17, %18, %cst {dimension_numbers = #tpu.dot_dimension_numbers<[1], [0], [0], [1], [0, 0, 1, 1], [], []>} : vector<128x256xbf16>, vector<256x64xbf16>, vector<128x64xf32> -> vector<128x64xf32>
      %20 = tpu.concatenate %19, %16 in 1 : vector<128x64xf32>, vector<128x64xf32> -> vector<128x128xf32>
      %c0_8 = arith.constant 0 : index
      %c0_9 = arith.constant 0 : index
      %21 = vector.load %arg6[%c0_8, %c0_9] : memref<128x32xf32, #tpu.memory_space<vmem>>, vector<128x32xf32>
      %cst_10 = arith.constant dense<0.000000e+00> : vector<128x32xf32>
      %22 = tpu.matmul %20, %21, %cst_10 {dimension_numbers = #tpu.dot_dimension_numbers<[1], [0], [0], [1], [0, 0, 1, 1], [], []>} : vector<128x128xf32>, vector<128x32xf32>, vector<128x32xf32> -> vector<128x32xf32>
      %c0_11 = arith.constant 0 : index
      %c0_12 = arith.constant 0 : index
      %23 = vector.load %arg7[%c0_11, %c0_12] : memref<1x32xf32, #tpu.memory_space<vmem>>, vector<1x32xf32>
      %24 = vector.broadcast %23 : vector<1x32xf32> to vector<128x32xf32>
      %25 = arith.addf %22, %24 : vector<128x32xf32>
      %cst_13 = arith.constant 0.000000e+00 : f32
      %26 = vector.broadcast %cst_13 : f32 to vector<128x32xf32>
      %27 = arith.maximumf %25, %26 : vector<128x32xf32>
      %28 = arith.index_cast %1 : i32 to index
      %c0_14 = arith.constant 0 : index
      %29 = vector.load %arg21[%28, %c0_14] : memref<256x32xf32, #tpu.memory_space<vmem>>, vector<128x32xf32>
      tpu.vector_store %arg21[%28, %c0_14], %27 {strides = array<i32>} : memref<256x32xf32, #tpu.memory_space<vmem>>, vector<128x32xf32>,
    } else {
    }
    %c1_i32 = arith.constant 1 : i32
    %5 = arith.cmpi eq, %arg0, %c1_i32 : i32
    %6 = arith.extui %5 : i1 to i32
    %c0_i32_1 = arith.constant 0 : i32
    %7 = arith.cmpi ne, %6, %c0_i32_1 : i32
    scf.if %7 {
      %c0 = arith.constant 0 : index
      %c0_4 = arith.constant 0 : index
      %14 = vector.load %arg21[%c0, %c0_4] : memref<256x32xf32, #tpu.memory_space<vmem>>, vector<256x32xf32>
      %15 = arith.index_cast %1 : i32 to index
      %c0_5 = arith.constant 0 : index
      %16 = vector.load %arg21[%15, %c0_5] : memref<256x32xf32, #tpu.memory_space<vmem>>, vector<128x32xf32>
      %c0_6 = arith.constant 0 : index
      %c0_7 = arith.constant 0 : index
      %17 = vector.load %arg3[%c0_6, %c0_7] : memref<128x256xbf16, #tpu.memory_space<vmem>>, vector<128x256xbf16>
      %18 = arith.truncf %14 : vector<256x32xf32> to vector<256x32xbf16>
      %cst = arith.constant dense<0.000000e+00> : vector<128x32xf32>
      %19 = tpu.matmul %17, %18, %cst {dimension_numbers = #tpu.dot_dimension_numbers<[1], [0], [0], [1], [0, 0, 1, 1], [], []>} : vector<128x256xbf16>, vector<256x32xbf16>, vector<128x32xf32> -> vector<128x32xf32>
      %20 = tpu.concatenate %19, %16 in 1 : vector<128x32xf32>, vector<128x32xf32> -> vector<128x64xf32>
      %c0_8 = arith.constant 0 : index
      %c0_9 = arith.constant 0 : index
      %21 = vector.load %arg8[%c0_8, %c0_9] : memref<64x32xf32, #tpu.memory_space<vmem>>, vector<64x32xf32>
      %cst_10 = arith.constant dense<0.000000e+00> : vector<128x32xf32>
      %22 = tpu.matmul %20, %21, %cst_10 {dimension_numbers = #tpu.dot_dimension_numbers<[1], [0], [0], [1], [0, 0, 1, 1], [], []>} : vector<128x64xf32>, vector<64x32xf32>, vector<128x32xf32> -> vector<128x32xf32>
      %c0_11 = arith.constant 0 : index
      %c0_12 = arith.constant 0 : index
      %23 = vector.load %arg9[%c0_11, %c0_12] : memref<1x32xf32, #tpu.memory_space<vmem>>, vector<1x32xf32>
      %24 = vector.broadcast %23 : vector<1x32xf32> to vector<128x32xf32>
      %25 = arith.addf %22, %24 : vector<128x32xf32>
      %cst_13 = arith.constant 0.000000e+00 : f32
      %26 = vector.broadcast %cst_13 : f32 to vector<128x32xf32>
      %27 = arith.maximumf %25, %26 : vector<128x32xf32>
      %28 = arith.index_cast %1 : i32 to index
      %c0_14 = arith.constant 0 : index
      %29 = vector.load %arg22[%28, %c0_14] : memref<256x32xf32, #tpu.memory_space<vmem>>, vector<128x32xf32>
      tpu.vector_store %arg22[%28, %c0_14], %27 {strides = array<i32>} : memref<256x32xf32, #tpu.memory_space<vmem>>, vector<128x32xf32>,
    } else {
    }
    %c2_i32 = arith.constant 2 : i32
    %8 = arith.cmpi eq, %arg0, %c2_i32 : i32
    %9 = arith.extui %8 : i1 to i32
    %c0_i32_2 = arith.constant 0 : i32
    %10 = arith.cmpi ne, %9, %c0_i32_2 : i32
    scf.if %10 {
      %c0 = arith.constant 0 : index
      %c0_4 = arith.constant 0 : index
      %14 = vector.load %arg22[%c0, %c0_4] : memref<256x32xf32, #tpu.memory_space<vmem>>, vector<256x32xf32>
      %15 = arith.index_cast %1 : i32 to index
      %c0_5 = arith.constant 0 : index
      %16 = vector.load %arg22[%15, %c0_5] : memref<256x32xf32, #tpu.memory_space<vmem>>, vector<128x32xf32>
      %c0_6 = arith.constant 0 : index
      %c0_7 = arith.constant 0 : index
      %17 = vector.load %arg3[%c0_6, %c0_7] : memref<128x256xbf16, #tpu.memory_space<vmem>>, vector<128x256xbf16>
      %18 = arith.truncf %14 : vector<256x32xf32> to vector<256x32xbf16>
      %cst = arith.constant dense<0.000000e+00> : vector<128x32xf32>
      %19 = tpu.matmul %17, %18, %cst {dimension_numbers = #tpu.dot_dimension_numbers<[1], [0], [0], [1], [0, 0, 1, 1], [], []>} : vector<128x256xbf16>, vector<256x32xbf16>, vector<128x32xf32> -> vector<128x32xf32>
      %20 = tpu.concatenate %19, %16 in 1 : vector<128x32xf32>, vector<128x32xf32> -> vector<128x64xf32>
      %c0_8 = arith.constant 0 : index
      %c0_9 = arith.constant 0 : index
      %21 = vector.load %arg10[%c0_8, %c0_9] : memref<64x16xf32, #tpu.memory_space<vmem>>, vector<64x16xf32>
      %cst_10 = arith.constant dense<0.000000e+00> : vector<128x16xf32>
      %22 = tpu.matmul %20, %21, %cst_10 {dimension_numbers = #tpu.dot_dimension_numbers<[1], [0], [0], [1], [0, 0, 1, 1], [], []>} : vector<128x64xf32>, vector<64x16xf32>, vector<128x16xf32> -> vector<128x16xf32>
      %c0_11 = arith.constant 0 : index
      %c0_12 = arith.constant 0 : index
      %23 = vector.load %arg11[%c0_11, %c0_12] : memref<1x16xf32, #tpu.memory_space<vmem>>, vector<1x16xf32>
      %24 = vector.broadcast %23 : vector<1x16xf32> to vector<128x16xf32>
      %25 = arith.addf %22, %24 : vector<128x16xf32>
      %cst_13 = arith.constant 0.000000e+00 : f32
      %26 = vector.broadcast %cst_13 : f32 to vector<128x16xf32>
      %27 = arith.maximumf %25, %26 : vector<128x16xf32>
      %c0_14 = arith.constant 0 : index
      %c0_15 = arith.constant 0 : index
      %28 = vector.load %arg12[%c0_14, %c0_15] : memref<16x64xf32, #tpu.memory_space<vmem>>, vector<16x64xf32>
      %cst_16 = arith.constant dense<0.000000e+00> : vector<128x64xf32>
      %29 = tpu.matmul %27, %28, %cst_16 {dimension_numbers = #tpu.dot_dimension_numbers<[1], [0], [0], [1], [0, 0, 1, 1], [], []>} : vector<128x16xf32>, vector<16x64xf32>, vector<128x64xf32> -> vector<128x64xf32>
      %30 = arith.truncf %29 : vector<128x64xf32> to vector<128x64xbf16>
      %31 = arith.index_cast %1 : i32 to index
      %c0_17 = arith.constant 0 : index
      %32 = vector.load %arg23[%31, %c0_17] : memref<256x64xbf16, #tpu.memory_space<vmem>>, vector<128x64xbf16>
      tpu.vector_store %arg23[%31, %c0_17], %30 {strides = array<i32>} : memref<256x64xbf16, #tpu.memory_space<vmem>>, vector<128x64xbf16>,
      %c0_18 = arith.constant 0 : index
      %c0_19 = arith.constant 0 : index
      %33 = vector.load %arg13[%c0_18, %c0_19] : memref<64x8xf32, #tpu.memory_space<vmem>>, vector<64x8xf32>
      %cst_20 = arith.constant dense<0.000000e+00> : vector<128x8xf32>
      %34 = tpu.matmul %29, %33, %cst_20 {dimension_numbers = #tpu.dot_dimension_numbers<[1], [0], [0], [1], [0, 0, 1, 1], [], []>} : vector<128x64xf32>, vector<64x8xf32>, vector<128x8xf32> -> vector<128x8xf32>
      %35 = vector.extract_strided_slice %34 {offsets = [0, 4], sizes = [128, 4], strides = [1, 1]} : vector<128x8xf32> to vector<128x4xf32>
      %36 = arith.index_cast %1 : i32 to index
      %c0_21 = arith.constant 0 : index
      %37 = vector.load %arg24[%36, %c0_21] : memref<256x4xf32, #tpu.memory_space<vmem>>, vector<128x4xf32>
      tpu.vector_store %arg24[%36, %c0_21], %35 {strides = array<i32>} : memref<256x4xf32, #tpu.memory_space<vmem>>, vector<128x4xf32>,
      %38 = tpu.transpose %34, [1, 0] : vector<128x8xf32> -> vector<8x128xf32>
      %c0_22 = arith.constant 0 : index
      %39 = arith.index_cast %1 : i32 to index
      %40 = vector.load %arg25[%c0_22, %39] : memref<8x256xf32, #tpu.memory_space<vmem>>, vector<8x128xf32>
      tpu.vector_store %arg25[%c0_22, %39], %38 {strides = array<i32>} : memref<8x256xf32, #tpu.memory_space<vmem>>, vector<8x128xf32>,
    } else {
    }
    %c3_i32 = arith.constant 3 : i32
    %11 = arith.cmpi eq, %arg0, %c3_i32 : i32
    %12 = arith.extui %11 : i1 to i32
    %c0_i32_3 = arith.constant 0 : i32
    %13 = arith.cmpi ne, %12, %c0_i32_3 : i32
    scf.if %13 {
      %c0 = arith.constant 0 : index
      %c0_4 = arith.constant 0 : index
      %14 = vector.load %arg4[%c0, %c0_4] : memref<128x256xbf16, #tpu.memory_space<vmem>>, vector<128x256xbf16>
      %15 = arith.extf %14 : vector<128x256xbf16> to vector<128x256xf32>
      %c0_5 = arith.constant 0 : index
      %c0_6 = arith.constant 0 : index
      %16 = vector.load %arg23[%c0_5, %c0_6] : memref<256x64xbf16, #tpu.memory_space<vmem>>, vector<256x64xbf16>
      %17 = arith.index_cast %1 : i32 to index
      %c0_7 = arith.constant 0 : index
      %18 = vector.load %arg24[%17, %c0_7] : memref<256x4xf32, #tpu.memory_space<vmem>>, vector<128x4xf32>
      %c0_8 = arith.constant 0 : index
      %c0_9 = arith.constant 0 : index
      %19 = vector.load %arg25[%c0_8, %c0_9] : memref<8x256xf32, #tpu.memory_space<vmem>>, vector<8x256xf32>
      %cst = arith.constant 0.000000e+00 : f32
      %20 = vector.broadcast %cst : f32 to vector<128x16xf32>
      %21 = vector.extract_strided_slice %18 {offsets = [0, 0], sizes = [128, 1], strides = [1, 1]} : vector<128x4xf32> to vector<128x1xf32>
      %22 = vector.extract_strided_slice %19 {offsets = [0, 0], sizes = [1, 256], strides = [1, 1]} : vector<8x256xf32> to vector<1x256xf32>
      %23 = vector.broadcast %21 : vector<128x1xf32> to vector<128x256xf32>
      %24 = vector.broadcast %22 : vector<1x256xf32> to vector<128x256xf32>
      %25 = arith.addf %23, %24 : vector<128x256xf32>
      %cst_10 = arith.constant 2.000000e-01 : f32
      %26 = vector.broadcast %cst_10 : f32 to vector<128x256xf32>
      %27 = arith.mulf %26, %25 : vector<128x256xf32>
      %28 = arith.maximumf %25, %27 : vector<128x256xf32>
      %29 = arith.addf %28, %15 : vector<128x256xf32>
      %cst_11 = arith.constant dense<0xFF800000> : vector<128xf32>
      %30 = vector.multi_reduction <maximumf>, %29, %cst_11 [1] : vector<128x256xf32> to vector<128xf32>
      %31 = vector.shape_cast %30 : vector<128xf32> to vector<128x1xf32>
      %32 = vector.broadcast %31 : vector<128x1xf32> to vector<128x256xf32>
      %33 = arith.subf %29, %32 : vector<128x256xf32>
      %34 = math.exp %33 : vector<128x256xf32>
      %cst_12 = arith.constant dense<0.000000e+00> : vector<128xf32>
      %35 = vector.multi_reduction <add>, %34, %cst_12 [1] : vector<128x256xf32> to vector<128xf32>
      %36 = vector.shape_cast %35 : vector<128xf32> to vector<128x1xf32>
      %37 = tpu.reciprocal %36 {approx = true} : vector<128x1xf32> -> vector<128x1xf32>
      %38 = arith.truncf %34 : vector<128x256xf32> to vector<128x256xbf16>
      %39 = vector.extract_strided_slice %16 {offsets = [0, 0], sizes = [256, 16], strides = [1, 1]} : vector<256x64xbf16> to vector<256x16xbf16>
      %cst_13 = arith.constant dense<0.000000e+00> : vector<128x16xf32>
      %40 = tpu.matmul %38, %39, %cst_13 {dimension_numbers = #tpu.dot_dimension_numbers<[1], [0], [0], [1], [0, 0, 1, 1], [], []>} : vector<128x256xbf16>, vector<256x16xbf16>, vector<128x16xf32> -> vector<128x16xf32>
      %41 = vector.broadcast %37 : vector<128x1xf32> to vector<128x16xf32>
      %42 = arith.mulf %40, %41 : vector<128x16xf32>
      %43 = arith.addf %20, %42 : vector<128x16xf32>
      %44 = vector.extract_strided_slice %18 {offsets = [0, 1], sizes = [128, 1], strides = [1, 1]} : vector<128x4xf32> to vector<128x1xf32>
      %45 = vector.extract_strided_slice %19 {offsets = [1, 0], sizes = [1, 256], strides = [1, 1]} : vector<8x256xf32> to vector<1x256xf32>
      %46 = vector.broadcast %44 : vector<128x1xf32> to vector<128x256xf32>
      %47 = vector.broadcast %45 : vector<1x256xf32> to vector<128x256xf32>
      %48 = arith.addf %46, %47 : vector<128x256xf32>
      %cst_14 = arith.constant 2.000000e-01 : f32
      %49 = vector.broadcast %cst_14 : f32 to vector<128x256xf32>
      %50 = arith.mulf %49, %48 : vector<128x256xf32>
      %51 = arith.maximumf %48, %50 : vector<128x256xf32>
      %52 = arith.addf %51, %15 : vector<128x256xf32>
      %cst_15 = arith.constant dense<0xFF800000> : vector<128xf32>
      %53 = vector.multi_reduction <maximumf>, %52, %cst_15 [1] : vector<128x256xf32> to vector<128xf32>
      %54 = vector.shape_cast %53 : vector<128xf32> to vector<128x1xf32>
      %55 = vector.broadcast %54 : vector<128x1xf32> to vector<128x256xf32>
      %56 = arith.subf %52, %55 : vector<128x256xf32>
      %57 = math.exp %56 : vector<128x256xf32>
      %cst_16 = arith.constant dense<0.000000e+00> : vector<128xf32>
      %58 = vector.multi_reduction <add>, %57, %cst_16 [1] : vector<128x256xf32> to vector<128xf32>
      %59 = vector.shape_cast %58 : vector<128xf32> to vector<128x1xf32>
      %60 = tpu.reciprocal %59 {approx = true} : vector<128x1xf32> -> vector<128x1xf32>
      %61 = arith.truncf %57 : vector<128x256xf32> to vector<128x256xbf16>
      %62 = vector.extract_strided_slice %16 {offsets = [0, 16], sizes = [256, 16], strides = [1, 1]} : vector<256x64xbf16> to vector<256x16xbf16>
      %cst_17 = arith.constant dense<0.000000e+00> : vector<128x16xf32>
      %63 = tpu.matmul %61, %62, %cst_17 {dimension_numbers = #tpu.dot_dimension_numbers<[1], [0], [0], [1], [0, 0, 1, 1], [], []>} : vector<128x256xbf16>, vector<256x16xbf16>, vector<128x16xf32> -> vector<128x16xf32>
      %64 = vector.broadcast %60 : vector<128x1xf32> to vector<128x16xf32>
      %65 = arith.mulf %63, %64 : vector<128x16xf32>
      %66 = arith.addf %43, %65 : vector<128x16xf32>
      %67 = vector.extract_strided_slice %18 {offsets = [0, 2], sizes = [128, 1], strides = [1, 1]} : vector<128x4xf32> to vector<128x1xf32>
      %68 = vector.extract_strided_slice %19 {offsets = [2, 0], sizes = [1, 256], strides = [1, 1]} : vector<8x256xf32> to vector<1x256xf32>
      %69 = vector.broadcast %67 : vector<128x1xf32> to vector<128x256xf32>
      %70 = vector.broadcast %68 : vector<1x256xf32> to vector<128x256xf32>
      %71 = arith.addf %69, %70 : vector<128x256xf32>
      %cst_18 = arith.constant 2.000000e-01 : f32
      %72 = vector.broadcast %cst_18 : f32 to vector<128x256xf32>
      %73 = arith.mulf %72, %71 : vector<128x256xf32>
      %74 = arith.maximumf %71, %73 : vector<128x256xf32>
      %75 = arith.addf %74, %15 : vector<128x256xf32>
      %cst_19 = arith.constant dense<0xFF800000> : vector<128xf32>
      %76 = vector.multi_reduction <maximumf>, %75, %cst_19 [1] : vector<128x256xf32> to vector<128xf32>
      %77 = vector.shape_cast %76 : vector<128xf32> to vector<128x1xf32>
      %78 = vector.broadcast %77 : vector<128x1xf32> to vector<128x256xf32>
      %79 = arith.subf %75, %78 : vector<128x256xf32>
      %80 = math.exp %79 : vector<128x256xf32>
      %cst_20 = arith.constant dense<0.000000e+00> : vector<128xf32>
      %81 = vector.multi_reduction <add>, %80, %cst_20 [1] : vector<128x256xf32> to vector<128xf32>
      %82 = vector.shape_cast %81 : vector<128xf32> to vector<128x1xf32>
      %83 = tpu.reciprocal %82 {approx = true} : vector<128x1xf32> -> vector<128x1xf32>
      %84 = arith.truncf %80 : vector<128x256xf32> to vector<128x256xbf16>
      %85 = vector.extract_strided_slice %16 {offsets = [0, 32], sizes = [256, 16], strides = [1, 1]} : vector<256x64xbf16> to vector<256x16xbf16>
      %cst_21 = arith.constant dense<0.000000e+00> : vector<128x16xf32>
      %86 = tpu.matmul %84, %85, %cst_21 {dimension_numbers = #tpu.dot_dimension_numbers<[1], [0], [0], [1], [0, 0, 1, 1], [], []>} : vector<128x256xbf16>, vector<256x16xbf16>, vector<128x16xf32> -> vector<128x16xf32>
      %87 = vector.broadcast %83 : vector<128x1xf32> to vector<128x16xf32>
      %88 = arith.mulf %86, %87 : vector<128x16xf32>
      %89 = arith.addf %66, %88 : vector<128x16xf32>
      %90 = vector.extract_strided_slice %18 {offsets = [0, 3], sizes = [128, 1], strides = [1, 1]} : vector<128x4xf32> to vector<128x1xf32>
      %91 = vector.extract_strided_slice %19 {offsets = [3, 0], sizes = [1, 256], strides = [1, 1]} : vector<8x256xf32> to vector<1x256xf32>
      %92 = vector.broadcast %90 : vector<128x1xf32> to vector<128x256xf32>
      %93 = vector.broadcast %91 : vector<1x256xf32> to vector<128x256xf32>
      %94 = arith.addf %92, %93 : vector<128x256xf32>
      %cst_22 = arith.constant 2.000000e-01 : f32
      %95 = vector.broadcast %cst_22 : f32 to vector<128x256xf32>
      %96 = arith.mulf %95, %94 : vector<128x256xf32>
      %97 = arith.maximumf %94, %96 : vector<128x256xf32>
      %98 = arith.addf %97, %15 : vector<128x256xf32>
      %cst_23 = arith.constant dense<0xFF800000> : vector<128xf32>
      %99 = vector.multi_reduction <maximumf>, %98, %cst_23 [1] : vector<128x256xf32> to vector<128xf32>
      %100 = vector.shape_cast %99 : vector<128xf32> to vector<128x1xf32>
      %101 = vector.broadcast %100 : vector<128x1xf32> to vector<128x256xf32>
      %102 = arith.subf %98, %101 : vector<128x256xf32>
      %103 = math.exp %102 : vector<128x256xf32>
      %cst_24 = arith.constant dense<0.000000e+00> : vector<128xf32>
      %104 = vector.multi_reduction <add>, %103, %cst_24 [1] : vector<128x256xf32> to vector<128xf32>
      %105 = vector.shape_cast %104 : vector<128xf32> to vector<128x1xf32>
      %106 = tpu.reciprocal %105 {approx = true} : vector<128x1xf32> -> vector<128x1xf32>
      %107 = arith.truncf %103 : vector<128x256xf32> to vector<128x256xbf16>
      %108 = vector.extract_strided_slice %16 {offsets = [0, 48], sizes = [256, 16], strides = [1, 1]} : vector<256x64xbf16> to vector<256x16xbf16>
      %cst_25 = arith.constant dense<0.000000e+00> : vector<128x16xf32>
      %109 = tpu.matmul %107, %108, %cst_25 {dimension_numbers = #tpu.dot_dimension_numbers<[1], [0], [0], [1], [0, 0, 1, 1], [], []>} : vector<128x256xbf16>, vector<256x16xbf16>, vector<128x16xf32> -> vector<128x16xf32>
      %110 = vector.broadcast %106 : vector<128x1xf32> to vector<128x16xf32>
      %111 = arith.mulf %109, %110 : vector<128x16xf32>
      %112 = arith.addf %89, %111 : vector<128x16xf32>
      %cst_26 = arith.constant 2.500000e-01 : f32
      %113 = vector.broadcast %cst_26 : f32 to vector<128x16xf32>
      %114 = arith.mulf %112, %113 : vector<128x16xf32>
      %c0_27 = arith.constant 0 : index
      %c0_28 = arith.constant 0 : index
      %115 = vector.load %arg14[%c0_27, %c0_28] : memref<1x16xf32, #tpu.memory_space<vmem>>, vector<1x16xf32>
      %116 = vector.broadcast %115 : vector<1x16xf32> to vector<128x16xf32>
      %117 = arith.addf %114, %116 : vector<128x16xf32>
      %118 = arith.index_cast %1 : i32 to index
      %c0_29 = arith.constant 0 : index
      %119 = vector.load %arg26[%118, %c0_29] : memref<256x16xf32, #tpu.memory_space<vmem>>, vector<128x16xf32>
      tpu.vector_store %arg26[%118, %c0_29], %117 {strides = array<i32>} : memref<256x16xf32, #tpu.memory_space<vmem>>, vector<128x16xf32>,
      %c1_i32_30 = arith.constant 1 : i32
      %120 = arith.cmpi eq, %arg1, %c1_i32_30 : i32
      %121 = arith.extui %120 : i1 to i32
      %c0_i32_31 = arith.constant 0 : i32
      %122 = arith.cmpi ne, %121, %c0_i32_31 : i32
      scf.if %122 {
        %c0_32 = arith.constant 0 : index
        %c0_33 = arith.constant 0 : index
        %123 = vector.load %arg5[%c0_32, %c0_33] : memref<2x256xf32, #tpu.memory_space<vmem>>, vector<2x256xf32>
        %c0_34 = arith.constant 0 : index
        %c0_35 = arith.constant 0 : index
        %124 = vector.load %arg26[%c0_34, %c0_35] : memref<256x16xf32, #tpu.memory_space<vmem>>, vector<256x16xf32>
        %cst_36 = arith.constant dense<0.000000e+00> : vector<2x16xf32>
        %125 = tpu.matmul %123, %124, %cst_36 {dimension_numbers = #tpu.dot_dimension_numbers<[1], [0], [0], [1], [0, 0, 1, 1], [], []>} : vector<2x256xf32>, vector<256x16xf32>, vector<2x16xf32> -> vector<2x16xf32>
        %c0_37 = arith.constant 0 : index
        %c0_38 = arith.constant 0 : index
        %126 = vector.load %arg19[%c0_37, %c0_38] : memref<2x16xf32, #tpu.memory_space<vmem>>, vector<2x16xf32>
        tpu.vector_store %arg19[%c0_37, %c0_38], %125 {strides = array<i32>} : memref<2x16xf32, #tpu.memory_space<vmem>>, vector<2x16xf32>,
        %c0_39 = arith.constant 0 : index
        %c0_40 = arith.constant 0 : index
        %127 = vector.load %arg15[%c0_39, %c0_40] : memref<16x192xf32, #tpu.memory_space<vmem>>, vector<16x192xf32>
        %cst_41 = arith.constant dense<0.000000e+00> : vector<2x192xf32>
        %128 = tpu.matmul %125, %127, %cst_41 {dimension_numbers = #tpu.dot_dimension_numbers<[1], [0], [0], [1], [0, 0, 1, 1], [], []>} : vector<2x16xf32>, vector<16x192xf32>, vector<2x192xf32> -> vector<2x192xf32>
        %c0_42 = arith.constant 0 : index
        %c0_43 = arith.constant 0 : index
        %129 = vector.load %arg16[%c0_42, %c0_43] : memref<1x192xf32, #tpu.memory_space<vmem>>, vector<1x192xf32>
        %130 = vector.broadcast %129 : vector<1x192xf32> to vector<2x192xf32>
        %131 = arith.addf %128, %130 : vector<2x192xf32>
        %cst_44 = arith.constant 0.000000e+00 : f32
        %132 = vector.broadcast %cst_44 : f32 to vector<2x192xf32>
        %133 = arith.maximumf %131, %132 : vector<2x192xf32>
        %c0_45 = arith.constant 0 : index
        %c0_46 = arith.constant 0 : index
        %134 = vector.load %arg17[%c0_45, %c0_46] : memref<192x6xf32, #tpu.memory_space<vmem>>, vector<192x6xf32>
        %cst_47 = arith.constant dense<0.000000e+00> : vector<2x6xf32>
        %135 = tpu.matmul %133, %134, %cst_47 {dimension_numbers = #tpu.dot_dimension_numbers<[1], [0], [0], [1], [0, 0, 1, 1], [], []>} : vector<2x192xf32>, vector<192x6xf32>, vector<2x6xf32> -> vector<2x6xf32>
        %c0_48 = arith.constant 0 : index
        %c0_49 = arith.constant 0 : index
        %136 = vector.load %arg18[%c0_48, %c0_49] : memref<1x6xf32, #tpu.memory_space<vmem>>, vector<1x6xf32>
        %137 = vector.broadcast %136 : vector<1x6xf32> to vector<2x6xf32>
        %138 = arith.addf %135, %137 : vector<2x6xf32>
        %c0_50 = arith.constant 0 : index
        %c0_51 = arith.constant 0 : index
        %139 = vector.load %arg20[%c0_50, %c0_51] : memref<2x6xf32, #tpu.memory_space<vmem>>, vector<2x6xf32>
        tpu.vector_store %arg20[%c0_50, %c0_51], %138 {strides = array<i32>} : memref<2x6xf32, #tpu.memory_space<vmem>>, vector<2x6xf32>,
      } else {
      }
    } else {
    }
    return
  }
  func.func @transform_0(%arg0: i32, %arg1: i32) -> (i32, i32) {
    %c0_i32 = arith.constant 0 : i32
    %c0_i32_0 = arith.constant 0 : i32
    %c0_i32_1 = arith.constant 0 : i32
    return %c0_i32, %c0_i32_0 : i32, i32
  }
  func.func @transform_1(%arg0: i32, %arg1: i32) -> (i32, i32) {
    %c2_i32 = arith.constant 2 : i32
    %0 = arith.cmpi sle, %arg0, %c2_i32 : i32
    %c0_i32 = arith.constant 0 : i32
    %1 = arith.select %0, %arg1, %c0_i32 : i32
    %c0_i32_0 = arith.constant 0 : i32
    %c0_i32_1 = arith.constant 0 : i32
    return %1, %c0_i32_0 : i32, i32
  }
  func.func @transform_2(%arg0: i32, %arg1: i32) -> (i32, i32) {
    %c3_i32 = arith.constant 3 : i32
    %0 = arith.cmpi eq, %arg0, %c3_i32 : i32
    %c0_i32 = arith.constant 0 : i32
    %1 = arith.select %0, %arg1, %c0_i32 : i32
    %c0_i32_0 = arith.constant 0 : i32
    %c0_i32_1 = arith.constant 0 : i32
    return %1, %c0_i32_0 : i32, i32
  }
  func.func @transform_3(%arg0: i32, %arg1: i32) -> (i32, i32) {
    %c0_i32 = arith.constant 0 : i32
    %c0_i32_0 = arith.constant 0 : i32
    %c0_i32_1 = arith.constant 0 : i32
    return %c0_i32, %c0_i32_0 : i32, i32
  }
  func.func @transform_4(%arg0: i32, %arg1: i32) -> (i32, i32) {
    %c0_i32 = arith.constant 0 : i32
    %c0_i32_0 = arith.constant 0 : i32
    %c0_i32_1 = arith.constant 0 : i32
    return %c0_i32, %c0_i32_0 : i32, i32
  }
  func.func @transform_5(%arg0: i32, %arg1: i32) -> (i32, i32) {
    %c0_i32 = arith.constant 0 : i32
    %c0_i32_0 = arith.constant 0 : i32
    %c0_i32_1 = arith.constant 0 : i32
    return %c0_i32, %c0_i32_0 : i32, i32
  }
  func.func @transform_6(%arg0: i32, %arg1: i32) -> (i32, i32) {
    %c0_i32 = arith.constant 0 : i32
    %c0_i32_0 = arith.constant 0 : i32
    %c0_i32_1 = arith.constant 0 : i32
    return %c0_i32, %c0_i32_0 : i32, i32
  }
  func.func @transform_7(%arg0: i32, %arg1: i32) -> (i32, i32) {
    %c0_i32 = arith.constant 0 : i32
    %c0_i32_0 = arith.constant 0 : i32
    %c0_i32_1 = arith.constant 0 : i32
    return %c0_i32, %c0_i32_0 : i32, i32
  }
  func.func @transform_8(%arg0: i32, %arg1: i32) -> (i32, i32) {
    %c0_i32 = arith.constant 0 : i32
    %c0_i32_0 = arith.constant 0 : i32
    %c0_i32_1 = arith.constant 0 : i32
    return %c0_i32, %c0_i32_0 : i32, i32
  }
  func.func @transform_9(%arg0: i32, %arg1: i32) -> (i32, i32) {
    %c0_i32 = arith.constant 0 : i32
    %c0_i32_0 = arith.constant 0 : i32
    %c0_i32_1 = arith.constant 0 : i32
    return %c0_i32, %c0_i32_0 : i32, i32
  }
  func.func @transform_10(%arg0: i32, %arg1: i32) -> (i32, i32) {
    %c0_i32 = arith.constant 0 : i32
    %c0_i32_0 = arith.constant 0 : i32
    %c0_i32_1 = arith.constant 0 : i32
    return %c0_i32, %c0_i32_0 : i32, i32
  }
  func.func @transform_11(%arg0: i32, %arg1: i32) -> (i32, i32) {
    %c0_i32 = arith.constant 0 : i32
    %c0_i32_0 = arith.constant 0 : i32
    %c0_i32_1 = arith.constant 0 : i32
    return %c0_i32, %c0_i32_0 : i32, i32
  }
  func.func @transform_12(%arg0: i32, %arg1: i32) -> (i32, i32) {
    %c0_i32 = arith.constant 0 : i32
    %c0_i32_0 = arith.constant 0 : i32
    %c0_i32_1 = arith.constant 0 : i32
    return %c0_i32, %c0_i32_0 : i32, i32
  }
  func.func @transform_13(%arg0: i32, %arg1: i32) -> (i32, i32) {
    %c0_i32 = arith.constant 0 : i32
    %c0_i32_0 = arith.constant 0 : i32
    %c0_i32_1 = arith.constant 0 : i32
    return %c0_i32, %c0_i32_0 : i32, i32
  }
  func.func @transform_14(%arg0: i32, %arg1: i32) -> (i32, i32) {
    %c0_i32 = arith.constant 0 : i32
    %c0_i32_0 = arith.constant 0 : i32
    %c0_i32_1 = arith.constant 0 : i32
    return %c0_i32, %c0_i32_0 : i32, i32
  }
  func.func @transform_15(%arg0: i32, %arg1: i32) -> (i32, i32) {
    %c0_i32 = arith.constant 0 : i32
    %c0_i32_0 = arith.constant 0 : i32
    %c0_i32_1 = arith.constant 0 : i32
    return %c0_i32, %c0_i32_0 : i32, i32
  }
  func.func @transform_16(%arg0: i32, %arg1: i32) -> (i32, i32) {
    %c0_i32 = arith.constant 0 : i32
    %c0_i32_0 = arith.constant 0 : i32
    %c0_i32_1 = arith.constant 0 : i32
    return %c0_i32, %c0_i32_0 : i32, i32
  }
  func.func @transform_17(%arg0: i32, %arg1: i32) -> (i32, i32) {
    %c0_i32 = arith.constant 0 : i32
    %c0_i32_0 = arith.constant 0 : i32
    %c0_i32_1 = arith.constant 0 : i32
    return %c0_i32, %c0_i32_0 : i32, i32
  }
  func.func @transform_18(%arg0: i32, %arg1: i32) -> (i32, i32) {
    %c0_i32 = arith.constant 0 : i32
    %c0_i32_0 = arith.constant 0 : i32
    %c0_i32_1 = arith.constant 0 : i32
    return %c0_i32, %c0_i32_0 : i32, i32
  }
}

</mosaic_0001>

<llo_original>
// kernel: persuasion_gnn_forward.1
$region0: #{persuasion_gnn_forward.1}
  #allocation0 [shape = 'u32[]', space=smem, size = 0x4, offset = 0x4, fixed_abs, tag = 'smem constant byte address 0x4 - core index']
  #allocation1 [shape = 'u32[144,128]{1,0:T(1,128)}', space=vmem, size = 0x12000, scoped, tag = 'internal scratch']
  #allocation2 [shape = 'f32[256,32]{1,0:T(8,128)}', space=vmem, size = 0x20000, scoped, tag = 'scratch operand']
  #allocation3 [shape = 'f32[256,32]{1,0:T(8,128)}', space=vmem, size = 0x20000, scoped, tag = 'scratch operand']
  #allocation4 [shape = 'bf16[256,64]{1,0:T(16,128)(2,1)}', space=vmem, size = 0x10000, scoped, tag = 'scratch operand']
  #allocation5 [shape = 'f32[256,4]{1,0:T(8,128)}', space=vmem, size = 0x20000, scoped, tag = 'scratch operand']
  #allocation6 [shape = 'f32[8,256]{1,0:T(8,128)}', space=vmem, size = 0x2000, scoped, tag = 'scratch operand']
  #allocation7 [shape = 'f32[256,16]{1,0:T(8,128)}', space=vmem, size = 0x20000, scoped, tag = 'scratch operand']
  %s0 = inlined_call_operand.vmem [shape: f32[256,64], index: 0, kind: input, shape index: {}]
  %s1 = inlined_call_operand.vmem [shape: bf16[256,256], index: 1, kind: input, shape index: {}]
  %s2 = inlined_call_operand.vmem [shape: bf16[256,256], index: 2, kind: input, shape index: {}]
  %s3 = inlined_call_operand.vmem [shape: f32[2,256], index: 3, kind: input, shape index: {}]
  %s4 = inlined_call_operand.vmem [shape: f32[128,32], index: 4, kind: input, shape index: {}]
  %s5 = inlined_call_operand.vmem [shape: f32[1,32], index: 5, kind: input, shape index: {}]
  %s6 = inlined_call_operand.vmem [shape: f32[64,32], index: 6, kind: input, shape index: {}]
  %s7 = inlined_call_operand.vmem [shape: f32[1,32], index: 7, kind: input, shape index: {}]
  %s8 = inlined_call_operand.vmem [shape: f32[64,16], index: 8, kind: input, shape index: {}]
  %s9 = inlined_call_operand.vmem [shape: f32[1,16], index: 9, kind: input, shape index: {}]
  %s10 = inlined_call_operand.vmem [shape: f32[16,64], index: 10, kind: input, shape index: {}]
  %s11 = inlined_call_operand.vmem [shape: f32[64,8], index: 11, kind: input, shape index: {}]
  %s12 = inlined_call_operand.vmem [shape: f32[1,16], index: 12, kind: input, shape index: {}]
  %s13 = inlined_call_operand.vmem [shape: f32[16,192], index: 13, kind: input, shape index: {}]
  %s14 = inlined_call_operand.vmem [shape: f32[1,192], index: 14, kind: input, shape index: {}]
  %s15 = inlined_call_operand.vmem [shape: f32[192,6], index: 15, kind: input, shape index: {}]
  %s16 = inlined_call_operand.vmem [shape: f32[1,6], index: 16, kind: input, shape index: {}]
  %s17 = inlined_call_operand.hbm [shape: f32[2,16], index: 17, kind: output, shape index: {0}]
  %s18 = inlined_call_operand.vmem [shape: f32[2,6], index: 18, kind: output, shape index: {1}]
  %19 = xla_tuple %s17, %s18
  %s20 = sld [smem:[#allocation0]]
  $region129: #{persuasion_gnn_forward.1} parent=0
    _
  %s22 = ssub.s32 1, %s20
  %s23 = scalar_select 0, %s22, %s20
  $region1: #{persuasion_gnn_forward.1} parent=0
    #allocation8 [shape = 'u8[1024]{0}', space=vmem, size = 0x400, scoped, tag = 'output window, operand 0, single buffered']
    #allocation9 [shape = 's32[2]{0}', space=sflag, size = 0x8, scoped, tag = 'scoped memory for persuasion_gnn_forward.1']
    %24 = vsyncpa [#allocation9], 0
    loop: start=0, step=1, limit=10
    $region2: #{persuasion_gnn_forward.1} parent=1 // loop_pre_header
      _
    $region3: #{persuasion_gnn_forward.1} parent=1 // loop_header
      %s26 = sphi 0, %s30
      %p27 = scmp.ge.s32.totalorder %s26, 10
      %s33 = sphi 0, %s45
      %s34 = sphi 0, %s41
      %s35 = sphi 0, %s33
      %s36 = sphi 0, %s34
      %s37 = sphi 0, %s35
      %s38 = sphi 0, %s36
      %s46 = sphi 0, %s46
      %s48 = sphi 0, %s46
      %s49 = sphi 0, %s48
      %s63 = sphi 0, %s49
      %s73 = sphi 0, %s75
      %s76 = sphi 0, %s73
      %s77 = sphi 0, %s76
      %s93 = sphi 0, %s77
      %s103 = sphi 0, %s105
      %s106 = sphi 0, %s103
      %s107 = sphi 0, %s106
      %s123 = sphi 0, %s107
      %s127 = sphi 0, %s127
      %s129 = sphi 0, %s127
      %s130 = sphi 0, %s129
      %s144 = sphi 0, %s130
      %s148 = sphi 0, %s148
      %s150 = sphi 0, %s148
      %s151 = sphi 0, %s150
      %s165 = sphi 0, %s151
      %s169 = sphi 0, %s169
      %s171 = sphi 0, %s169
      %s172 = sphi 0, %s171
      %s186 = sphi 0, %s172
      %s190 = sphi 0, %s190
      %s192 = sphi 0, %s190
      %s193 = sphi 0, %s192
      %s207 = sphi 0, %s193
      %s211 = sphi 0, %s211
      %s213 = sphi 0, %s211
      %s214 = sphi 0, %s213
      %s228 = sphi 0, %s214
      %s232 = sphi 0, %s232
      %s234 = sphi 0, %s232
      %s235 = sphi 0, %s234
      %s249 = sphi 0, %s235
      %s253 = sphi 0, %s253
      %s255 = sphi 0, %s253
      %s256 = sphi 0, %s255
      %s270 = sphi 0, %s256
      %s274 = sphi 0, %s274
      %s276 = sphi 0, %s274
      %s277 = sphi 0, %s276
      %s291 = sphi 0, %s277
      %s295 = sphi 0, %s295
      %s297 = sphi 0, %s295
      %s298 = sphi 0, %s297
      %s312 = sphi 0, %s298
      %s316 = sphi 0, %s316
      %s318 = sphi 0, %s316
      %s319 = sphi 0, %s318
      %s333 = sphi 0, %s319
      %s337 = sphi 0, %s337
      %s339 = sphi 0, %s337
      %s340 = sphi 0, %s339
      %s354 = sphi 0, %s340
      %s358 = sphi 0, %s358
      %s360 = sphi 0, %s358
      %s361 = sphi 0, %s360
      %s375 = sphi 0, %s361
      %s379 = sphi 0, %s379
      %s381 = sphi 0, %s379
      %s382 = sphi 0, %s381
      %s396 = sphi 0, %s382
      %s400 = sphi 0, %s400
      %s402 = sphi 0, %s400
      %s403 = sphi 0, %s402
      %s417 = sphi 0, %s403
      %s421 = sphi 0, %s421
      %s423 = sphi 0, %s421
      %s424 = sphi 0, %s423
      %s438 = sphi 0, %s424
      %s442 = sphi 0, %s442
      %s444 = sphi 0, %s442
      %s445 = sphi 0, %s444
      %s459 = sphi 0, %s445
    $region4: #{persuasion_gnn_forward.1} parent=1 // loop_header_branch
      %29 = sbr.rel (%p27) target = $region8
    $region5: #{persuasion_gnn_forward.1} parent=1 // loop_body
      %s31 = ssub.s32 %s26, 1
      %s32 = ssub.s32 %s26, 2
      %s39 = sadd.s32 1, %s34
      %p40 = scmp.ge.s32.totalorder %s39, 2
      %s41 = scalar_select %p40, 0, %s39
      %s42 = sadd.s32 1, %s33
      %s43 = scalar_select %p40, %s42, %s33
      %p44 = scmp.ge.s32.totalorder %s43, 4
      %s45 = scalar_select %p44, 0, %s43
      %s47 = sadd.s32 %s46, 1
      %p50 = scmp.eq.s32.totalorder %s26, 7
      %p51 = scmp.ne.s32.totalorder %s46, %s48
      %p52 = scmp.eq.s32.totalorder %s26, 0
      %p53 = por %p51, %p52
      %p54 = scmp.ne.s32.totalorder %s46, %s48
      %p55 = scmp.eq.s32.totalorder %s31, 7
      %p56 = por %p54, %p55
      %p57 = scmp.ne.s32.totalorder %s48, %s49
      %p58 = scmp.eq.s32.totalorder %s31, 0
      %p59 = por %p57, %p58
      %p60 = scmp.ne.s32.totalorder %s48, %s49
      %p61 = scmp.eq.s32.totalorder %s32, 7
      %p62 = por %p60, %p61
      %p64 = scmp.ne.s32.totalorder %s49, %s63
      %p65 = scmp.eq.s32.totalorder %s32, 0
      %p66 = por %p64, %p65
      %p67 = scmp.le.s32.totalorder %s33, 2
      %s68 = scalar_select %p67, %s34, 0
      %p69 = scmp.le.s32.totalorder %s45, 2
      %s70 = scalar_select %p69, %s41, 0
      %s71 = ssub.s32 %s68, %s70
      %p72 = scmp.eq.s32.totalorder %s71, 0
      %s74 = sadd.s32 %s73, 1
      %s75 = scalar_select %p72, %s73, %s74
      %p78 = pneg %p72
      %p79 = scmp.eq.s32.totalorder %s26, 7
      %p80 = por %p78, %p79
      %p81 = scmp.ne.s32.totalorder %s73, %s76
      %p82 = scmp.eq.s32.totalorder %s26, 0
      %p83 = por %p81, %p82
      %p84 = scmp.ne.s32.totalorder %s73, %s76
      %p85 = scmp.eq.s32.totalorder %s31, 7
      %p86 = por %p84, %p85
      %p87 = scmp.ne.s32.totalorder %s76, %s77
      %p88 = scmp.eq.s32.totalorder %s31, 0
      %p89 = por %p87, %p88
      %p90 = scmp.ne.s32.totalorder %s76, %s77
      %p91 = scmp.eq.s32.totalorder %s32, 7
      %p92 = por %p90, %p91
      %p94 = scmp.ne.s32.totalorder %s77, %s93
      %p95 = scmp.eq.s32.totalorder %s32, 0
      %p96 = por %p94, %p95
      %p97 = scmp.eq.s32.totalorder %s33, 3
      %s98 = scalar_select %p97, %s34, 0
      %p99 = scmp.eq.s32.totalorder %s45, 3
      %s100 = scalar_select %p99, %s41, 0
      %s101 = ssub.s32 %s98, %s100
      %p102 = scmp.eq.s32.totalorder %s101, 0
      %s104 = sadd.s32 %s103, 1
      %s105 = scalar_select %p102, %s103, %s104
      %p108 = pneg %p102
      %p109 = scmp.eq.s32.totalorder %s26, 7
      %p110 = por %p108, %p109
      %p111 = scmp.ne.s32.totalorder %s103, %s106
      %p112 = scmp.eq.s32.totalorder %s26, 0
      %p113 = por %p111, %p112
      %p114 = scmp.ne.s32.totalorder %s103, %s106
      %p115 = scmp.eq.s32.totalorder %s31, 7
      %p116 = por %p114, %p115
      %p117 = scmp.ne.s32.totalorder %s106, %s107
      %p118 = scmp.eq.s32.totalorder %s31, 0
      %p119 = por %p117, %p118
      %p120 = scmp.ne.s32.totalorder %s106, %s107
      %p121 = scmp.eq.s32.totalorder %s32, 7
      %p122 = por %p120, %p121
      %p124 = scmp.ne.s32.totalorder %s107, %s123
      %p125 = scmp.eq.s32.totalorder %s32, 0
      %p126 = por %p124, %p125
      %s128 = sadd.s32 %s127, 1
      %p131 = scmp.eq.s32.totalorder %s26, 7
      %p132 = scmp.ne.s32.totalorder %s127, %s129
      %p133 = scmp.eq.s32.totalorder %s26, 0
      %p134 = por %p132, %p133
      %p135 = scmp.ne.s32.totalorder %s127, %s129
      %p136 = scmp.eq.s32.totalorder %s31, 7
      %p137 = por %p135, %p136
      %p138 = scmp.ne.s32.totalorder %s129, %s130
      %p139 = scmp.eq.s32.totalorder %s31, 0
      %p140 = por %p138, %p139
      %p141 = scmp.ne.s32.totalorder %s129, %s130
      %p142 = scmp.eq.s32.totalorder %s32, 7
      %p143 = por %p141, %p142
      %p145 = scmp.ne.s32.totalorder %s130, %s144
      %p146 = scmp.eq.s32.totalorder %s32, 0
      %p147 = por %p145, %p146
      %s149 = sadd.s32 %s148, 1
      %p152 = scmp.eq.s32.totalorder %s26, 7
      %p153 = scmp.ne.s32.totalorder %s148, %s150
      %p154 = scmp.eq.s32.totalorder %s26, 0
      %p155 = por %p153, %p154
      %p156 = scmp.ne.s32.totalorder %s148, %s150
      %p157 = scmp.eq.s32.totalorder %s31, 7
      %p158 = por %p156, %p157
      %p159 = scmp.ne.s32.totalorder %s150, %s151
      %p160 = scmp.eq.s32.totalorder %s31, 0
      %p161 = por %p159, %p160
      %p162 = scmp.ne.s32.totalorder %s150, %s151
      %p163 = scmp.eq.s32.totalorder %s32, 7
      %p164 = por %p162, %p163
      %p166 = scmp.ne.s32.totalorder %s151, %s165
      %p167 = scmp.eq.s32.totalorder %s32, 0
      %p168 = por %p166, %p167
      %s170 = sadd.s32 %s169, 1
      %p173 = scmp.eq.s32.totalorder %s26, 7
      %p174 = scmp.ne.s32.totalorder %s169, %s171
      %p175 = scmp.eq.s32.totalorder %s26, 0
      %p176 = por %p174, %p175
      %p177 = scmp.ne.s32.totalorder %s169, %s171
      %p178 = scmp.eq.s32.totalorder %s31, 7
      %p179 = por %p177, %p178
      %p180 = scmp.ne.s32.totalorder %s171, %s172
      %p181 = scmp.eq.s32.totalorder %s31, 0
      %p182 = por %p180, %p181
      %p183 = scmp.ne.s32.totalorder %s171, %s172
      %p184 = scmp.eq.s32.totalorder %s32, 7
      %p185 = por %p183, %p184
      %p187 = scmp.ne.s32.totalorder %s172, %s186
      %p188 = scmp.eq.s32.totalorder %s32, 0
      %p189 = por %p187, %p188
      %s191 = sadd.s32 %s190, 1
      %p194 = scmp.eq.s32.totalorder %s26, 7
      %p195 = scmp.ne.s32.totalorder %s190, %s192
      %p196 = scmp.eq.s32.totalorder %s26, 0
      %p197 = por %p195, %p196
      %p198 = scmp.ne.s32.totalorder %s190, %s192
      %p199 = scmp.eq.s32.totalorder %s31, 7
      %p200 = por %p198, %p199
      %p201 = scmp.ne.s32.totalorder %s192, %s193
      %p202 = scmp.eq.s32.totalorder %s31, 0
      %p203 = por %p201, %p202
      %p204 = scmp.ne.s32.totalorder %s192, %s193
      %p205 = scmp.eq.s32.totalorder %s32, 7
      %p206 = por %p204, %p205
      %p208 = scmp.ne.s32.totalorder %s193, %s207
      %p209 = scmp.eq.s32.totalorder %s32, 0
      %p210 = por %p208, %p209
      %s212 = sadd.s32 %s211, 1
      %p215 = scmp.eq.s32.totalorder %s26, 7
      %p216 = scmp.ne.s32.totalorder %s211, %s213
      %p217 = scmp.eq.s32.totalorder %s26, 0
      %p218 = por %p216, %p217
      %p219 = scmp.ne.s32.totalorder %s211, %s213
      %p220 = scmp.eq.s32.totalorder %s31, 7
      %p221 = por %p219, %p220
      %p222 = scmp.ne.s32.totalorder %s213, %s214
      %p223 = scmp.eq.s32.totalorder %s31, 0
      %p224 = por %p222, %p223
      %p225 = scmp.ne.s32.totalorder %s213, %s214
      %p226 = scmp.eq.s32.totalorder %s32, 7
      %p227 = por %p225, %p226
      %p229 = scmp.ne.s32.totalorder %s214, %s228
      %p230 = scmp.eq.s32.totalorder %s32, 0
      %p231 = por %p229, %p230
      %s233 = sadd.s32 %s232, 1
      %p236 = scmp.eq.s32.totalorder %s26, 7
      %p237 = scmp.ne.s32.totalorder %s232, %s234
      %p238 = scmp.eq.s32.totalorder %s26, 0
      %p239 = por %p237, %p238
      %p240 = scmp.ne.s32.totalorder %s232, %s234
      %p241 = scmp.eq.s32.totalorder %s31, 7
      %p242 = por %p240, %p241
      %p243 = scmp.ne.s32.totalorder %s234, %s235
      %p244 = scmp.eq.s32.totalorder %s31, 0
      %p245 = por %p243, %p244
      %p246 = scmp.ne.s32.totalorder %s234, %s235
      %p247 = scmp.eq.s32.totalorder %s32, 7
      %p248 = por %p246, %p247
      %p250 = scmp.ne.s32.totalorder %s235, %s249
      %p251 = scmp.eq.s32.totalorder %s32, 0
      %p252 = por %p250, %p251
      %s254 = sadd.s32 %s253, 1
      %p257 = scmp.eq.s32.totalorder %s26, 7
      %p258 = scmp.ne.s32.totalorder %s253, %s255
      %p259 = scmp.eq.s32.totalorder %s26, 0
      %p260 = por %p258, %p259
      %p261 = scmp.ne.s32.totalorder %s253, %s255
      %p262 = scmp.eq.s32.totalorder %s31, 7
      %p263 = por %p261, %p262
      %p264 = scmp.ne.s32.totalorder %s255, %s256
      %p265 = scmp.eq.s32.totalorder %s31, 0
      %p266 = por %p264, %p265
      %p267 = scmp.ne.s32.totalorder %s255, %s256
      %p268 = scmp.eq.s32.totalorder %s32, 7
      %p269 = por %p267, %p268
      %p271 = scmp.ne.s32.totalorder %s256, %s270
      %p272 = scmp.eq.s32.totalorder %s32, 0
      %p273 = por %p271, %p272
      %s275 = sadd.s32 %s274, 1
      %p278 = scmp.eq.s32.totalorder %s26, 7
      %p279 = scmp.ne.s32.totalorder %s274, %s276
      %p280 = scmp.eq.s32.totalorder %s26, 0
      %p281 = por %p279, %p280
      %p282 = scmp.ne.s32.totalorder %s274, %s276
      %p283 = scmp.eq.s32.totalorder %s31, 7
      %p284 = por %p282, %p283
      %p285 = scmp.ne.s32.totalorder %s276, %s277
      %p286 = scmp.eq.s32.totalorder %s31, 0
      %p287 = por %p285, %p286
      %p288 = scmp.ne.s32.totalorder %s276, %s277
      %p289 = scmp.eq.s32.totalorder %s32, 7
      %p290 = por %p288, %p289
      %p292 = scmp.ne.s32.totalorder %s277, %s291
      %p293 = scmp.eq.s32.totalorder %s32, 0
      %p294 = por %p292, %p293
      %s296 = sadd.s32 %s295, 1
      %p299 = scmp.eq.s32.totalorder %s26, 7
      %p300 = scmp.ne.s32.totalorder %s295, %s297
      %p301 = scmp.eq.s32.totalorder %s26, 0
      %p302 = por %p300, %p301
      %p303 = scmp.ne.s32.totalorder %s295, %s297
      %p304 = scmp.eq.s32.totalorder %s31, 7
      %p305 = por %p303, %p304
      %p306 = scmp.ne.s32.totalorder %s297, %s298
      %p307 = scmp.eq.s32.totalorder %s31, 0
      %p308 = por %p306, %p307
      %p309 = scmp.ne.s32.totalorder %s297, %s298
      %p310 = scmp.eq.s32.totalorder %s32, 7
      %p311 = por %p309, %p310
      %p313 = scmp.ne.s32.totalorder %s298, %s312
      %p314 = scmp.eq.s32.totalorder %s32, 0
      %p315 = por %p313, %p314
      %s317 = sadd.s32 %s316, 1
      %p320 = scmp.eq.s32.totalorder %s26, 7
      %p321 = scmp.ne.s32.totalorder %s316, %s318
      %p322 = scmp.eq.s32.totalorder %s26, 0
      %p323 = por %p321, %p322
      %p324 = scmp.ne.s32.totalorder %s316, %s318
      %p325 = scmp.eq.s32.totalorder %s31, 7
      %p326 = por %p324, %p325
      %p327 = scmp.ne.s32.totalorder %s318, %s319
      %p328 = scmp.eq.s32.totalorder %s31, 0
      %p329 = por %p327, %p328
      %p330 = scmp.ne.s32.totalorder %s318, %s319
      %p331 = scmp.eq.s32.totalorder %s32, 7
      %p332 = por %p330, %p331
      %p334 = scmp.ne.s32.totalorder %s319, %s333
      %p335 = scmp.eq.s32.totalorder %s32, 0
      %p336 = por %p334, %p335
      %s338 = sadd.s32 %s337, 1
      %p341 = scmp.eq.s32.totalorder %s26, 7
      %p342 = scmp.ne.s32.totalorder %s337, %s339
      %p343 = scmp.eq.s32.totalorder %s26, 0
      %p344 = por %p342, %p343
      %p345 = scmp.ne.s32.totalorder %s337, %s339
      %p346 = scmp.eq.s32.totalorder %s31, 7
      %p347 = por %p345, %p346
      %p348 = scmp.ne.s32.totalorder %s339, %s340
      %p349 = scmp.eq.s32.totalorder %s31, 0
      %p350 = por %p348, %p349
      %p351 = scmp.ne.s32.totalorder %s339, %s340
      %p352 = scmp.eq.s32.totalorder %s32, 7
      %p353 = por %p351, %p352
      %p355 = scmp.ne.s32.totalorder %s340, %s354
      %p356 = scmp.eq.s32.totalorder %s32, 0
      %p357 = por %p355, %p356
      %s359 = sadd.s32 %s358, 1
      %p362 = scmp.eq.s32.totalorder %s26, 7
      %p363 = scmp.ne.s32.totalorder %s358, %s360
      %p364 = scmp.eq.s32.totalorder %s26, 0
      %p365 = por %p363, %p364
      %p366 = scmp.ne.s32.totalorder %s358, %s360
      %p367 = scmp.eq.s32.totalorder %s31, 7
      %p368 = por %p366, %p367
      %p369 = scmp.ne.s32.totalorder %s360, %s361
      %p370 = scmp.eq.s32.totalorder %s31, 0
      %p371 = por %p369, %p370
      %p372 = scmp.ne.s32.totalorder %s360, %s361
      %p373 = scmp.eq.s32.totalorder %s32, 7
      %p374 = por %p372, %p373
      %p376 = scmp.ne.s32.totalorder %s361, %s375
      %p377 = scmp.eq.s32.totalorder %s32, 0
      %p378 = por %p376, %p377
      %s380 = sadd.s32 %s379, 1
      %p383 = scmp.eq.s32.totalorder %s26, 7
      %p384 = scmp.ne.s32.totalorder %s379, %s381
      %p385 = scmp.eq.s32.totalorder %s26, 0
      %p386 = por %p384, %p385
      %p387 = scmp.ne.s32.totalorder %s379, %s381
      %p388 = scmp.eq.s32.totalorder %s31, 7
      %p389 = por %p387, %p388
      %p390 = scmp.ne.s32.totalorder %s381, %s382
      %p391 = scmp.eq.s32.totalorder %s31, 0
      %p392 = por %p390, %p391
      %p393 = scmp.ne.s32.totalorder %s381, %s382
      %p394 = scmp.eq.s32.totalorder %s32, 7
      %p395 = por %p393, %p394
      %p397 = scmp.ne.s32.totalorder %s382, %s396
      %p398 = scmp.eq.s32.totalorder %s32, 0
      %p399 = por %p397, %p398
      %s401 = sadd.s32 %s400, 1
      %p404 = scmp.eq.s32.totalorder %s26, 7
      %p405 = scmp.ne.s32.totalorder %s400, %s402
      %p406 = scmp.eq.s32.totalorder %s26, 0
      %p407 = por %p405, %p406
      %p408 = scmp.ne.s32.totalorder %s400, %s402
      %p409 = scmp.eq.s32.totalorder %s31, 7
      %p410 = por %p408, %p409
      %p411 = scmp.ne.s32.totalorder %s402, %s403
      %p412 = scmp.eq.s32.totalorder %s31, 0
      %p413 = por %p411, %p412
      %p414 = scmp.ne.s32.totalorder %s402, %s403
      %p415 = scmp.eq.s32.totalorder %s32, 7
      %p416 = por %p414, %p415
      %p418 = scmp.ne.s32.totalorder %s403, %s417
      %p419 = scmp.eq.s32.totalorder %s32, 0
      %p420 = por %p418, %p419
      %s422 = sadd.s32 %s421, 1
      %p425 = scmp.eq.s32.totalorder %s26, 7
      %p426 = scmp.ne.s32.totalorder %s421, %s423
      %p427 = scmp.eq.s32.totalorder %s26, 0
      %p428 = por %p426, %p427
      %p429 = scmp.ne.s32.totalorder %s421, %s423
      %p430 = scmp.eq.s32.totalorder %s31, 7
      %p431 = por %p429, %p430
      %p432 = scmp.ne.s32.totalorder %s423, %s424
      %p433 = scmp.eq.s32.totalorder %s31, 0
      %p434 = por %p432, %p433
      %p435 = scmp.ne.s32.totalorder %s423, %s424
      %p436 = scmp.eq.s32.totalorder %s32, 7
      %p437 = por %p435, %p436
      %p439 = scmp.ne.s32.totalorder %s424, %s438
      %p440 = scmp.eq.s32.totalorder %s32, 0
      %p441 = por %p439, %p440
      %s443 = sadd.s32 %s442, 1
      %p446 = scmp.eq.s32.totalorder %s26, 7
      %p447 = scmp.ne.s32.totalorder %s442, %s444
      %p448 = scmp.eq.s32.totalorder %s26, 0
      %p449 = por %p447, %p448
      %p450 = scmp.ne.s32.totalorder %s442, %s444
      %p451 = scmp.eq.s32.totalorder %s31, 7
      %p452 = por %p450, %p451
      %p453 = scmp.ne.s32.totalorder %s444, %s445
      %p454 = scmp.eq.s32.totalorder %s31, 0
      %p455 = por %p453, %p454
      %p456 = scmp.ne.s32.totalorder %s444, %s445
      %p457 = scmp.eq.s32.totalorder %s32, 7
      %p458 = por %p456, %p457
      %p460 = scmp.ne.s32.totalorder %s445, %s459
      %p461 = scmp.eq.s32.totalorder %s32, 0
      %p462 = por %p460, %p461
      %p463 = scmp.le.s32.totalorder 1, %s26
      %p464 = scmp.lt.s32.totalorder %s26, 9
      %p465 = pnand %p463, %p464
      %p466 = pneg %p465
      // Predicated region
      $region9: #{persuasion_gnn_forward.1} parent=5 // pred_check
        _
      $region10: #{persuasion_gnn_forward.1} parent=5 // pred_check_branch
        %468 = sbr.rel (%p465) target = $region12
      $region11: #{persuasion_gnn_forward.1} parent=5 // pred_region
        %s469 = ssub.s32 %s26, 1
        // Predicated region
        $region13: #{persuasion_gnn_forward.1} parent=11 // pred_check
          %p470 = pneg %p59
        $region14: #{persuasion_gnn_forward.1} parent=11 // pred_check_branch
          %472 = sbr.rel (%p470) target = $region16
        $region15: #{persuasion_gnn_forward.1} parent=11 // pred_region
          _
        $region16: #{persuasion_gnn_forward.1} parent=11 // pred_fallthru
          _
        // Predicated region
        $region17: #{persuasion_gnn_forward.1} parent=11 // pred_check
          %p473 = pneg %p140
        $region18: #{persuasion_gnn_forward.1} parent=11 // pred_check_branch
          %475 = sbr.rel (%p473) target = $region20
        $region19: #{persuasion_gnn_forward.1} parent=11 // pred_region
          _
        $region20: #{persuasion_gnn_forward.1} parent=11 // pred_fallthru
          _
        // Predicated region
        $region21: #{persuasion_gnn_forward.1} parent=11 // pred_check
          %p476 = pneg %p161
        $region22: #{persuasion_gnn_forward.1} parent=11 // pred_check_branch
          %478 = sbr.rel (%p476) target = $region24
        $region23: #{persuasion_gnn_forward.1} parent=11 // pred_region
          _
        $region24: #{persuasion_gnn_forward.1} parent=11 // pred_fallthru
          _
        // Predicated region
        $region25: #{persuasion_gnn_forward.1} parent=11 // pred_check
          %p479 = pneg %p182
        $region26: #{persuasion_gnn_forward.1} parent=11 // pred_check_branch
          %481 = sbr.rel (%p479) target = $region28
        $region27: #{persuasion_gnn_forward.1} parent=11 // pred_region
          _
        $region28: #{persuasion_gnn_forward.1} parent=11 // pred_fallthru
          _
        // Predicated region
        $region29: #{persuasion_gnn_forward.1} parent=11 // pred_check
          %p482 = pneg %p203
        $region30: #{persuasion_gnn_forward.1} parent=11 // pred_check_branch
          %484 = sbr.rel (%p482) target = $region32
        $region31: #{persuasion_gnn_forward.1} parent=11 // pred_region
          _
        $region32: #{persuasion_gnn_forward.1} parent=11 // pred_fallthru
          _
        // Predicated region
        $region33: #{persuasion_gnn_forward.1} parent=11 // pred_check
          %p485 = pneg %p224
        $region34: #{persuasion_gnn_forward.1} parent=11 // pred_check_branch
          %487 = sbr.rel (%p485) target = $region36
        $region35: #{persuasion_gnn_forward.1} parent=11 // pred_region
          _
        $region36: #{persuasion_gnn_forward.1} parent=11 // pred_fallthru
          _
        // Predicated region
        $region37: #{persuasion_gnn_forward.1} parent=11 // pred_check
          %p488 = pneg %p245
        $region38: #{persuasion_gnn_forward.1} parent=11 // pred_check_branch
          %490 = sbr.rel (%p488) target = $region40
        $region39: #{persuasion_gnn_forward.1} parent=11 // pred_region
          _
        $region40: #{persuasion_gnn_forward.1} parent=11 // pred_fallthru
          _
        // Predicated region
        $region41: #{persuasion_gnn_forward.1} parent=11 // pred_check
          %p491 = pneg %p266
        $region42: #{persuasion_gnn_forward.1} parent=11 // pred_check_branch
          %493 = sbr.rel (%p491) target = $region44
        $region43: #{persuasion_gnn_forward.1} parent=11 // pred_region
          _
        $region44: #{persuasion_gnn_forward.1} parent=11 // pred_fallthru
          _
        // Predicated region
        $region45: #{persuasion_gnn_forward.1} parent=11 // pred_check
          %p494 = pneg %p287
        $region46: #{persuasion_gnn_forward.1} parent=11 // pred_check_branch
          %496 = sbr.rel (%p494) target = $region48
        $region47: #{persuasion_gnn_forward.1} parent=11 // pred_region
          _
        $region48: #{persuasion_gnn_forward.1} parent=11 // pred_fallthru
          _
        // Predicated region
        $region49: #{persuasion_gnn_forward.1} parent=11 // pred_check
          %p497 = pneg %p308
        $region50: #{persuasion_gnn_forward.1} parent=11 // pred_check_branch
          %499 = sbr.rel (%p497) target = $region52
        $region51: #{persuasion_gnn_forward.1} parent=11 // pred_region
          _
        $region52: #{persuasion_gnn_forward.1} parent=11 // pred_fallthru
          _
        // Predicated region
        $region53: #{persuasion_gnn_forward.1} parent=11 // pred_check
          %p500 = pneg %p329
        $region54: #{persuasion_gnn_forward.1} parent=11 // pred_check_branch
          %502 = sbr.rel (%p500) target = $region56
        $region55: #{persuasion_gnn_forward.1} parent=11 // pred_region
          _
        $region56: #{persuasion_gnn_forward.1} parent=11 // pred_fallthru
          _
        // Predicated region
        $region57: #{persuasion_gnn_forward.1} parent=11 // pred_check
          %p503 = pneg %p350
        $region58: #{persuasion_gnn_forward.1} parent=11 // pred_check_branch
          %505 = sbr.rel (%p503) target = $region60
        $region59: #{persuasion_gnn_forward.1} parent=11 // pred_region
          _
        $region60: #{persuasion_gnn_forward.1} parent=11 // pred_fallthru
          _
        // Predicated region
        $region61: #{persuasion_gnn_forward.1} parent=11 // pred_check
          %p506 = pneg %p371
        $region62: #{persuasion_gnn_forward.1} parent=11 // pred_check_branch
          %508 = sbr.rel (%p506) target = $region64
        $region63: #{persuasion_gnn_forward.1} parent=11 // pred_region
          _
        $region64: #{persuasion_gnn_forward.1} parent=11 // pred_fallthru
          _
        // Predicated region
        $region65: #{persuasion_gnn_forward.1} parent=11 // pred_check
          %p509 = pneg %p392
        $region66: #{persuasion_gnn_forward.1} parent=11 // pred_check_branch
          %511 = sbr.rel (%p509) target = $region68
        $region67: #{persuasion_gnn_forward.1} parent=11 // pred_region
          _
        $region68: #{persuasion_gnn_forward.1} parent=11 // pred_fallthru
          _
        // Predicated region
        $region69: #{persuasion_gnn_forward.1} parent=11 // pred_check
          %p512 = pneg %p413
        $region70: #{persuasion_gnn_forward.1} parent=11 // pred_check_branch
          %514 = sbr.rel (%p512) target = $region72
        $region71: #{persuasion_gnn_forward.1} parent=11 // pred_region
          _
        $region72: #{persuasion_gnn_forward.1} parent=11 // pred_fallthru
          _
      $region12: #{persuasion_gnn_forward.1} parent=5 // pred_fallthru
        _
      %p515 = scmp.lt.s32.totalorder %s26, 8
      // Predicated region
      $region73: #{persuasion_gnn_forward.1} parent=5 // pred_check
        %p516 = pneg %p515
      $region74: #{persuasion_gnn_forward.1} parent=5 // pred_check_branch
        %518 = sbr.rel (%p516) target = $region76
      $region75: #{persuasion_gnn_forward.1} parent=5 // pred_region
        // Predicated region
        $region77: #{persuasion_gnn_forward.1} parent=75 // pred_check
          %p519 = pneg %p83
        $region78: #{persuasion_gnn_forward.1} parent=75 // pred_check_branch
          %521 = sbr.rel (%p519) target = $region80
        $region79: #{persuasion_gnn_forward.1} parent=75 // pred_region
          %p522 = scmp.le.s32.totalorder %s33, 2
          %s523 = scalar_select %p522, %s34, 0
          %s524 = smul.u32 16, %s523
          %p525 = scmp.lt.s32.totalorder %s524, 31
          %s526 = scalar_select %p525, %s524, 31
          %s527 = smul.addr %s526, 2
          %s528 = smul.addr %s527, 4
          %s529 = scalar_lea.vmem %s1, %s528
          %p530 = scmp.le.s32.totalorder %s33, 2
          %s531 = scalar_select %p530, %s34, 0
          %s532 = smul.u32 16, %s531
        $region80: #{persuasion_gnn_forward.1} parent=75 // pred_fallthru
          _
        // Predicated region
        $region81: #{persuasion_gnn_forward.1} parent=75 // pred_check
          %p533 = pneg %p113
        $region82: #{persuasion_gnn_forward.1} parent=75 // pred_check_branch
          %535 = sbr.rel (%p533) target = $region84
        $region83: #{persuasion_gnn_forward.1} parent=75 // pred_region
          %p536 = scmp.eq.s32.totalorder %s33, 3
          %s537 = scalar_select %p536, %s34, 0
          %s538 = smul.u32 16, %s537
          %p539 = scmp.lt.s32.totalorder %s538, 31
          %s540 = scalar_select %p539, %s538, 31
          %s541 = smul.addr %s540, 2
          %s542 = smul.addr %s541, 4
          %s543 = scalar_lea.vmem %s2, %s542
          %p544 = scmp.eq.s32.totalorder %s33, 3
          %s545 = scalar_select %p544, %s34, 0
          %s546 = smul.u32 16, %s545
        $region84: #{persuasion_gnn_forward.1} parent=75 // pred_fallthru
          _
      $region76: #{persuasion_gnn_forward.1} parent=5 // pred_fallthru
        _
      %p547 = scmp.le.s32.totalorder 1, %s26
      %p548 = scmp.lt.s32.totalorder %s26, 9
      %p549 = pnand %p547, %p548
      %p550 = pneg %p549
      // Predicated region
      $region85: #{persuasion_gnn_forward.1} parent=5 // pred_check
        _
      $region86: #{persuasion_gnn_forward.1} parent=5 // pred_check_branch
        %552 = sbr.rel (%p549) target = $region88
      $region87: #{persuasion_gnn_forward.1} parent=5 // pred_region
        %s553 = ssub.s32 %s26, 1
        %p554 = pneg %p59
        %p555 = pneg %p56
        %p556 = scmp.le.s32.totalorder %s35, 2
        %s557 = scalar_select %p556, %s36, 0
        %s558 = smul.u32 16, %s557
        %p559 = scmp.lt.s32.totalorder %s558, 31
        %s560 = scalar_select %p559, %s558, 31
        %s561 = smul.addr %s560, 2
        %s562 = smul.addr %s561, 4
        %s563 = scalar_lea.vmem %s1, %s562
        %p564 = pneg %p89
        %p565 = pneg %p86
        %p566 = scmp.eq.s32.totalorder %s35, 3
        %s567 = scalar_select %p566, %s36, 0
        %s568 = smul.u32 16, %s567
        %p569 = scmp.lt.s32.totalorder %s568, 31
        %s570 = scalar_select %p569, %s568, 31
        %s571 = smul.addr %s570, 2
        %s572 = smul.addr %s571, 4
        %s573 = scalar_lea.vmem %s2, %s572
        %p574 = pneg %p119
        %p575 = pneg %p116
        %p576 = pneg %p140
        %p577 = pneg %p137
        %p578 = pneg %p161
        %p579 = pneg %p158
        %p580 = pneg %p182
        %p581 = pneg %p179
        %p582 = pneg %p203
        %p583 = pneg %p200
        %p584 = pneg %p224
        %p585 = pneg %p221
        %p586 = pneg %p245
        %p587 = pneg %p242
        %p588 = pneg %p266
        %p589 = pneg %p263
        %p590 = pneg %p287
        %p591 = pneg %p284
        %p592 = pneg %p308
        %p593 = pneg %p305
        %p594 = pneg %p329
        %p595 = pneg %p326
        %p596 = pneg %p350
        %p597 = pneg %p347
        %p598 = pneg %p371
        %p599 = pneg %p368
        %p600 = pneg %p392
        %p601 = pneg %p389
        %p602 = pneg %p413
        %p603 = pneg %p410
        %p604 = pneg %p434
        %p605 = pneg %p431
        %p606 = pneg %p455
        %p607 = pneg %p452
        %p608 = scmp.le.s32.totalorder %s35, 2
        %s609 = scalar_select %p608, %s36, 0
        %s610 = smul.u32 16, %s609
        %p611 = scmp.lt.s32.totalorder %s610, 31
        %s612 = scalar_select %p611, %s610, 31
        %s613 = smul.addr %s612, 2
        %s614 = smul.addr %s613, 4
        %s615 = scalar_lea.vmem %s1, %s614
        %p616 = scmp.le.s32.totalorder %s35, 2
        %s617 = scalar_select %p616, %s36, 0
        %s618 = smul.u32 16, %s617
        %p619 = scmp.eq.s32.totalorder %s35, 3
        %s620 = scalar_select %p619, %s36, 0
        %s621 = smul.u32 16, %s620
        %p622 = scmp.lt.s32.totalorder %s621, 31
        %s623 = scalar_select %p622, %s621, 31
        %s624 = smul.addr %s623, 2
        %s625 = smul.addr %s624, 4
        %s626 = scalar_lea.vmem %s2, %s625
        %p627 = scmp.eq.s32.totalorder %s35, 3
        %s628 = scalar_select %p627, %s36, 0
        %s629 = smul.u32 16, %s628
        %s631 = smul.u32 %s36, 128
        %p632 = scmp.eq.s32.totalorder %s35, 0
        // Predicated region
        $region89: #{persuasion_gnn_forward.1} parent=87 // pred_check
          %p633 = pneg %p632
        $region90: #{persuasion_gnn_forward.1} parent=87 // pred_check_branch
          %635 = sbr.rel (%p633) target = $region92
        $region91: #{persuasion_gnn_forward.1} parent=87 // pred_region
          %v636 = vld [vmem:[%s0] sm:$0xff]
          %v637 = vld [vmem:[%s0 + $0x8] sm:$0xff]
          %v638 = vld [vmem:[%s0 + $0x10] sm:$0xff]
          %v639 = vld [vmem:[%s0 + $0x18] sm:$0xff]
          %v640 = vld [vmem:[%s0 + $0x20] sm:$0xff]
          %v641 = vld [vmem:[%s0 + $0x28] sm:$0xff]
          %v642 = vld [vmem:[%s0 + $0x30] sm:$0xff]
          %v643 = vld [vmem:[%s0 + $0x38] sm:$0xff]
          %v644 = vld [vmem:[%s0 + $0x40] sm:$0xff]
          %v645 = vld [vmem:[%s0 + $0x48] sm:$0xff]
          %v646 = vld [vmem:[%s0 + $0x50] sm:$0xff]
          %v647 = vld [vmem:[%s0 + $0x58] sm:$0xff]
          %v648 = vld [vmem:[%s0 + $0x60] sm:$0xff]
          %v649 = vld [vmem:[%s0 + $0x68] sm:$0xff]
          %v650 = vld [vmem:[%s0 + $0x70] sm:$0xff]
          %v651 = vld [vmem:[%s0 + $0x78] sm:$0xff]
          %v652 = vld [vmem:[%s0 + $0x80] sm:$0xff]
          %v653 = vld [vmem:[%s0 + $0x88] sm:$0xff]
          %v654 = vld [vmem:[%s0 + $0x90] sm:$0xff]
          %v655 = vld [vmem:[%s0 + $0x98] sm:$0xff]
          %v656 = vld [vmem:[%s0 + $0xa0] sm:$0xff]
          %v657 = vld [vmem:[%s0 + $0xa8] sm:$0xff]
          %v658 = vld [vmem:[%s0 + $0xb0] sm:$0xff]
          %v659 = vld [vmem:[%s0 + $0xb8] sm:$0xff]
          %v660 = vld [vmem:[%s0 + $0xc0] sm:$0xff]
          %v661 = vld [vmem:[%s0 + $0xc8] sm:$0xff]
          %v662 = vld [vmem:[%s0 + $0xd0] sm:$0xff]
          %v663 = vld [vmem:[%s0 + $0xd8] sm:$0xff]
          %v664 = vld [vmem:[%s0 + $0xe0] sm:$0xff]
          %v665 = vld [vmem:[%s0 + $0xe8] sm:$0xff]
          %v666 = vld [vmem:[%s0 + $0xf0] sm:$0xff]
          %v667 = vld [vmem:[%s0 + $0xf8] sm:$0xff]
          %s668 = scalar_lea.vmem %s0, %s631
          %v669 = vld [vmem:[%s668] sm:$0xff]
          %v670 = vld [vmem:[%s668 + $0x8] sm:$0xff]
          %v671 = vld [vmem:[%s668 + $0x10] sm:$0xff]
          %v672 = vld [vmem:[%s668 + $0x18] sm:$0xff]
          %v673 = vld [vmem:[%s668 + $0x20] sm:$0xff]
          %v674 = vld [vmem:[%s668 + $0x28] sm:$0xff]
          %v675 = vld [vmem:[%s668 + $0x30] sm:$0xff]
          %v676 = vld [vmem:[%s668 + $0x38] sm:$0xff]
          %v677 = vld [vmem:[%s668 + $0x40] sm:$0xff]
          %v678 = vld [vmem:[%s668 + $0x48] sm:$0xff]
          %v679 = vld [vmem:[%s668 + $0x50] sm:$0xff]
          %v680 = vld [vmem:[%s668 + $0x58] sm:$0xff]
          %v681 = vld [vmem:[%s668 + $0x60] sm:$0xff]
          %v682 = vld [vmem:[%s668 + $0x68] sm:$0xff]
          %v683 = vld [vmem:[%s668 + $0x70] sm:$0xff]
          %v684 = vld [vmem:[%s668 + $0x78] sm:$0xff]
          %v685 = vld [vmem:[%s615] sm:$0xff]
          %v686 = vld [vmem:[%s615 + $0x8] sm:$0xff]
          %v687 = vld [vmem:[%s615 + $0x10] sm:$0xff]
          %v688 = vld [vmem:[%s615 + $0x18] sm:$0xff]
          %v689 = vld [vmem:[%s615 + $0x20] sm:$0xff]
          %v690 = vld [vmem:[%s615 + $0x28] sm:$0xff]
          %v691 = vld [vmem:[%s615 + $0x30] sm:$0xff]
          %v692 = vld [vmem:[%s615 + $0x38] sm:$0xff]
          %v693 = vld [vmem:[%s615 + $0x40] sm:$0xff]
          %v694 = vld [vmem:[%s615 + $0x48] sm:$0xff]
          %v695 = vld [vmem:[%s615 + $0x50] sm:$0xff]
          %v696 = vld [vmem:[%s615 + $0x58] sm:$0xff]
          %v697 = vld [vmem:[%s615 + $0x60] sm:$0xff]
          %v698 = vld [vmem:[%s615 + $0x68] sm:$0xff]
          %v699 = vld [vmem:[%s615 + $0x70] sm:$0xff]
          %v700 = vld [vmem:[%s615 + $0x78] sm:$0xff]
          %v701 = vpack.c.bf16 %v637, %v636
          %v702 = vpack.c.bf16 %v639, %v638
          %v703 = vpack.c.bf16 %v641, %v640
          %v704 = vpack.c.bf16 %v643, %v642
          %v705 = vpack.c.bf16 %v645, %v644
          %v706 = vpack.c.bf16 %v647, %v646
          %v707 = vpack.c.bf16 %v649, %v648
          %v708 = vpack.c.bf16 %v651, %v650
          %v709 = vpack.c.bf16 %v653, %v652
          %v710 = vpack.c.bf16 %v655, %v654
          %v711 = vpack.c.bf16 %v657, %v656
          %v712 = vpack.c.bf16 %v659, %v658
          %v713 = vpack.c.bf16 %v661, %v660
          %v714 = vpack.c.bf16 %v663, %v662
          %v715 = vpack.c.bf16 %v665, %v664
          %v716 = vpack.c.bf16 %v667, %v666
          %v733 = vunpack.c.l.b16 %v685
          %v734 = vunpack.c.h.b16 %v685
          %v735 = vunpack.c.l.b16 %v686
          %v736 = vunpack.c.h.b16 %v686
          %v737 = vunpack.c.l.b16 %v687
          %v738 = vunpack.c.h.b16 %v687
          %v739 = vunpack.c.l.b16 %v688
          %v740 = vunpack.c.h.b16 %v688
          %v741 = vunpack.c.l.b16 %v689
          %v742 = vunpack.c.h.b16 %v689
          %v743 = vunpack.c.l.b16 %v690
          %v744 = vunpack.c.h.b16 %v690
          %v745 = vunpack.c.l.b16 %v691
          %v746 = vunpack.c.h.b16 %v691
          %v747 = vunpack.c.l.b16 %v692
          %v748 = vunpack.c.h.b16 %v692
          %v749 = vunpack.c.l.b16 %v693
          %v750 = vunpack.c.h.b16 %v693
          %v751 = vunpack.c.l.b16 %v694
          %v752 = vunpack.c.h.b16 %v694
          %v753 = vunpack.c.l.b16 %v695
          %v754 = vunpack.c.h.b16 %v695
          %v755 = vunpack.c.l.b16 %v696
          %v756 = vunpack.c.h.b16 %v696
          %v757 = vunpack.c.l.b16 %v697
          %v758 = vunpack.c.h.b16 %v697
          %v759 = vunpack.c.l.b16 %v698
          %v760 = vunpack.c.h.b16 %v698
          %v761 = vunpack.c.l.b16 %v699
          %v762 = vunpack.c.h.b16 %v699
          %v763 = vunpack.c.l.b16 %v700
          %v764 = vunpack.c.h.b16 %v700
          %v765 = vpack.c.b16 %v735, %v733
          %v766 = vpack.c.b16 %v736, %v734
          %v767 = vpack.c.b16 %v739, %v737
          %v768 = vpack.c.b16 %v740, %v738
          %v769 = vpack.c.b16 %v743, %v741
          %v770 = vpack.c.b16 %v744, %v742
          %v771 = vpack.c.b16 %v747, %v745
          %v772 = vpack.c.b16 %v748, %v746
          %v773 = vpack.c.b16 %v751, %v749
          %v774 = vpack.c.b16 %v752, %v750
          %v775 = vpack.c.b16 %v755, %v753
          %v776 = vpack.c.b16 %v756, %v754
          %v777 = vpack.c.b16 %v759, %v757
          %v778 = vpack.c.b16 %v760, %v758
          %v779 = vpack.c.b16 %v763, %v761
          %v780 = vpack.c.b16 %v764, %v762
          %797 = vmatprep.subr.bf16.mxu0 0
          %798 = vmatpush1.bf16.msra.mxu0 %v701
          %799 = vmatprep.subr.bf16.mxu0 0
          %800 = vmatpush1.bf16.msra.mxu0 %v702
          %801 = vmatprep.subr.bf16.mxu0 0
          %802 = vmatpush1.bf16.msra.mxu0 %v703
          %803 = vmatprep.subr.bf16.mxu0 0
          %804 = vmatpush1.bf16.msra.mxu0 %v704
          %805 = vmatprep.subr.bf16.mxu0 0
          %806 = vmatpush1.bf16.msra.mxu0 %v705
          %807 = vmatprep.subr.bf16.mxu0 0
          %808 = vmatpush1.bf16.msra.mxu0 %v706
          %809 = vmatprep.subr.bf16.mxu0 0
          %810 = vmatpush1.bf16.msra.mxu0 %v707
          %811 = vmatprep.subr.bf16.mxu0 0
          %812 = vmatpush1.bf16.msra.mxu0 %v708
          %813 = vmatprep.subr.bf16.mxu0 0
          %814 = vmatpush1.bf16.msra.mxu0 %v709
          %815 = vmatprep.subr.bf16.mxu0 0
          %816 = vmatpush1.bf16.msra.mxu0 %v710
          %817 = vmatprep.subr.bf16.mxu0 0
          %818 = vmatpush1.bf16.msra.mxu0 %v711
          %819 = vmatprep.subr.bf16.mxu0 0
          %820 = vmatpush1.bf16.msra.mxu0 %v712
          %821 = vmatprep.subr.bf16.mxu0 0
          %822 = vmatpush1.bf16.msra.mxu0 %v713
          %823 = vmatprep.subr.bf16.mxu0 0
          %824 = vmatpush1.bf16.msra.mxu0 %v714
          %825 = vmatprep.subr.bf16.mxu0 0
          %826 = vmatpush1.bf16.msra.mxu0 %v715
          %827 = vmatprep.subr.bf16.mxu0 0
          %828 = vmatpush1.bf16.msra.mxu0 %v716
          %829 = vmatprep.mubr.bf16.mxu0 %v766
          %830 = vmatmul.mubr.bf16.gmra.mrb[0].mxu0 %v765
          %v831 = vpop.f32.mrb[0].mxu0
          %v832 = vadd.f32 0.0, %v831
          %v833 = vpop.f32.mrb[0].mxu0
          %v834 = vpop.f32.mrb[0].mxu0
          %v835 = vadd.f32 0.0, %v834
          %v836 = vpop.f32.mrb[0].mxu0
          %837 = vmatprep.mubr.bf16.mxu0 %v768
          %838 = vmatmul.mubr.bf16.gmra.mrb[0].mxu0 %v767
          %v839 = vpop.f32.mrb[0].mxu0
          %v840 = vadd.f32 0.0, %v839
          %v841 = vpop.f32.mrb[0].mxu0
          %v842 = vpop.f32.mrb[0].mxu0
          %v843 = vadd.f32 0.0, %v842
          %v844 = vpop.f32.mrb[0].mxu0
          %845 = vmatprep.mubr.bf16.mxu0 %v770
          %846 = vmatmul.mubr.bf16.gmra.mrb[0].mxu0 %v769
          %v847 = vpop.f32.mrb[0].mxu0
          %v848 = vadd.f32 0.0, %v847
          %v849 = vpop.f32.mrb[0].mxu0
          %v850 = vpop.f32.mrb[0].mxu0
          %v851 = vadd.f32 0.0, %v850
          %v852 = vpop.f32.mrb[0].mxu0
          %853 = vmatprep.mubr.bf16.mxu0 %v772
          %854 = vmatmul.mubr.bf16.gmra.mrb[0].mxu0 %v771
          %v855 = vpop.f32.mrb[0].mxu0
          %v856 = vadd.f32 0.0, %v855
          %v857 = vpop.f32.mrb[0].mxu0
          %v858 = vpop.f32.mrb[0].mxu0
          %v859 = vadd.f32 0.0, %v858
          %v860 = vpop.f32.mrb[0].mxu0
          %861 = vmatprep.mubr.bf16.mxu0 %v774
          %862 = vmatmul.mubr.bf16.gmra.mrb[0].mxu0 %v773
          %v863 = vpop.f32.mrb[0].mxu0
          %v864 = vadd.f32 0.0, %v863
          %v865 = vpop.f32.mrb[0].mxu0
          %v866 = vpop.f32.mrb[0].mxu0
          %v867 = vadd.f32 0.0, %v866
          %v868 = vpop.f32.mrb[0].mxu0
          %869 = vmatprep.mubr.bf16.mxu0 %v776
          %870 = vmatmul.mubr.bf16.gmra.mrb[0].mxu0 %v775
          %v871 = vpop.f32.mrb[0].mxu0
          %v872 = vadd.f32 0.0, %v871
          %v873 = vpop.f32.mrb[0].mxu0
          %v874 = vpop.f32.mrb[0].mxu0
          %v875 = vadd.f32 0.0, %v874
          %v876 = vpop.f32.mrb[0].mxu0
          %877 = vmatprep.mubr.bf16.mxu0 %v778
          %878 = vmatmul.mubr.bf16.gmra.mrb[0].mxu0 %v777
          %v879 = vpop.f32.mrb[0].mxu0
          %v880 = vadd.f32 0.0, %v879
          %v881 = vpop.f32.mrb[0].mxu0
          %v882 = vpop.f32.mrb[0].mxu0
          %v883 = vadd.f32 0.0, %v882
          %v884 = vpop.f32.mrb[0].mxu0
          %885 = vmatprep.mubr.bf16.mxu0 %v780
          %886 = vmatmul.mubr.bf16.gmra.mrb[0].mxu0 %v779
          %v887 = vpop.f32.mrb[0].mxu0
          %v888 = vadd.f32 0.0, %v887
          %v889 = vpop.f32.mrb[0].mxu0
          %v890 = vpop.f32.mrb[0].mxu0
          %v891 = vadd.f32 0.0, %v890
          %v892 = vpop.f32.mrb[0].mxu0
          %893 = vdwg.mxu0
          %910 = vrot.lane.b32.xlu0 %v669, 64
          %v911 = vpop.permute.xlu0 %910
          %912 = vrot.lane.b32.xlu0 %v670, 64
          %v913 = vpop.permute.xlu0 %912
          %914 = vrot.lane.b32.xlu0 %v671, 64
          %v915 = vpop.permute.xlu0 %914
          %916 = vrot.lane.b32.xlu0 %v672, 64
          %v917 = vpop.permute.xlu0 %916
          %918 = vrot.lane.b32.xlu0 %v673, 64
          %v919 = vpop.permute.xlu0 %918
          %920 = vrot.lane.b32.xlu0 %v674, 64
          %v921 = vpop.permute.xlu0 %920
          %922 = vrot.lane.b32.xlu0 %v675, 64
          %v923 = vpop.permute.xlu0 %922
          %924 = vrot.lane.b32.xlu0 %v676, 64
          %v925 = vpop.permute.xlu0 %924
          %926 = vrot.lane.b32.xlu0 %v677, 64
          %v927 = vpop.permute.xlu0 %926
          %928 = vrot.lane.b32.xlu0 %v678, 64
          %v929 = vpop.permute.xlu0 %928
          %930 = vrot.lane.b32.xlu0 %v679, 64
          %v931 = vpop.permute.xlu0 %930
          %932 = vrot.lane.b32.xlu0 %v680, 64
          %v933 = vpop.permute.xlu0 %932
          %934 = vrot.lane.b32.xlu0 %v681, 64
          %v935 = vpop.permute.xlu0 %934
          %936 = vrot.lane.b32.xlu0 %v682, 64
          %v937 = vpop.permute.xlu0 %936
          %938 = vrot.lane.b32.xlu0 %v683, 64
          %v939 = vpop.permute.xlu0 %938
          %940 = vrot.lane.b32.xlu0 %v684, 64
          %v941 = vpop.permute.xlu0 %940
          %vm958 = vcmask 523264
          %v959 = vsel %vm958, %v832, %v911
          %v960 = vsel %vm958, %v835, %v913
          %v961 = vsel %vm958, %v840, %v915
          %v962 = vsel %vm958, %v843, %v917
          %v963 = vsel %vm958, %v848, %v919
          %v964 = vsel %vm958, %v851, %v921
          %v965 = vsel %vm958, %v856, %v923
          %v966 = vsel %vm958, %v859, %v925
          %v967 = vsel %vm958, %v864, %v927
          %v968 = vsel %vm958, %v867, %v929
          %v969 = vsel %vm958, %v872, %v931
          %v970 = vsel %vm958, %v875, %v933
          %v971 = vsel %vm958, %v880, %v935
          %v972 = vsel %vm958, %v883, %v937
          %v973 = vsel %vm958, %v888, %v939
          %v974 = vsel %vm958, %v891, %v941
          %v975 = vld [vmem:[%s4] sm:$0xff]
          %v976 = vld [vmem:[%s4 + $0x8] sm:$0xff]
          %v977 = vld [vmem:[%s4 + $0x10] sm:$0xff]
          %v978 = vld [vmem:[%s4 + $0x18] sm:$0xff]
          %v979 = vld [vmem:[%s4 + $0x20] sm:$0xff]
          %v980 = vld [vmem:[%s4 + $0x28] sm:$0xff]
          %v981 = vld [vmem:[%s4 + $0x30] sm:$0xff]
          %v982 = vld [vmem:[%s4 + $0x38] sm:$0xff]
          %v983 = vld [vmem:[%s4 + $0x40] sm:$0xff]
          %v984 = vld [vmem:[%s4 + $0x48] sm:$0xff]
          %v985 = vld [vmem:[%s4 + $0x50] sm:$0xff]
          %v986 = vld [vmem:[%s4 + $0x58] sm:$0xff]
          %v987 = vld [vmem:[%s4 + $0x60] sm:$0xff]
          %v988 = vld [vmem:[%s4 + $0x68] sm:$0xff]
          %v989 = vld [vmem:[%s4 + $0x70] sm:$0xff]
          %v990 = vld [vmem:[%s4 + $0x78] sm:$0xff]
          %v991 = vld [vmem:[%s5] sm:$0x1]
          %v993 = vlaneseq
          %v994 = vshrl.u32 %v993, 7
          %v995 = vsub.s32 0, %v994
          %v996 = vrot.slane %v991, %v995
          %998 = vmatprep.subr.mxu0 0.0
          %999 = vmatpush1.msra.mxu0 %v975
          %1000 = vmatprep.subr.mxu0 0.0
          %1001 = vmatpush1.msra.mxu0 %v976
          %1002 = vmatprep.subr.mxu0 0.0
          %1003 = vmatpush1.msra.mxu0 %v977
          %1004 = vmatprep.subr.mxu0 0.0
          %1005 = vmatpush1.msra.mxu0 %v978
          %1006 = vmatprep.subr.mxu0 0.0
          %1007 = vmatpush1.msra.mxu0 %v979
          %1008 = vmatprep.subr.mxu0 0.0
          %1009 = vmatpush1.msra.mxu0 %v980
          %1010 = vmatprep.subr.mxu0 0.0
          %1011 = vmatpush1.msra.mxu0 %v981
          %1012 = vmatprep.subr.mxu0 0.0
          %1013 = vmatpush1.msra.mxu0 %v982
          %1014 = vmatprep.subr.mxu0 0.0
          %1015 = vmatpush1.msra.mxu0 %v983
          %1016 = vmatprep.subr.mxu0 0.0
          %1017 = vmatpush1.msra.mxu0 %v984
          %1018 = vmatprep.subr.mxu0 0.0
          %1019 = vmatpush1.msra.mxu0 %v985
          %1020 = vmatprep.subr.mxu0 0.0
          %1021 = vmatpush1.msra.mxu0 %v986
          %1022 = vmatprep.subr.mxu0 0.0
          %1023 = vmatpush1.msra.mxu0 %v987
          %1024 = vmatprep.subr.mxu0 0.0
          %1025 = vmatpush1.msra.mxu0 %v988
          %1026 = vmatprep.subr.mxu0 0.0
          %1027 = vmatpush1.msra.mxu0 %v989
          %1028 = vmatprep.subr.mxu0 0.0
          %1029 = vmatpush1.msra.mxu0 %v990
          %1030 = vmatprep.subr.mxu0 0.0
          %1031 = vmatpush1.msra.mxu0 0.0
          %1032 = vmatprep.subr.mxu0 0.0
          %1033 = vmatpush1.msra.mxu0 0.0
          %1034 = vmatprep.subr.mxu0 0.0
          %1035 = vmatpush1.msra.mxu0 0.0
          %1036 = vmatprep.subr.mxu0 0.0
          %1037 = vmatpush1.msra.mxu0 0.0
          %1038 = vmatprep.subr.mxu0 0.0
          %1039 = vmatpush1.msra.mxu0 0.0
          %1040 = vmatprep.subr.mxu0 0.0
          %1041 = vmatpush1.msra.mxu0 0.0
          %1042 = vmatprep.subr.mxu0 0.0
          %1043 = vmatpush1.msra.mxu0 0.0
          %1044 = vmatprep.subr.mxu0 0.0
          %1045 = vmatpush1.msra.mxu0 0.0
          %1046 = vmatprep.subr.mxu0 0.0
          %1047 = vmatpush1.msra.mxu0 0.0
          %1048 = vmatprep.subr.mxu0 0.0
          %1049 = vmatpush1.msra.mxu0 0.0
          %1050 = vmatprep.subr.mxu0 0.0
          %1051 = vmatpush1.msra.mxu0 0.0
          %1052 = vmatprep.subr.mxu0 0.0
          %1053 = vmatpush1.msra.mxu0 0.0
          %1054 = vmatprep.subr.mxu0 0.0
          %1055 = vmatpush1.msra.mxu0 0.0
          %1056 = vmatprep.subr.mxu0 0.0
          %1057 = vmatpush1.msra.mxu0 0.0
          %1058 = vmatprep.subr.mxu0 0.0
          %1059 = vmatpush1.msra.mxu0 0.0
          %1060 = vmatprep.subr.mxu0 0.0
          %1061 = vmatpush1.msra.mxu0 0.0
          %1062 = vmatprep.mubr.f32.mxu0 0.0
          %1063 = vmatmul.mubr.f32.gmra.mrb[0].mxu0 %v959
          %v1064 = vpop.f32.mrb[0].mxu0
          %v1065 = vadd.f32 %v996, %v1064
          %v1066 = vpop.f32.mrb[0].mxu0
          %1067 = vmatprep.mubr.f32.mxu0 0.0
          %1068 = vmatmul.mubr.f32.gmra.mrb[0].mxu0 %v960
          %v1069 = vpop.f32.mrb[0].mxu0
          %v1070 = vadd.f32 %v996, %v1069
          %v1071 = vpop.f32.mrb[0].mxu0
          %1072 = vmatprep.mubr.f32.mxu0 0.0
          %1073 = vmatmul.mubr.f32.gmra.mrb[0].mxu0 %v961
          %v1074 = vpop.f32.mrb[0].mxu0
          %v1075 = vadd.f32 %v996, %v1074
          %v1076 = vpop.f32.mrb[0].mxu0
          %1077 = vmatprep.mubr.f32.mxu0 0.0
          %1078 = vmatmul.mubr.f32.gmra.mrb[0].mxu0 %v962
          %v1079 = vpop.f32.mrb[0].mxu0
          %v1080 = vadd.f32 %v996, %v1079
          %v1081 = vpop.f32.mrb[0].mxu0
          %1082 = vmatprep.mubr.f32.mxu0 0.0
          %1083 = vmatmul.mubr.f32.gmra.mrb[0].mxu0 %v963
          %v1084 = vpop.f32.mrb[0].mxu0
          %v1085 = vadd.f32 %v996, %v1084
          %v1086 = vpop.f32.mrb[0].mxu0
          %1087 = vmatprep.mubr.f32.mxu0 0.0
          %1088 = vmatmul.mubr.f32.gmra.mrb[0].mxu0 %v964
          %v1089 = vpop.f32.mrb[0].mxu0
          %v1090 = vadd.f32 %v996, %v1089
          %v1091 = vpop.f32.mrb[0].mxu0
          %1092 = vmatprep.mubr.f32.mxu0 0.0
          %1093 = vmatmul.mubr.f32.gmra.mrb[0].mxu0 %v965
          %v1094 = vpop.f32.mrb[0].mxu0
          %v1095 = vadd.f32 %v996, %v1094
          %v1096 = vpop.f32.mrb[0].mxu0
          %1097 = vmatprep.mubr.f32.mxu0 0.0
          %1098 = vmatmul.mubr.f32.gmra.mrb[0].mxu0 %v966
          %v1099 = vpop.f32.mrb[0].mxu0
          %v1100 = vadd.f32 %v996, %v1099
          %v1101 = vpop.f32.mrb[0].mxu0
          %1102 = vmatprep.mubr.f32.mxu0 0.0
          %1103 = vmatmul.mubr.f32.gmra.mrb[0].mxu0 %v967
          %v1104 = vpop.f32.mrb[0].mxu0
          %v1105 = vadd.f32 %v996, %v1104
          %v1106 = vpop.f32.mrb[0].mxu0
          %1107 = vmatprep.mubr.f32.mxu0 0.0
          %1108 = vmatmul.mubr.f32.gmra.mrb[0].mxu0 %v968
          %v1109 = vpop.f32.mrb[0].mxu0
          %v1110 = vadd.f32 %v996, %v1109
          %v1111 = vpop.f32.mrb[0].mxu0
          %1112 = vmatprep.mubr.f32.mxu0 0.0
          %1113 = vmatmul.mubr.f32.gmra.mrb[0].mxu0 %v969
          %v1114 = vpop.f32.mrb[0].mxu0
          %v1115 = vadd.f32 %v996, %v1114
          %v1116 = vpop.f32.mrb[0].mxu0
          %1117 = vmatprep.mubr.f32.mxu0 0.0
          %1118 = vmatmul.mubr.f32.gmra.mrb[0].mxu0 %v970
          %v1119 = vpop.f32.mrb[0].mxu0
          %v1120 = vadd.f32 %v996, %v1119
          %v1121 = vpop.f32.mrb[0].mxu0
          %1122 = vmatprep.mubr.f32.mxu0 0.0
          %1123 = vmatmul.mubr.f32.gmra.mrb[0].mxu0 %v971
          %v1124 = vpop.f32.mrb[0].mxu0
          %v1125 = vadd.f32 %v996, %v1124
          %v1126 = vpop.f32.mrb[0].mxu0
          %1127 = vmatprep.mubr.f32.mxu0 0.0
          %1128 = vmatmul.mubr.f32.gmra.mrb[0].mxu0 %v972
          %v1129 = vpop.f32.mrb[0].mxu0
          %v1130 = vadd.f32 %v996, %v1129
          %v1131 = vpop.f32.mrb[0].mxu0
          %1132 = vmatprep.mubr.f32.mxu0 0.0
          %1133 = vmatmul.mubr.f32.gmra.mrb[0].mxu0 %v973
          %v1134 = vpop.f32.mrb[0].mxu0
          %v1135 = vadd.f32 %v996, %v1134
          %v1136 = vpop.f32.mrb[0].mxu0
          %1137 = vmatprep.mubr.f32.mxu0 0.0
          %1138 = vmatmul.mubr.f32.gmra.mrb[0].mxu0 %v974
          %v1139 = vpop.f32.mrb[0].mxu0
          %v1140 = vadd.f32 %v996, %v1139
          %v1141 = vpop.f32.mrb[0].mxu0
          %1142 = vdwg.mxu0
          %v1143 = vmax.f32 %v1065, 0.0
          %v1144 = vmax.f32 %v1070, 0.0
          %v1145 = vmax.f32 %v1075, 0.0
          %v1146 = vmax.f32 %v1080, 0.0
          %v1147 = vmax.f32 %v1085, 0.0
          %v1148 = vmax.f32 %v1090, 0.0
          %v1149 = vmax.f32 %v1095, 0.0
          %v1150 = vmax.f32 %v1100, 0.0
          %v1151 = vmax.f32 %v1105, 0.0
          %v1152 = vmax.f32 %v1110, 0.0
          %v1153 = vmax.f32 %v1115, 0.0
          %v1154 = vmax.f32 %v1120, 0.0
          %v1155 = vmax.f32 %v1125, 0.0
          %v1156 = vmax.f32 %v1130, 0.0
          %v1157 = vmax.f32 %v1135, 0.0
          %v1158 = vmax.f32 %v1140, 0.0
          %s1159 = scalar_lea.vmem [#allocation2], %s631
          %vm1160 = vcmask 261120
          %1161 = vst.msk [vmem:[%s1159] sm:$0xff] %vm1160, %v1143
          %1162 = vst.msk [vmem:[%s1159 + $0x8] sm:$0xff] %vm1160, %v1144
          %1163 = vst.msk [vmem:[%s1159 + $0x10] sm:$0xff] %vm1160, %v1145
          %1164 = vst.msk [vmem:[%s1159 + $0x18] sm:$0xff] %vm1160, %v1146
          %1165 = vst.msk [vmem:[%s1159 + $0x20] sm:$0xff] %vm1160, %v1147
          %1166 = vst.msk [vmem:[%s1159 + $0x28] sm:$0xff] %vm1160, %v1148
          %1167 = vst.msk [vmem:[%s1159 + $0x30] sm:$0xff] %vm1160, %v1149
          %1168 = vst.msk [vmem:[%s1159 + $0x38] sm:$0xff] %vm1160, %v1150
          %1169 = vst.msk [vmem:[%s1159 + $0x40] sm:$0xff] %vm1160, %v1151
          %1170 = vst.msk [vmem:[%s1159 + $0x48] sm:$0xff] %vm1160, %v1152
          %1171 = vst.msk [vmem:[%s1159 + $0x50] sm:$0xff] %vm1160, %v1153
          %1172 = vst.msk [vmem:[%s1159 + $0x58] sm:$0xff] %vm1160, %v1154
          %1173 = vst.msk [vmem:[%s1159 + $0x60] sm:$0xff] %vm1160, %v1155
          %1174 = vst.msk [vmem:[%s1159 + $0x68] sm:$0xff] %vm1160, %v1156
          %1175 = vst.msk [vmem:[%s1159 + $0x70] sm:$0xff] %vm1160, %v1157
          %1176 = vst.msk [vmem:[%s1159 + $0x78] sm:$0xff] %vm1160, %v1158
        $region92: #{persuasion_gnn_forward.1} parent=87 // pred_fallthru
          _
        %p1177 = scmp.eq.s32.totalorder %s35, 1
        // Predicated region
        $region93: #{persuasion_gnn_forward.1} parent=87 // pred_check
          %p1178 = pneg %p1177
        $region94: #{persuasion_gnn_forward.1} parent=87 // pred_check_branch
          %1180 = sbr.rel (%p1178) target = $region96
        $region95: #{persuasion_gnn_forward.1} parent=87 // pred_region
          %v1181 = vld [vmem:[#allocation2] sm:$0xff]
          %v1182 = vld [vmem:[#allocation2 + $0x8] sm:$0xff]
          %v1183 = vld [vmem:[#allocation2 + $0x10] sm:$0xff]
          %v1184 = vld [vmem:[#allocation2 + $0x18] sm:$0xff]
          %v1185 = vld [vmem:[#allocation2 + $0x20] sm:$0xff]
          %v1186 = vld [vmem:[#allocation2 + $0x28] sm:$0xff]
          %v1187 = vld [vmem:[#allocation2 + $0x30] sm:$0xff]
          %v1188 = vld [vmem:[#allocation2 + $0x38] sm:$0xff]
          %v1189 = vld [vmem:[#allocation2 + $0x40] sm:$0xff]
          %v1190 = vld [vmem:[#allocation2 + $0x48] sm:$0xff]
          %v1191 = vld [vmem:[#allocation2 + $0x50] sm:$0xff]
          %v1192 = vld [vmem:[#allocation2 + $0x58] sm:$0xff]
          %v1193 = vld [vmem:[#allocation2 + $0x60] sm:$0xff]
          %v1194 = vld [vmem:[#allocation2 + $0x68] sm:$0xff]
          %v1195 = vld [vmem:[#allocation2 + $0x70] sm:$0xff]
          %v1196 = vld [vmem:[#allocation2 + $0x78] sm:$0xff]
          %v1197 = vld [vmem:[#allocation2 + $0x80] sm:$0xff]
          %v1198 = vld [vmem:[#allocation2 + $0x88] sm:$0xff]
          %v1199 = vld [vmem:[#allocation2 + $0x90] sm:$0xff]
          %v1200 = vld [vmem:[#allocation2 + $0x98] sm:$0xff]
          %v1201 = vld [vmem:[#allocation2 + $0xa0] sm:$0xff]
          %v1202 = vld [vmem:[#allocation2 + $0xa8] sm:$0xff]
          %v1203 = vld [vmem:[#allocation2 + $0xb0] sm:$0xff]
          %v1204 = vld [vmem:[#allocation2 + $0xb8] sm:$0xff]
          %v1205 = vld [vmem:[#allocation2 + $0xc0] sm:$0xff]
          %v1206 = vld [vmem:[#allocation2 + $0xc8] sm:$0xff]
          %v1207 = vld [vmem:[#allocation2 + $0xd0] sm:$0xff]
          %v1208 = vld [vmem:[#allocation2 + $0xd8] sm:$0xff]
          %v1209 = vld [vmem:[#allocation2 + $0xe0] sm:$0xff]
          %v1210 = vld [vmem:[#allocation2 + $0xe8] sm:$0xff]
          %v1211 = vld [vmem:[#allocation2 + $0xf0] sm:$0xff]
          %v1212 = vld [vmem:[#allocation2 + $0xf8] sm:$0xff]
          %s1213 = scalar_lea.vmem [#allocation2], %s631
          %v1214 = vld [vmem:[%s1213] sm:$0xff]
          %v1215 = vld [vmem:[%s1213 + $0x8] sm:$0xff]
          %v1216 = vld [vmem:[%s1213 + $0x10] sm:$0xff]
          %v1217 = vld [vmem:[%s1213 + $0x18] sm:$0xff]
          %v1218 = vld [vmem:[%s1213 + $0x20] sm:$0xff]
          %v1219 = vld [vmem:[%s1213 + $0x28] sm:$0xff]
          %v1220 = vld [vmem:[%s1213 + $0x30] sm:$0xff]
          %v1221 = vld [vmem:[%s1213 + $0x38] sm:$0xff]
          %v1222 = vld [vmem:[%s1213 + $0x40] sm:$0xff]
          %v1223 = vld [vmem:[%s1213 + $0x48] sm:$0xff]
          %v1224 = vld [vmem:[%s1213 + $0x50] sm:$0xff]
          %v1225 = vld [vmem:[%s1213 + $0x58] sm:$0xff]
          %v1226 = vld [vmem:[%s1213 + $0x60] sm:$0xff]
          %v1227 = vld [vmem:[%s1213 + $0x68] sm:$0xff]
          %v1228 = vld [vmem:[%s1213 + $0x70] sm:$0xff]
          %v1229 = vld [vmem:[%s1213 + $0x78] sm:$0xff]
          %v1230 = vld [vmem:[%s615] sm:$0xff]
          %v1231 = vld [vmem:[%s615 + $0x8] sm:$0xff]
          %v1232 = vld [vmem:[%s615 + $0x10] sm:$0xff]
          %v1233 = vld [vmem:[%s615 + $0x18] sm:$0xff]
          %v1234 = vld [vmem:[%s615 + $0x20] sm:$0xff]
          %v1235 = vld [vmem:[%s615 + $0x28] sm:$0xff]
          %v1236 = vld [vmem:[%s615 + $0x30] sm:$0xff]
          %v1237 = vld [vmem:[%s615 + $0x38] sm:$0xff]
          %v1238 = vld [vmem:[%s615 + $0x40] sm:$0xff]
          %v1239 = vld [vmem:[%s615 + $0x48] sm:$0xff]
          %v1240 = vld [vmem:[%s615 + $0x50] sm:$0xff]
          %v1241 = vld [vmem:[%s615 + $0x58] sm:$0xff]
          %v1242 = vld [vmem:[%s615 + $0x60] sm:$0xff]
          %v1243 = vld [vmem:[%s615 + $0x68] sm:$0xff]
          %v1244 = vld [vmem:[%s615 + $0x70] sm:$0xff]
          %v1245 = vld [vmem:[%s615 + $0x78] sm:$0xff]
          %v1246 = vpack.c.bf16 %v1182, %v1181
          %v1247 = vpack.c.bf16 %v1184, %v1183
          %v1248 = vpack.c.bf16 %v1186, %v1185
          %v1249 = vpack.c.bf16 %v1188, %v1187
          %v1250 = vpack.c.bf16 %v1190, %v1189
          %v1251 = vpack.c.bf16 %v1192, %v1191
          %v1252 = vpack.c.bf16 %v1194, %v1193
          %v1253 = vpack.c.bf16 %v1196, %v1195
          %v1254 = vpack.c.bf16 %v1198, %v1197
          %v1255 = vpack.c.bf16 %v1200, %v1199
          %v1256 = vpack.c.bf16 %v1202, %v1201
          %v1257 = vpack.c.bf16 %v1204, %v1203
          %v1258 = vpack.c.bf16 %v1206, %v1205
          %v1259 = vpack.c.bf16 %v1208, %v1207
          %v1260 = vpack.c.bf16 %v1210, %v1209
          %v1261 = vpack.c.bf16 %v1212, %v1211
          %v1278 = vunpack.c.l.b16 %v1230
          %v1279 = vunpack.c.h.b16 %v1230
          %v1280 = vunpack.c.l.b16 %v1231
          %v1281 = vunpack.c.h.b16 %v1231
          %v1282 = vunpack.c.l.b16 %v1232
          %v1283 = vunpack.c.h.b16 %v1232
          %v1284 = vunpack.c.l.b16 %v1233
          %v1285 = vunpack.c.h.b16 %v1233
          %v1286 = vunpack.c.l.b16 %v1234
          %v1287 = vunpack.c.h.b16 %v1234
          %v1288 = vunpack.c.l.b16 %v1235
          %v1289 = vunpack.c.h.b16 %v1235
          %v1290 = vunpack.c.l.b16 %v1236
          %v1291 = vunpack.c.h.b16 %v1236
          %v1292 = vunpack.c.l.b16 %v1237
          %v1293 = vunpack.c.h.b16 %v1237
          %v1294 = vunpack.c.l.b16 %v1238
          %v1295 = vunpack.c.h.b16 %v1238
          %v1296 = vunpack.c.l.b16 %v1239
          %v1297 = vunpack.c.h.b16 %v1239
          %v1298 = vunpack.c.l.b16 %v1240
          %v1299 = vunpack.c.h.b16 %v1240
          %v1300 = vunpack.c.l.b16 %v1241
          %v1301 = vunpack.c.h.b16 %v1241
          %v1302 = vunpack.c.l.b16 %v1242
          %v1303 = vunpack.c.h.b16 %v1242
          %v1304 = vunpack.c.l.b16 %v1243
          %v1305 = vunpack.c.h.b16 %v1243
          %v1306 = vunpack.c.l.b16 %v1244
          %v1307 = vunpack.c.h.b16 %v1244
          %v1308 = vunpack.c.l.b16 %v1245
          %v1309 = vunpack.c.h.b16 %v1245
          %v1310 = vpack.c.b16 %v1280, %v1278
          %v1311 = vpack.c.b16 %v1281, %v1279
          %v1312 = vpack.c.b16 %v1284, %v1282
          %v1313 = vpack.c.b16 %v1285, %v1283
          %v1314 = vpack.c.b16 %v1288, %v1286
          %v1315 = vpack.c.b16 %v1289, %v1287
          %v1316 = vpack.c.b16 %v1292, %v1290
          %v1317 = vpack.c.b16 %v1293, %v1291
          %v1318 = vpack.c.b16 %v1296, %v1294
          %v1319 = vpack.c.b16 %v1297, %v1295
          %v1320 = vpack.c.b16 %v1300, %v1298
          %v1321 = vpack.c.b16 %v1301, %v1299
          %v1322 = vpack.c.b16 %v1304, %v1302
          %v1323 = vpack.c.b16 %v1305, %v1303
          %v1324 = vpack.c.b16 %v1308, %v1306
          %v1325 = vpack.c.b16 %v1309, %v1307
          %1342 = vmatprep.subr.bf16.mxu0 0
          %1343 = vmatpush1.bf16.msra.mxu0 %v1246
          %1344 = vmatprep.subr.bf16.mxu0 0
          %1345 = vmatpush1.bf16.msra.mxu0 %v1247
          %1346 = vmatprep.subr.bf16.mxu0 0
          %1347 = vmatpush1.bf16.msra.mxu0 %v1248
          %1348 = vmatprep.subr.bf16.mxu0 0
          %1349 = vmatpush1.bf16.msra.mxu0 %v1249
          %1350 = vmatprep.subr.bf16.mxu0 0
          %1351 = vmatpush1.bf16.msra.mxu0 %v1250
          %1352 = vmatprep.subr.bf16.mxu0 0
          %1353 = vmatpush1.bf16.msra.mxu0 %v1251
          %1354 = vmatprep.subr.bf16.mxu0 0
          %1355 = vmatpush1.bf16.msra.mxu0 %v1252
          %1356 = vmatprep.subr.bf16.mxu0 0
          %1357 = vmatpush1.bf16.msra.mxu0 %v1253
          %1358 = vmatprep.subr.bf16.mxu0 0
          %1359 = vmatpush1.bf16.msra.mxu0 %v1254
          %1360 = vmatprep.subr.bf16.mxu0 0
          %1361 = vmatpush1.bf16.msra.mxu0 %v1255
          %1362 = vmatprep.subr.bf16.mxu0 0
          %1363 = vmatpush1.bf16.msra.mxu0 %v1256
          %1364 = vmatprep.subr.bf16.mxu0 0
          %1365 = vmatpush1.bf16.msra.mxu0 %v1257
          %1366 = vmatprep.subr.bf16.mxu0 0
          %1367 = vmatpush1.bf16.msra.mxu0 %v1258
          %1368 = vmatprep.subr.bf16.mxu0 0
          %1369 = vmatpush1.bf16.msra.mxu0 %v1259
          %1370 = vmatprep.subr.bf16.mxu0 0
          %1371 = vmatpush1.bf16.msra.mxu0 %v1260
          %1372 = vmatprep.subr.bf16.mxu0 0
          %1373 = vmatpush1.bf16.msra.mxu0 %v1261
          %1374 = vmatprep.mubr.bf16.mxu0 %v1311
          %1375 = vmatmul.mubr.bf16.gmra.mrb[0].mxu0 %v1310
          %v1376 = vpop.f32.mrb[0].mxu0
          %v1377 = vadd.f32 0.0, %v1376
          %v1378 = vpop.f32.mrb[0].mxu0
          %v1379 = vpop.f32.mrb[0].mxu0
          %v1380 = vadd.f32 0.0, %v1379
          %v1381 = vpop.f32.mrb[0].mxu0
          %1382 = vmatprep.mubr.bf16.mxu0 %v1313
          %1383 = vmatmul.mubr.bf16.gmra.mrb[0].mxu0 %v1312
          %v1384 = vpop.f32.mrb[0].mxu0
          %v1385 = vadd.f32 0.0, %v1384
          %v1386 = vpop.f32.mrb[0].mxu0
          %v1387 = vpop.f32.mrb[0].mxu0
          %v1388 = vadd.f32 0.0, %v1387
          %v1389 = vpop.f32.mrb[0].mxu0
          %1390 = vmatprep.mubr.bf16.mxu0 %v1315
          %1391 = vmatmul.mubr.bf16.gmra.mrb[0].mxu0 %v1314
          %v1392 = vpop.f32.mrb[0].mxu0
          %v1393 = vadd.f32 0.0, %v1392
          %v1394 = vpop.f32.mrb[0].mxu0
          %v1395 = vpop.f32.mrb[0].mxu0
          %v1396 = vadd.f32 0.0, %v1395
          %v1397 = vpop.f32.mrb[0].mxu0
          %1398 = vmatprep.mubr.bf16.mxu0 %v1317
          %1399 = vmatmul.mubr.bf16.gmra.mrb[0].mxu0 %v1316
          %v1400 = vpop.f32.mrb[0].mxu0
          %v1401 = vadd.f32 0.0, %v1400
          %v1402 = vpop.f32.mrb[0].mxu0
          %v1403 = vpop.f32.mrb[0].mxu0
          %v1404 = vadd.f32 0.0, %v1403
          %v1405 = vpop.f32.mrb[0].mxu0
          %1406 = vmatprep.mubr.bf16.mxu0 %v1319
          %1407 = vmatmul.mubr.bf16.gmra.mrb[0].mxu0 %v1318
          %v1408 = vpop.f32.mrb[0].mxu0
          %v1409 = vadd.f32 0.0, %v1408
          %v1410 = vpop.f32.mrb[0].mxu0
          %v1411 = vpop.f32.mrb[0].mxu0
          %v1412 = vadd.f32 0.0, %v1411
          %v1413 = vpop.f32.mrb[0].mxu0
          %1414 = vmatprep.mubr.bf16.mxu0 %v1321
          %1415 = vmatmul.mubr.bf16.gmra.mrb[0].mxu0 %v1320
          %v1416 = vpop.f32.mrb[0].mxu0
          %v1417 = vadd.f32 0.0, %v1416
          %v1418 = vpop.f32.mrb[0].mxu0
          %v1419 = vpop.f32.mrb[0].mxu0
          %v1420 = vadd.f32 0.0, %v1419
          %v1421 = vpop.f32.mrb[0].mxu0
          %1422 = vmatprep.mubr.bf16.mxu0 %v1323
          %1423 = vmatmul.mubr.bf16.gmra.mrb[0].mxu0 %v1322
          %v1424 = vpop.f32.mrb[0].mxu0
          %v1425 = vadd.f32 0.0, %v1424
          %v1426 = vpop.f32.mrb[0].mxu0
          %v1427 = vpop.f32.mrb[0].mxu0
          %v1428 = vadd.f32 0.0, %v1427
          %v1429 = vpop.f32.mrb[0].mxu0
          %1430 = vmatprep.mubr.bf16.mxu0 %v1325
          %1431 = vmatmul.mubr.bf16.gmra.mrb[0].mxu0 %v1324
          %v1432 = vpop.f32.mrb[0].mxu0
          %v1433 = vadd.f32 0.0, %v1432
          %v1434 = vpop.f32.mrb[0].mxu0
          %v1435 = vpop.f32.mrb[0].mxu0
          %v1436 = vadd.f32 0.0, %v1435
          %v1437 = vpop.f32.mrb[0].mxu0
          %1438 = vdwg.mxu0
          %1455 = vrot.lane.b32.xlu0 %v1214, 32
          %v1456 = vpop.permute.xlu0 %1455
          %1457 = vrot.lane.b32.xlu0 %v1215, 32
          %v1458 = vpop.permute.xlu0 %1457
          %1459 = vrot.lane.b32.xlu0 %v1216, 32
          %v1460 = vpop.permute.xlu0 %1459
          %1461 = vrot.lane.b32.xlu0 %v1217, 32
          %v1462 = vpop.permute.xlu0 %1461
          %1463 = vrot.lane.b32.xlu0 %v1218, 32
          %v1464 = vpop.permute.xlu0 %1463
          %1465 = vrot.lane.b32.xlu0 %v1219, 32
          %v1466 = vpop.permute.xlu0 %1465
          %1467 = vrot.lane.b32.xlu0 %v1220, 32
          %v1468 = vpop.permute.xlu0 %1467
          %1469 = vrot.lane.b32.xlu0 %v1221, 32
          %v1470 = vpop.permute.xlu0 %1469
          %1471 = vrot.lane.b32.xlu0 %v1222, 32
          %v1472 = vpop.permute.xlu0 %1471
          %1473 = vrot.lane.b32.xlu0 %v1223, 32
          %v1474 = vpop.permute.xlu0 %1473
          %1475 = vrot.lane.b32.xlu0 %v1224, 32
          %v1476 = vpop.permute.xlu0 %1475
          %1477 = vrot.lane.b32.xlu0 %v1225, 32
          %v1478 = vpop.permute.xlu0 %1477
          %1479 = vrot.lane.b32.xlu0 %v1226, 32
          %v1480 = vpop.permute.xlu0 %1479
          %1481 = vrot.lane.b32.xlu0 %v1227, 32
          %v1482 = vpop.permute.xlu0 %1481
          %1483 = vrot.lane.b32.xlu0 %v1228, 32
          %v1484 = vpop.permute.xlu0 %1483
          %1485 = vrot.lane.b32.xlu0 %v1229, 32
          %v1486 = vpop.permute.xlu0 %1485
          %vm1503 = vcmask 261120
          %v1504 = vsel %vm1503, %v1377, %v1456
          %v1505 = vsel %vm1503, %v1380, %v1458
          %v1506 = vsel %vm1503, %v1385, %v1460
          %v1507 = vsel %vm1503, %v1388, %v1462
          %v1508 = vsel %vm1503, %v1393, %v1464
          %v1509 = vsel %vm1503, %v1396, %v1466
          %v1510 = vsel %vm1503, %v1401, %v1468
          %v1511 = vsel %vm1503, %v1404, %v1470
          %v1512 = vsel %vm1503, %v1409, %v1472
          %v1513 = vsel %vm1503, %v1412, %v1474
          %v1514 = vsel %vm1503, %v1417, %v1476
          %v1515 = vsel %vm1503, %v1420, %v1478
          %v1516 = vsel %vm1503, %v1425, %v1480
          %v1517 = vsel %vm1503, %v1428, %v1482
          %v1518 = vsel %vm1503, %v1433, %v1484
          %v1519 = vsel %vm1503, %v1436, %v1486
          %v1520 = vld [vmem:[%s6] sm:$0xff]
          %v1521 = vld [vmem:[%s6 + $0x8] sm:$0xff]
          %v1522 = vld [vmem:[%s6 + $0x10] sm:$0xff]
          %v1523 = vld [vmem:[%s6 + $0x18] sm:$0xff]
          %v1524 = vld [vmem:[%s6 + $0x20] sm:$0xff]
          %v1525 = vld [vmem:[%s6 + $0x28] sm:$0xff]
          %v1526 = vld [vmem:[%s6 + $0x30] sm:$0xff]
          %v1527 = vld [vmem:[%s6 + $0x38] sm:$0xff]
          %v1528 = vld [vmem:[%s7] sm:$0x1]
          %v1530 = vlaneseq
          %v1531 = vshrl.u32 %v1530, 7
          %v1532 = vsub.s32 0, %v1531
          %v1533 = vrot.slane %v1528, %v1532
          %vm1535 = vcmask 523264
          %v1537 = vsel %vm1535, %v1504, 0
          %v1540 = vsel %vm1535, %v1505, 0
          %v1543 = vsel %vm1535, %v1506, 0
          %v1546 = vsel %vm1535, %v1507, 0
          %v1549 = vsel %vm1535, %v1508, 0
          %v1552 = vsel %vm1535, %v1509, 0
          %v1555 = vsel %vm1535, %v1510, 0
          %v1558 = vsel %vm1535, %v1511, 0
          %v1561 = vsel %vm1535, %v1512, 0
          %v1564 = vsel %vm1535, %v1513, 0
          %v1567 = vsel %vm1535, %v1514, 0
          %v1570 = vsel %vm1535, %v1515, 0
          %v1573 = vsel %vm1535, %v1516, 0
          %v1576 = vsel %vm1535, %v1517, 0
          %v1579 = vsel %vm1535, %v1518, 0
          %v1582 = vsel %vm1535, %v1519, 0
          %1584 = vmatprep.subr.mxu0 0.0
          %1585 = vmatpush1.msra.mxu0 %v1520
          %1586 = vmatprep.subr.mxu0 0.0
          %1587 = vmatpush1.msra.mxu0 %v1521
          %1588 = vmatprep.subr.mxu0 0.0
          %1589 = vmatpush1.msra.mxu0 %v1522
          %1590 = vmatprep.subr.mxu0 0.0
          %1591 = vmatpush1.msra.mxu0 %v1523
          %1592 = vmatprep.subr.mxu0 0.0
          %1593 = vmatpush1.msra.mxu0 %v1524
          %1594 = vmatprep.subr.mxu0 0.0
          %1595 = vmatpush1.msra.mxu0 %v1525
          %1596 = vmatprep.subr.mxu0 0.0
          %1597 = vmatpush1.msra.mxu0 %v1526
          %1598 = vmatprep.subr.mxu0 0.0
          %1599 = vmatpush1.msra.mxu0 %v1527
          %1600 = vmatprep.subr.mxu0 0.0
          %1601 = vmatpush1.msra.mxu0 0.0
          %1602 = vmatprep.subr.mxu0 0.0
          %1603 = vmatpush1.msra.mxu0 0.0
          %1604 = vmatprep.subr.mxu0 0.0
          %1605 = vmatpush1.msra.mxu0 0.0
          %1606 = vmatprep.subr.mxu0 0.0
          %1607 = vmatpush1.msra.mxu0 0.0
          %1608 = vmatprep.subr.mxu0 0.0
          %1609 = vmatpush1.msra.mxu0 0.0
          %1610 = vmatprep.subr.mxu0 0.0
          %1611 = vmatpush1.msra.mxu0 0.0
          %1612 = vmatprep.subr.mxu0 0.0
          %1613 = vmatpush1.msra.mxu0 0.0
          %1614 = vmatprep.subr.mxu0 0.0
          %1615 = vmatpush1.msra.mxu0 0.0
          %1616 = vmatprep.subr.mxu0 0.0
          %1617 = vmatpush1.msra.mxu0 0.0
          %1618 = vmatprep.subr.mxu0 0.0
          %1619 = vmatpush1.msra.mxu0 0.0
          %1620 = vmatprep.subr.mxu0 0.0
          %1621 = vmatpush1.msra.mxu0 0.0
          %1622 = vmatprep.subr.mxu0 0.0
          %1623 = vmatpush1.msra.mxu0 0.0
          %1624 = vmatprep.subr.mxu0 0.0
          %1625 = vmatpush1.msra.mxu0 0.0
          %1626 = vmatprep.subr.mxu0 0.0
          %1627 = vmatpush1.msra.mxu0 0.0
          %1628 = vmatprep.subr.mxu0 0.0
          %1629 = vmatpush1.msra.mxu0 0.0
          %1630 = vmatprep.subr.mxu0 0.0
          %1631 = vmatpush1.msra.mxu0 0.0
          %1632 = vmatprep.subr.mxu0 0.0
          %1633 = vmatpush1.msra.mxu0 0.0
          %1634 = vmatprep.subr.mxu0 0.0
          %1635 = vmatpush1.msra.mxu0 0.0
          %1636 = vmatprep.subr.mxu0 0.0
          %1637 = vmatpush1.msra.mxu0 0.0
          %1638 = vmatprep.subr.mxu0 0.0
          %1639 = vmatpush1.msra.mxu0 0.0
          %1640 = vmatprep.subr.mxu0 0.0
          %1641 = vmatpush1.msra.mxu0 0.0
          %1642 = vmatprep.subr.mxu0 0.0
          %1643 = vmatpush1.msra.mxu0 0.0
          %1644 = vmatprep.subr.mxu0 0.0
          %1645 = vmatpush1.msra.mxu0 0.0
          %1646 = vmatprep.subr.mxu0 0.0
          %1647 = vmatpush1.msra.mxu0 0.0
          %1648 = vmatprep.mubr.f32.mxu0 0.0
          %1649 = vmatmul.mubr.f32.gmra.mrb[0].mxu0 %v1537
          %v1650 = vpop.f32.mrb[0].mxu0
          %v1651 = vadd.f32 %v1533, %v1650
          %v1652 = vpop.f32.mrb[0].mxu0
          %1653 = vmatprep.mubr.f32.mxu0 0.0
          %1654 = vmatmul.mubr.f32.gmra.mrb[0].mxu0 %v1540
          %v1655 = vpop.f32.mrb[0].mxu0
          %v1656 = vadd.f32 %v1533, %v1655
          %v1657 = vpop.f32.mrb[0].mxu0
          %1658 = vmatprep.mubr.f32.mxu0 0.0
          %1659 = vmatmul.mubr.f32.gmra.mrb[0].mxu0 %v1543
          %v1660 = vpop.f32.mrb[0].mxu0
          %v1661 = vadd.f32 %v1533, %v1660
          %v1662 = vpop.f32.mrb[0].mxu0
          %1663 = vmatprep.mubr.f32.mxu0 0.0
          %1664 = vmatmul.mubr.f32.gmra.mrb[0].mxu0 %v1546
          %v1665 = vpop.f32.mrb[0].mxu0
          %v1666 = vadd.f32 %v1533, %v1665
          %v1667 = vpop.f32.mrb[0].mxu0
          %1668 = vmatprep.mubr.f32.mxu0 0.0
          %1669 = vmatmul.mubr.f32.gmra.mrb[0].mxu0 %v1549
          %v1670 = vpop.f32.mrb[0].mxu0
          %v1671 = vadd.f32 %v1533, %v1670
          %v1672 = vpop.f32.mrb[0].mxu0
          %1673 = vmatprep.mubr.f32.mxu0 0.0
          %1674 = vmatmul.mubr.f32.gmra.mrb[0].mxu0 %v1552
          %v1675 = vpop.f32.mrb[0].mxu0
          %v1676 = vadd.f32 %v1533, %v1675
          %v1677 = vpop.f32.mrb[0].mxu0
          %1678 = vmatprep.mubr.f32.mxu0 0.0
          %1679 = vmatmul.mubr.f32.gmra.mrb[0].mxu0 %v1555
          %v1680 = vpop.f32.mrb[0].mxu0
          %v1681 = vadd.f32 %v1533, %v1680
          %v1682 = vpop.f32.mrb[0].mxu0
          %1683 = vmatprep.mubr.f32.mxu0 0.0
          %1684 = vmatmul.mubr.f32.gmra.mrb[0].mxu0 %v1558
          %v1685 = vpop.f32.mrb[0].mxu0
          %v1686 = vadd.f32 %v1533, %v1685
          %v1687 = vpop.f32.mrb[0].mxu0
          %1688 = vmatprep.mubr.f32.mxu0 0.0
          %1689 = vmatmul.mubr.f32.gmra.mrb[0].mxu0 %v1561
          %v1690 = vpop.f32.mrb[0].mxu0
          %v1691 = vadd.f32 %v1533, %v1690
          %v1692 = vpop.f32.mrb[0].mxu0
          %1693 = vmatprep.mubr.f32.mxu0 0.0
          %1694 = vmatmul.mubr.f32.gmra.mrb[0].mxu0 %v1564
          %v1695 = vpop.f32.mrb[0].mxu0
          %v1696 = vadd.f32 %v1533, %v1695
          %v1697 = vpop.f32.mrb[0].mxu0
          %1698 = vmatprep.mubr.f32.mxu0 0.0
          %1699 = vmatmul.mubr.f32.gmra.mrb[0].mxu0 %v1567
          %v1700 = vpop.f32.mrb[0].mxu0
          %v1701 = vadd.f32 %v1533, %v1700
          %v1702 = vpop.f32.mrb[0].mxu0
          %1703 = vmatprep.mubr.f32.mxu0 0.0
          %1704 = vmatmul.mubr.f32.gmra.mrb[0].mxu0 %v1570
          %v1705 = vpop.f32.mrb[0].mxu0
          %v1706 = vadd.f32 %v1533, %v1705
          %v1707 = vpop.f32.mrb[0].mxu0
          %1708 = vmatprep.mubr.f32.mxu0 0.0
          %1709 = vmatmul.mubr.f32.gmra.mrb[0].mxu0 %v1573
          %v1710 = vpop.f32.mrb[0].mxu0
          %v1711 = vadd.f32 %v1533, %v1710
          %v1712 = vpop.f32.mrb[0].mxu0
          %1713 = vmatprep.mubr.f32.mxu0 0.0
          %1714 = vmatmul.mubr.f32.gmra.mrb[0].mxu0 %v1576
          %v1715 = vpop.f32.mrb[0].mxu0
          %v1716 = vadd.f32 %v1533, %v1715
          %v1717 = vpop.f32.mrb[0].mxu0
          %1718 = vmatprep.mubr.f32.mxu0 0.0
          %1719 = vmatmul.mubr.f32.gmra.mrb[0].mxu0 %v1579
          %v1720 = vpop.f32.mrb[0].mxu0
          %v1721 = vadd.f32 %v1533, %v1720
          %v1722 = vpop.f32.mrb[0].mxu0
          %1723 = vmatprep.mubr.f32.mxu0 0.0
          %1724 = vmatmul.mubr.f32.gmra.mrb[0].mxu0 %v1582
          %v1725 = vpop.f32.mrb[0].mxu0
          %v1726 = vadd.f32 %v1533, %v1725
          %v1727 = vpop.f32.mrb[0].mxu0
          %1728 = vdwg.mxu0
          %v1729 = vmax.f32 %v1651, 0.0
          %v1730 = vmax.f32 %v1656, 0.0
          %v1731 = vmax.f32 %v1661, 0.0
          %v1732 = vmax.f32 %v1666, 0.0
          %v1733 = vmax.f32 %v1671, 0.0
          %v1734 = vmax.f32 %v1676, 0.0
          %v1735 = vmax.f32 %v1681, 0.0
          %v1736 = vmax.f32 %v1686, 0.0
          %v1737 = vmax.f32 %v1691, 0.0
          %v1738 = vmax.f32 %v1696, 0.0
          %v1739 = vmax.f32 %v1701, 0.0
          %v1740 = vmax.f32 %v1706, 0.0
          %v1741 = vmax.f32 %v1711, 0.0
          %v1742 = vmax.f32 %v1716, 0.0
          %v1743 = vmax.f32 %v1721, 0.0
          %v1744 = vmax.f32 %v1726, 0.0
          %s1745 = scalar_lea.vmem [#allocation3], %s631
          %1746 = vst.msk [vmem:[%s1745] sm:$0xff] %vm1503, %v1729
          %1747 = vst.msk [vmem:[%s1745 + $0x8] sm:$0xff] %vm1503, %v1730
          %1748 = vst.msk [vmem:[%s1745 + $0x10] sm:$0xff] %vm1503, %v1731
          %1749 = vst.msk [vmem:[%s1745 + $0x18] sm:$0xff] %vm1503, %v1732
          %1750 = vst.msk [vmem:[%s1745 + $0x20] sm:$0xff] %vm1503, %v1733
          %1751 = vst.msk [vmem:[%s1745 + $0x28] sm:$0xff] %vm1503, %v1734
          %1752 = vst.msk [vmem:[%s1745 + $0x30] sm:$0xff] %vm1503, %v1735
          %1753 = vst.msk [vmem:[%s1745 + $0x38] sm:$0xff] %vm1503, %v1736
          %1754 = vst.msk [vmem:[%s1745 + $0x40] sm:$0xff] %vm1503, %v1737
          %1755 = vst.msk [vmem:[%s1745 + $0x48] sm:$0xff] %vm1503, %v1738
          %1756 = vst.msk [vmem:[%s1745 + $0x50] sm:$0xff] %vm1503, %v1739
          %1757 = vst.msk [vmem:[%s1745 + $0x58] sm:$0xff] %vm1503, %v1740
          %1758 = vst.msk [vmem:[%s1745 + $0x60] sm:$0xff] %vm1503, %v1741
          %1759 = vst.msk [vmem:[%s1745 + $0x68] sm:$0xff] %vm1503, %v1742
          %1760 = vst.msk [vmem:[%s1745 + $0x70] sm:$0xff] %vm1503, %v1743
          %1761 = vst.msk [vmem:[%s1745 + $0x78] sm:$0xff] %vm1503, %v1744
        $region96: #{persuasion_gnn_forward.1} parent=87 // pred_fallthru
          _
        %p1762 = scmp.eq.s32.totalorder %s35, 2
        // Predicated region
        $region97: #{persuasion_gnn_forward.1} parent=87 // pred_check
          %p1763 = pneg %p1762
        $region98: #{persuasion_gnn_forward.1} parent=87 // pred_check_branch
          %1765 = sbr.rel (%p1763) target = $region100
        $region99: #{persuasion_gnn_forward.1} parent=87 // pred_region
          %v1766 = vld [vmem:[#allocation3] sm:$0xff]
          %v1767 = vld [vmem:[#allocation3 + $0x8] sm:$0xff]
          %v1768 = vld [vmem:[#allocation3 + $0x10] sm:$0xff]
          %v1769 = vld [vmem:[#allocation3 + $0x18] sm:$0xff]
          %v1770 = vld [vmem:[#allocation3 + $0x20] sm:$0xff]
          %v1771 = vld [vmem:[#allocation3 + $0x28] sm:$0xff]
          %v1772 = vld [vmem:[#allocation3 + $0x30] sm:$0xff]
          %v1773 = vld [vmem:[#allocation3 + $0x38] sm:$0xff]
          %v1774 = vld [vmem:[#allocation3 + $0x40] sm:$0xff]
          %v1775 = vld [vmem:[#allocation3 + $0x48] sm:$0xff]
          %v1776 = vld [vmem:[#allocation3 + $0x50] sm:$0xff]
          %v1777 = vld [vmem:[#allocation3 + $0x58] sm:$0xff]
          %v1778 = vld [vmem:[#allocation3 + $0x60] sm:$0xff]
          %v1779 = vld [vmem:[#allocation3 + $0x68] sm:$0xff]
          %v1780 = vld [vmem:[#allocation3 + $0x70] sm:$0xff]
          %v1781 = vld [vmem:[#allocation3 + $0x78] sm:$0xff]
          %v1782 = vld [vmem:[#allocation3 + $0x80] sm:$0xff]
          %v1783 = vld [vmem:[#allocation3 + $0x88] sm:$0xff]
          %v1784 = vld [vmem:[#allocation3 + $0x90] sm:$0xff]
          %v1785 = vld [vmem:[#allocation3 + $0x98] sm:$0xff]
          %v1786 = vld [vmem:[#allocation3 + $0xa0] sm:$0xff]
          %v1787 = vld [vmem:[#allocation3 + $0xa8] sm:$0xff]
          %v1788 = vld [vmem:[#allocation3 + $0xb0] sm:$0xff]
          %v1789 = vld [vmem:[#allocation3 + $0xb8] sm:$0xff]
          %v1790 = vld [vmem:[#allocation3 + $0xc0] sm:$0xff]
          %v1791 = vld [vmem:[#allocation3 + $0xc8] sm:$0xff]
          %v1792 = vld [vmem:[#allocation3 + $0xd0] sm:$0xff]
          %v1793 = vld [vmem:[#allocation3 + $0xd8] sm:$0xff]
          %v1794 = vld [vmem:[#allocation3 + $0xe0] sm:$0xff]
          %v1795 = vld [vmem:[#allocation3 + $0xe8] sm:$0xff]
          %v1796 = vld [vmem:[#allocation3 + $0xf0] sm:$0xff]
          %v1797 = vld [vmem:[#allocation3 + $0xf8] sm:$0xff]
          %s1798 = scalar_lea.vmem [#allocation3], %s631
          %v1799 = vld [vmem:[%s1798] sm:$0xff]
          %v1800 = vld [vmem:[%s1798 + $0x8] sm:$0xff]
          %v1801 = vld [vmem:[%s1798 + $0x10] sm:$0xff]
          %v1802 = vld [vmem:[%s1798 + $0x18] sm:$0xff]
          %v1803 = vld [vmem:[%s1798 + $0x20] sm:$0xff]
          %v1804 = vld [vmem:[%s1798 + $0x28] sm:$0xff]
          %v1805 = vld [vmem:[%s1798 + $0x30] sm:$0xff]
          %v1806 = vld [vmem:[%s1798 + $0x38] sm:$0xff]
          %v1807 = vld [vmem:[%s1798 + $0x40] sm:$0xff]
          %v1808 = vld [vmem:[%s1798 + $0x48] sm:$0xff]
          %v1809 = vld [vmem:[%s1798 + $0x50] sm:$0xff]
          %v1810 = vld [vmem:[%s1798 + $0x58] sm:$0xff]
          %v1811 = vld [vmem:[%s1798 + $0x60] sm:$0xff]
          %v1812 = vld [vmem:[%s1798 + $0x68] sm:$0xff]
          %v1813 = vld [vmem:[%s1798 + $0x70] sm:$0xff]
          %v1814 = vld [vmem:[%s1798 + $0x78] sm:$0xff]
          %v1815 = vld [vmem:[%s615] sm:$0xff]
          %v1816 = vld [vmem:[%s615 + $0x8] sm:$0xff]
          %v1817 = vld [vmem:[%s615 + $0x10] sm:$0xff]
          %v1818 = vld [vmem:[%s615 + $0x18] sm:$0xff]
          %v1819 = vld [vmem:[%s615 + $0x20] sm:$0xff]
          %v1820 = vld [vmem:[%s615 + $0x28] sm:$0xff]
          %v1821 = vld [vmem:[%s615 + $0x30] sm:$0xff]
          %v1822 = vld [vmem:[%s615 + $0x38] sm:$0xff]
          %v1823 = vld [vmem:[%s615 + $0x40] sm:$0xff]
          %v1824 = vld [vmem:[%s615 + $0x48] sm:$0xff]
          %v1825 = vld [vmem:[%s615 + $0x50] sm:$0xff]
          %v1826 = vld [vmem:[%s615 + $0x58] sm:$0xff]
          %v1827 = vld [vmem:[%s615 + $0x60] sm:$0xff]
          %v1828 = vld [vmem:[%s615 + $0x68] sm:$0xff]
          %v1829 = vld [vmem:[%s615 + $0x70] sm:$0xff]
          %v1830 = vld [vmem:[%s615 + $0x78] sm:$0xff]
          %v1831 = vpack.c.bf16 %v1767, %v1766
          %v1832 = vpack.c.bf16 %v1769, %v1768
          %v1833 = vpack.c.bf16 %v1771, %v1770
          %v1834 = vpack.c.bf16 %v1773, %v1772
          %v1835 = vpack.c.bf16 %v1775, %v1774
          %v1836 = vpack.c.bf16 %v1777, %v1776
          %v1837 = vpack.c.bf16 %v1779, %v1778
          %v1838 = vpack.c.bf16 %v1781, %v1780
          %v1839 = vpack.c.bf16 %v1783, %v1782
          %v1840 = vpack.c.bf16 %v1785, %v1784
          %v1841 = vpack.c.bf16 %v1787, %v1786
          %v1842 = vpack.c.bf16 %v1789, %v1788
          %v1843 = vpack.c.bf16 %v1791, %v1790
          %v1844 = vpack.c.bf16 %v1793, %v1792
          %v1845 = vpack.c.bf16 %v1795, %v1794
          %v1846 = vpack.c.bf16 %v1797, %v1796
          %v1863 = vunpack.c.l.b16 %v1815
          %v1864 = vunpack.c.h.b16 %v1815
          %v1865 = vunpack.c.l.b16 %v1816
          %v1866 = vunpack.c.h.b16 %v1816
          %v1867 = vunpack.c.l.b16 %v1817
          %v1868 = vunpack.c.h.b16 %v1817
          %v1869 = vunpack.c.l.b16 %v1818
          %v1870 = vunpack.c.h.b16 %v1818
          %v1871 = vunpack.c.l.b16 %v1819
          %v1872 = vunpack.c.h.b16 %v1819
          %v1873 = vunpack.c.l.b16 %v1820
          %v1874 = vunpack.c.h.b16 %v1820
          %v1875 = vunpack.c.l.b16 %v1821
          %v1876 = vunpack.c.h.b16 %v1821
          %v1877 = vunpack.c.l.b16 %v1822
          %v1878 = vunpack.c.h.b16 %v1822
          %v1879 = vunpack.c.l.b16 %v1823
          %v1880 = vunpack.c.h.b16 %v1823
          %v1881 = vunpack.c.l.b16 %v1824
          %v1882 = vunpack.c.h.b16 %v1824
          %v1883 = vunpack.c.l.b16 %v1825
          %v1884 = vunpack.c.h.b16 %v1825
          %v1885 = vunpack.c.l.b16 %v1826
          %v1886 = vunpack.c.h.b16 %v1826
          %v1887 = vunpack.c.l.b16 %v1827
          %v1888 = vunpack.c.h.b16 %v1827
          %v1889 = vunpack.c.l.b16 %v1828
          %v1890 = vunpack.c.h.b16 %v1828
          %v1891 = vunpack.c.l.b16 %v1829
          %v1892 = vunpack.c.h.b16 %v1829
          %v1893 = vunpack.c.l.b16 %v1830
          %v1894 = vunpack.c.h.b16 %v1830
          %v1895 = vpack.c.b16 %v1865, %v1863
          %v1896 = vpack.c.b16 %v1866, %v1864
          %v1897 = vpack.c.b16 %v1869, %v1867
          %v1898 = vpack.c.b16 %v1870, %v1868
          %v1899 = vpack.c.b16 %v1873, %v1871
          %v1900 = vpack.c.b16 %v1874, %v1872
          %v1901 = vpack.c.b16 %v1877, %v1875
          %v1902 = vpack.c.b16 %v1878, %v1876
          %v1903 = vpack.c.b16 %v1881, %v1879
          %v1904 = vpack.c.b16 %v1882, %v1880
          %v1905 = vpack.c.b16 %v1885, %v1883
          %v1906 = vpack.c.b16 %v1886, %v1884
          %v1907 = vpack.c.b16 %v1889, %v1887
          %v1908 = vpack.c.b16 %v1890, %v1888
          %v1909 = vpack.c.b16 %v1893, %v1891
          %v1910 = vpack.c.b16 %v1894, %v1892
          %1927 = vmatprep.subr.bf16.mxu0 0
          %1928 = vmatpush1.bf16.msra.mxu0 %v1831
          %1929 = vmatprep.subr.bf16.mxu0 0
          %1930 = vmatpush1.bf16.msra.mxu0 %v1832
          %1931 = vmatprep.subr.bf16.mxu0 0
          %1932 = vmatpush1.bf16.msra.mxu0 %v1833
          %1933 = vmatprep.subr.bf16.mxu0 0
          %1934 = vmatpush1.bf16.msra.mxu0 %v1834
          %1935 = vmatprep.subr.bf16.mxu0 0
          %1936 = vmatpush1.bf16.msra.mxu0 %v1835
          %1937 = vmatprep.subr.bf16.mxu0 0
          %1938 = vmatpush1.bf16.msra.mxu0 %v1836
          %1939 = vmatprep.subr.bf16.mxu0 0
          %1940 = vmatpush1.bf16.msra.mxu0 %v1837
          %1941 = vmatprep.subr.bf16.mxu0 0
          %1942 = vmatpush1.bf16.msra.mxu0 %v1838
          %1943 = vmatprep.subr.bf16.mxu0 0
          %1944 = vmatpush1.bf16.msra.mxu0 %v1839
          %1945 = vmatprep.subr.bf16.mxu0 0
          %1946 = vmatpush1.bf16.msra.mxu0 %v1840
          %1947 = vmatprep.subr.bf16.mxu0 0
          %1948 = vmatpush1.bf16.msra.mxu0 %v1841
          %1949 = vmatprep.subr.bf16.mxu0 0
          %1950 = vmatpush1.bf16.msra.mxu0 %v1842
          %1951 = vmatprep.subr.bf16.mxu0 0
          %1952 = vmatpush1.bf16.msra.mxu0 %v1843
          %1953 = vmatprep.subr.bf16.mxu0 0
          %1954 = vmatpush1.bf16.msra.mxu0 %v1844
          %1955 = vmatprep.subr.bf16.mxu0 0
          %1956 = vmatpush1.bf16.msra.mxu0 %v1845
          %1957 = vmatprep.subr.bf16.mxu0 0
          %1958 = vmatpush1.bf16.msra.mxu0 %v1846
          %1959 = vmatprep.mubr.bf16.mxu0 %v1896
          %1960 = vmatmul.mubr.bf16.gmra.mrb[0].mxu0 %v1895
          %v1961 = vpop.f32.mrb[0].mxu0
          %v1962 = vadd.f32 0.0, %v1961
          %v1963 = vpop.f32.mrb[0].mxu0
          %v1964 = vpop.f32.mrb[0].mxu0
          %v1965 = vadd.f32 0.0, %v1964
          %v1966 = vpop.f32.mrb[0].mxu0
          %1967 = vmatprep.mubr.bf16.mxu0 %v1898
          %1968 = vmatmul.mubr.bf16.gmra.mrb[0].mxu0 %v1897
          %v1969 = vpop.f32.mrb[0].mxu0
          %v1970 = vadd.f32 0.0, %v1969
          %v1971 = vpop.f32.mrb[0].mxu0
          %v1972 = vpop.f32.mrb[0].mxu0
          %v1973 = vadd.f32 0.0, %v1972
          %v1974 = vpop.f32.mrb[0].mxu0
          %1975 = vmatprep.mubr.bf16.mxu0 %v1900
          %1976 = vmatmul.mubr.bf16.gmra.mrb[0].mxu0 %v1899
          %v1977 = vpop.f32.mrb[0].mxu0
          %v1978 = vadd.f32 0.0, %v1977
          %v1979 = vpop.f32.mrb[0].mxu0
          %v1980 = vpop.f32.mrb[0].mxu0
          %v1981 = vadd.f32 0.0, %v1980
          %v1982 = vpop.f32.mrb[0].mxu0
          %1983 = vmatprep.mubr.bf16.mxu0 %v1902
          %1984 = vmatmul.mubr.bf16.gmra.mrb[0].mxu0 %v1901
          %v1985 = vpop.f32.mrb[0].mxu0
          %v1986 = vadd.f32 0.0, %v1985
          %v1987 = vpop.f32.mrb[0].mxu0
          %v1988 = vpop.f32.mrb[0].mxu0
          %v1989 = vadd.f32 0.0, %v1988
          %v1990 = vpop.f32.mrb[0].mxu0
          %1991 = vmatprep.mubr.bf16.mxu0 %v1904
          %1992 = vmatmul.mubr.bf16.gmra.mrb[0].mxu0 %v1903
          %v1993 = vpop.f32.mrb[0].mxu0
          %v1994 = vadd.f32 0.0, %v1993
          %v1995 = vpop.f32.mrb[0].mxu0
          %v1996 = vpop.f32.mrb[0].mxu0
          %v1997 = vadd.f32 0.0, %v1996
          %v1998 = vpop.f32.mrb[0].mxu0
          %1999 = vmatprep.mubr.bf16.mxu0 %v1906
          %2000 = vmatmul.mubr.bf16.gmra.mrb[0].mxu0 %v1905
          %v2001 = vpop.f32.mrb[0].mxu0
          %v2002 = vadd.f32 0.0, %v2001
          %v2003 = vpop.f32.mrb[0].mxu0
          %v2004 = vpop.f32.mrb[0].mxu0
          %v2005 = vadd.f32 0.0, %v2004
          %v2006 = vpop.f32.mrb[0].mxu0
          %2007 = vmatprep.mubr.bf16.mxu0 %v1908
          %2008 = vmatmul.mubr.bf16.gmra.mrb[0].mxu0 %v1907
          %v2009 = vpop.f32.mrb[0].mxu0
          %v2010 = vadd.f32 0.0, %v2009
          %v2011 = vpop.f32.mrb[0].mxu0
          %v2012 = vpop.f32.mrb[0].mxu0
          %v2013 = vadd.f32 0.0, %v2012
          %v2014 = vpop.f32.mrb[0].mxu0
          %2015 = vmatprep.mubr.bf16.mxu0 %v1910
          %2016 = vmatmul.mubr.bf16.gmra.mrb[0].mxu0 %v1909
          %v2017 = vpop.f32.mrb[0].mxu0
          %v2018 = vadd.f32 0.0, %v2017
          %v2019 = vpop.f32.mrb[0].mxu0
          %v2020 = vpop.f32.mrb[0].mxu0
          %v2021 = vadd.f32 0.0, %v2020
          %v2022 = vpop.f32.mrb[0].mxu0
          %2023 = vdwg.mxu0
          %2040 = vrot.lane.b32.xlu0 %v1799, 32
          %v2041 = vpop.permute.xlu0 %2040
          %2042 = vrot.lane.b32.xlu0 %v1800, 32
          %v2043 = vpop.permute.xlu0 %2042
          %2044 = vrot.lane.b32.xlu0 %v1801, 32
          %v2045 = vpop.permute.xlu0 %2044
          %2046 = vrot.lane.b32.xlu0 %v1802, 32
          %v2047 = vpop.permute.xlu0 %2046
          %2048 = vrot.lane.b32.xlu0 %v1803, 32
          %v2049 = vpop.permute.xlu0 %2048
          %2050 = vrot.lane.b32.xlu0 %v1804, 32
          %v2051 = vpop.permute.xlu0 %2050
          %2052 = vrot.lane.b32.xlu0 %v1805, 32
          %v2053 = vpop.permute.xlu0 %2052
          %2054 = vrot.lane.b32.xlu0 %v1806, 32
          %v2055 = vpop.permute.xlu0 %2054
          %2056 = vrot.lane.b32.xlu0 %v1807, 32
          %v2057 = vpop.permute.xlu0 %2056
          %2058 = vrot.lane.b32.xlu0 %v1808, 32
          %v2059 = vpop.permute.xlu0 %2058
          %2060 = vrot.lane.b32.xlu0 %v1809, 32
          %v2061 = vpop.permute.xlu0 %2060
          %2062 = vrot.lane.b32.xlu0 %v1810, 32
          %v2063 = vpop.permute.xlu0 %2062
          %2064 = vrot.lane.b32.xlu0 %v1811, 32
          %v2065 = vpop.permute.xlu0 %2064
          %2066 = vrot.lane.b32.xlu0 %v1812, 32
          %v2067 = vpop.permute.xlu0 %2066
          %2068 = vrot.lane.b32.xlu0 %v1813, 32
          %v2069 = vpop.permute.xlu0 %2068
          %2070 = vrot.lane.b32.xlu0 %v1814, 32
          %v2071 = vpop.permute.xlu0 %2070
          %vm2088 = vcmask 261120
          %v2089 = vsel %vm2088, %v1962, %v2041
          %v2090 = vsel %vm2088, %v1965, %v2043
          %v2091 = vsel %vm2088, %v1970, %v2045
          %v2092 = vsel %vm2088, %v1973, %v2047
          %v2093 = vsel %vm2088, %v1978, %v2049
          %v2094 = vsel %vm2088, %v1981, %v2051
          %v2095 = vsel %vm2088, %v1986, %v2053
          %v2096 = vsel %vm2088, %v1989, %v2055
          %v2097 = vsel %vm2088, %v1994, %v2057
          %v2098 = vsel %vm2088, %v1997, %v2059
          %v2099 = vsel %vm2088, %v2002, %v2061
          %v2100 = vsel %vm2088, %v2005, %v2063
          %v2101 = vsel %vm2088, %v2010, %v2065
          %v2102 = vsel %vm2088, %v2013, %v2067
          %v2103 = vsel %vm2088, %v2018, %v2069
          %v2104 = vsel %vm2088, %v2021, %v2071
          %v2105 = vld [vmem:[%s8] sm:$0xff]
          %v2106 = vld [vmem:[%s8 + $0x8] sm:$0xff]
          %v2107 = vld [vmem:[%s8 + $0x10] sm:$0xff]
          %v2108 = vld [vmem:[%s8 + $0x18] sm:$0xff]
          %v2109 = vld [vmem:[%s8 + $0x20] sm:$0xff]
          %v2110 = vld [vmem:[%s8 + $0x28] sm:$0xff]
          %v2111 = vld [vmem:[%s8 + $0x30] sm:$0xff]
          %v2112 = vld [vmem:[%s8 + $0x38] sm:$0xff]
          %v2113 = vld [vmem:[%s9] sm:$0x1]
          %v2115 = vlaneseq
          %v2116 = vshrl.u32 %v2115, 7
          %v2117 = vsub.s32 0, %v2116
          %v2118 = vrot.slane %v2113, %v2117
          %vm2120 = vcmask 523264
          %v2122 = vsel %vm2120, %v2089, 0
          %v2125 = vsel %vm2120, %v2090, 0
          %v2128 = vsel %vm2120, %v2091, 0
          %v2131 = vsel %vm2120, %v2092, 0
          %v2134 = vsel %vm2120, %v2093, 0
          %v2137 = vsel %vm2120, %v2094, 0
          %v2140 = vsel %vm2120, %v2095, 0
          %v2143 = vsel %vm2120, %v2096, 0
          %v2146 = vsel %vm2120, %v2097, 0
          %v2149 = vsel %vm2120, %v2098, 0
          %v2152 = vsel %vm2120, %v2099, 0
          %v2155 = vsel %vm2120, %v2100, 0
          %v2158 = vsel %vm2120, %v2101, 0
          %v2161 = vsel %vm2120, %v2102, 0
          %v2164 = vsel %vm2120, %v2103, 0
          %v2167 = vsel %vm2120, %v2104, 0
          %2169 = vmatprep.subr.mxu0 0.0
          %2170 = vmatpush1.msra.mxu0 %v2105
          %2171 = vmatprep.subr.mxu0 0.0
          %2172 = vmatpush1.msra.mxu0 %v2106
          %2173 = vmatprep.subr.mxu0 0.0
          %2174 = vmatpush1.msra.mxu0 %v2107
          %2175 = vmatprep.subr.mxu0 0.0
          %2176 = vmatpush1.msra.mxu0 %v2108
          %2177 = vmatprep.subr.mxu0 0.0
          %2178 = vmatpush1.msra.mxu0 %v2109
          %2179 = vmatprep.subr.mxu0 0.0
          %2180 = vmatpush1.msra.mxu0 %v2110
          %2181 = vmatprep.subr.mxu0 0.0
          %2182 = vmatpush1.msra.mxu0 %v2111
          %2183 = vmatprep.subr.mxu0 0.0
          %2184 = vmatpush1.msra.mxu0 %v2112
          %2185 = vmatprep.subr.mxu0 0.0
          %2186 = vmatpush1.msra.mxu0 0.0
          %2187 = vmatprep.subr.mxu0 0.0
          %2188 = vmatpush1.msra.mxu0 0.0
          %2189 = vmatprep.subr.mxu0 0.0
          %2190 = vmatpush1.msra.mxu0 0.0
          %2191 = vmatprep.subr.mxu0 0.0
          %2192 = vmatpush1.msra.mxu0 0.0
          %2193 = vmatprep.subr.mxu0 0.0
          %2194 = vmatpush1.msra.mxu0 0.0
          %2195 = vmatprep.subr.mxu0 0.0
          %2196 = vmatpush1.msra.mxu0 0.0
          %2197 = vmatprep.subr.mxu0 0.0
          %2198 = vmatpush1.msra.mxu0 0.0
          %2199 = vmatprep.subr.mxu0 0.0
          %2200 = vmatpush1.msra.mxu0 0.0
          %2201 = vmatprep.subr.mxu0 0.0
          %2202 = vmatpush1.msra.mxu0 0.0
          %2203 = vmatprep.subr.mxu0 0.0
          %2204 = vmatpush1.msra.mxu0 0.0
          %2205 = vmatprep.subr.mxu0 0.0
          %2206 = vmatpush1.msra.mxu0 0.0
          %2207 = vmatprep.subr.mxu0 0.0
          %2208 = vmatpush1.msra.mxu0 0.0
          %2209 = vmatprep.subr.mxu0 0.0
          %2210 = vmatpush1.msra.mxu0 0.0
          %2211 = vmatprep.subr.mxu0 0.0
          %2212 = vmatpush1.msra.mxu0 0.0
          %2213 = vmatprep.subr.mxu0 0.0
          %2214 = vmatpush1.msra.mxu0 0.0
          %2215 = vmatprep.subr.mxu0 0.0
          %2216 = vmatpush1.msra.mxu0 0.0
          %2217 = vmatprep.subr.mxu0 0.0
          %2218 = vmatpush1.msra.mxu0 0.0
          %2219 = vmatprep.subr.mxu0 0.0
          %2220 = vmatpush1.msra.mxu0 0.0
          %2221 = vmatprep.subr.mxu0 0.0
          %2222 = vmatpush1.msra.mxu0 0.0
          %2223 = vmatprep.subr.mxu0 0.0
          %2224 = vmatpush1.msra.mxu0 0.0
          %2225 = vmatprep.subr.mxu0 0.0
          %2226 = vmatpush1.msra.mxu0 0.0
          %2227 = vmatprep.subr.mxu0 0.0
          %2228 = vmatpush1.msra.mxu0 0.0
          %2229 = vmatprep.subr.mxu0 0.0
          %2230 = vmatpush1.msra.mxu0 0.0
          %2231 = vmatprep.subr.mxu0 0.0
          %2232 = vmatpush1.msra.mxu0 0.0
          %2233 = vmatprep.mubr.f32.mxu0 0.0
          %2234 = vmatmul.mubr.f32.gmra.mrb[0].mxu0 %v2122
          %v2235 = vpop.f32.mrb[0].mxu0
          %v2236 = vadd.f32 %v2118, %v2235
          %v2237 = vpop.f32.mrb[0].mxu0
          %2238 = vmatprep.mubr.f32.mxu0 0.0
          %2239 = vmatmul.mubr.f32.gmra.mrb[0].mxu0 %v2125
          %v2240 = vpop.f32.mrb[0].mxu0
          %v2241 = vadd.f32 %v2118, %v2240
          %v2242 = vpop.f32.mrb[0].mxu0
          %2243 = vmatprep.mubr.f32.mxu0 0.0
          %2244 = vmatmul.mubr.f32.gmra.mrb[0].mxu0 %v2128
          %v2245 = vpop.f32.mrb[0].mxu0
          %v2246 = vadd.f32 %v2118, %v2245
          %v2247 = vpop.f32.mrb[0].mxu0
          %2248 = vmatprep.mubr.f32.mxu0 0.0
          %2249 = vmatmul.mubr.f32.gmra.mrb[0].mxu0 %v2131
          %v2250 = vpop.f32.mrb[0].mxu0
          %v2251 = vadd.f32 %v2118, %v2250
          %v2252 = vpop.f32.mrb[0].mxu0
          %2253 = vmatprep.mubr.f32.mxu0 0.0
          %2254 = vmatmul.mubr.f32.gmra.mrb[0].mxu0 %v2134
          %v2255 = vpop.f32.mrb[0].mxu0
          %v2256 = vadd.f32 %v2118, %v2255
          %v2257 = vpop.f32.mrb[0].mxu0
          %2258 = vmatprep.mubr.f32.mxu0 0.0
          %2259 = vmatmul.mubr.f32.gmra.mrb[0].mxu0 %v2137
          %v2260 = vpop.f32.mrb[0].mxu0
          %v2261 = vadd.f32 %v2118, %v2260
          %v2262 = vpop.f32.mrb[0].mxu0
          %2263 = vmatprep.mubr.f32.mxu0 0.0
          %2264 = vmatmul.mubr.f32.gmra.mrb[0].mxu0 %v2140
          %v2265 = vpop.f32.mrb[0].mxu0
          %v2266 = vadd.f32 %v2118, %v2265
          %v2267 = vpop.f32.mrb[0].mxu0
          %2268 = vmatprep.mubr.f32.mxu0 0.0
          %2269 = vmatmul.mubr.f32.gmra.mrb[0].mxu0 %v2143
          %v2270 = vpop.f32.mrb[0].mxu0
          %v2271 = vadd.f32 %v2118, %v2270
          %v2272 = vpop.f32.mrb[0].mxu0
          %2273 = vmatprep.mubr.f32.mxu0 0.0
          %2274 = vmatmul.mubr.f32.gmra.mrb[0].mxu0 %v2146
          %v2275 = vpop.f32.mrb[0].mxu0
          %v2276 = vadd.f32 %v2118, %v2275
          %v2277 = vpop.f32.mrb[0].mxu0
          %2278 = vmatprep.mubr.f32.mxu0 0.0
          %2279 = vmatmul.mubr.f32.gmra.mrb[0].mxu0 %v2149
          %v2280 = vpop.f32.mrb[0].mxu0
          %v2281 = vadd.f32 %v2118, %v2280
          %v2282 = vpop.f32.mrb[0].mxu0
          %2283 = vmatprep.mubr.f32.mxu0 0.0
          %2284 = vmatmul.mubr.f32.gmra.mrb[0].mxu0 %v2152
          %v2285 = vpop.f32.mrb[0].mxu0
          %v2286 = vadd.f32 %v2118, %v2285
          %v2287 = vpop.f32.mrb[0].mxu0
          %2288 = vmatprep.mubr.f32.mxu0 0.0
          %2289 = vmatmul.mubr.f32.gmra.mrb[0].mxu0 %v2155
          %v2290 = vpop.f32.mrb[0].mxu0
          %v2291 = vadd.f32 %v2118, %v2290
          %v2292 = vpop.f32.mrb[0].mxu0
          %2293 = vmatprep.mubr.f32.mxu0 0.0
          %2294 = vmatmul.mubr.f32.gmra.mrb[0].mxu0 %v2158
          %v2295 = vpop.f32.mrb[0].mxu0
          %v2296 = vadd.f32 %v2118, %v2295
          %v2297 = vpop.f32.mrb[0].mxu0
          %2298 = vmatprep.mubr.f32.mxu0 0.0
          %2299 = vmatmul.mubr.f32.gmra.mrb[0].mxu0 %v2161
          %v2300 = vpop.f32.mrb[0].mxu0
          %v2301 = vadd.f32 %v2118, %v2300
          %v2302 = vpop.f32.mrb[0].mxu0
          %2303 = vmatprep.mubr.f32.mxu0 0.0
          %2304 = vmatmul.mubr.f32.gmra.mrb[0].mxu0 %v2164
          %v2305 = vpop.f32.mrb[0].mxu0
          %v2306 = vadd.f32 %v2118, %v2305
          %v2307 = vpop.f32.mrb[0].mxu0
          %2308 = vmatprep.mubr.f32.mxu0 0.0
          %2309 = vmatmul.mubr.f32.gmra.mrb[0].mxu0 %v2167
          %v2310 = vpop.f32.mrb[0].mxu0
          %v2311 = vadd.f32 %v2118, %v2310
          %v2312 = vpop.f32.mrb[0].mxu0
          %2313 = vdwg.mxu0
          %v2314 = vmax.f32 %v2236, 0.0
          %v2315 = vmax.f32 %v2241, 0.0
          %v2316 = vmax.f32 %v2246, 0.0
          %v2317 = vmax.f32 %v2251, 0.0
          %v2318 = vmax.f32 %v2256, 0.0
          %v2319 = vmax.f32 %v2261, 0.0
          %v2320 = vmax.f32 %v2266, 0.0
          %v2321 = vmax.f32 %v2271, 0.0
          %v2322 = vmax.f32 %v2276, 0.0
          %v2323 = vmax.f32 %v2281, 0.0
          %v2324 = vmax.f32 %v2286, 0.0
          %v2325 = vmax.f32 %v2291, 0.0
          %v2326 = vmax.f32 %v2296, 0.0
          %v2327 = vmax.f32 %v2301, 0.0
          %v2328 = vmax.f32 %v2306, 0.0
          %v2329 = vmax.f32 %v2311, 0.0
          %v2330 = vld [vmem:[%s10] sm:$0xff]
          %v2331 = vld [vmem:[%s10 + $0x8] sm:$0xff]
          %vm2332 = vcmask 130048
          %v2334 = vsel %vm2332, %v2314, 0
          %v2337 = vsel %vm2332, %v2315, 0
          %v2340 = vsel %vm2332, %v2316, 0
          %v2343 = vsel %vm2332, %v2317, 0
          %v2346 = vsel %vm2332, %v2318, 0
          %v2349 = vsel %vm2332, %v2319, 0
          %v2352 = vsel %vm2332, %v2320, 0
          %v2355 = vsel %vm2332, %v2321, 0
          %v2358 = vsel %vm2332, %v2322, 0
          %v2361 = vsel %vm2332, %v2323, 0
          %v2364 = vsel %vm2332, %v2324, 0
          %v2367 = vsel %vm2332, %v2325, 0
          %v2370 = vsel %vm2332, %v2326, 0
          %v2373 = vsel %vm2332, %v2327, 0
          %v2376 = vsel %vm2332, %v2328, 0
          %v2379 = vsel %vm2332, %v2329, 0
          %2381 = vmatprep.subr.mxu0 0.0
          %2382 = vmatpush1.msra.mxu0 %v2330
          %2383 = vmatprep.subr.mxu0 0.0
          %2384 = vmatpush1.msra.mxu0 %v2331
          %2385 = vmatprep.subr.mxu0 0.0
          %2386 = vmatpush1.msra.mxu0 0.0
          %2387 = vmatprep.subr.mxu0 0.0
          %2388 = vmatpush1.msra.mxu0 0.0
          %2389 = vmatprep.subr.mxu0 0.0
          %2390 = vmatpush1.msra.mxu0 0.0
          %2391 = vmatprep.subr.mxu0 0.0
          %2392 = vmatpush1.msra.mxu0 0.0
          %2393 = vmatprep.subr.mxu0 0.0
          %2394 = vmatpush1.msra.mxu0 0.0
          %2395 = vmatprep.subr.mxu0 0.0
          %2396 = vmatpush1.msra.mxu0 0.0
          %2397 = vmatprep.subr.mxu0 0.0
          %2398 = vmatpush1.msra.mxu0 0.0
          %2399 = vmatprep.subr.mxu0 0.0
          %2400 = vmatpush1.msra.mxu0 0.0
          %2401 = vmatprep.subr.mxu0 0.0
          %2402 = vmatpush1.msra.mxu0 0.0
          %2403 = vmatprep.subr.mxu0 0.0
          %2404 = vmatpush1.msra.mxu0 0.0
          %2405 = vmatprep.subr.mxu0 0.0
          %2406 = vmatpush1.msra.mxu0 0.0
          %2407 = vmatprep.subr.mxu0 0.0
          %2408 = vmatpush1.msra.mxu0 0.0
          %2409 = vmatprep.subr.mxu0 0.0
          %2410 = vmatpush1.msra.mxu0 0.0
          %2411 = vmatprep.subr.mxu0 0.0
          %2412 = vmatpush1.msra.mxu0 0.0
          %2413 = vmatprep.subr.mxu0 0.0
          %2414 = vmatpush1.msra.mxu0 0.0
          %2415 = vmatprep.subr.mxu0 0.0
          %2416 = vmatpush1.msra.mxu0 0.0
          %2417 = vmatprep.subr.mxu0 0.0
          %2418 = vmatpush1.msra.mxu0 0.0
          %2419 = vmatprep.subr.mxu0 0.0
          %2420 = vmatpush1.msra.mxu0 0.0
          %2421 = vmatprep.subr.mxu0 0.0
          %2422 = vmatpush1.msra.mxu0 0.0
          %2423 = vmatprep.subr.mxu0 0.0
          %2424 = vmatpush1.msra.mxu0 0.0
          %2425 = vmatprep.subr.mxu0 0.0
          %2426 = vmatpush1.msra.mxu0 0.0
          %2427 = vmatprep.subr.mxu0 0.0
          %2428 = vmatpush1.msra.mxu0 0.0
          %2429 = vmatprep.subr.mxu0 0.0
          %2430 = vmatpush1.msra.mxu0 0.0
          %2431 = vmatprep.subr.mxu0 0.0
          %2432 = vmatpush1.msra.mxu0 0.0
          %2433 = vmatprep.subr.mxu0 0.0
          %2434 = vmatpush1.msra.mxu0 0.0
          %2435 = vmatprep.subr.mxu0 0.0
          %2436 = vmatpush1.msra.mxu0 0.0
          %2437 = vmatprep.subr.mxu0 0.0
          %2438 = vmatpush1.msra.mxu0 0.0
          %2439 = vmatprep.subr.mxu0 0.0
          %2440 = vmatpush1.msra.mxu0 0.0
          %2441 = vmatprep.subr.mxu0 0.0
          %2442 = vmatpush1.msra.mxu0 0.0
          %2443 = vmatprep.subr.mxu0 0.0
          %2444 = vmatpush1.msra.mxu0 0.0
          %2445 = vmatprep.mubr.f32.mxu0 0.0
          %2446 = vmatmul.mubr.f32.gmra.mrb[0].mxu0 %v2334
          %v2447 = vpop.f32.mrb[0].mxu0
          %v2448 = vadd.f32 0.0, %v2447
          %v2449 = vpop.f32.mrb[0].mxu0
          %2450 = vmatprep.mubr.f32.mxu0 0.0
          %2451 = vmatmul.mubr.f32.gmra.mrb[0].mxu0 %v2337
          %v2452 = vpop.f32.mrb[0].mxu0
          %v2453 = vadd.f32 0.0, %v2452
          %v2454 = vpop.f32.mrb[0].mxu0
          %2455 = vmatprep.mubr.f32.mxu0 0.0
          %2456 = vmatmul.mubr.f32.gmra.mrb[0].mxu0 %v2340
          %v2457 = vpop.f32.mrb[0].mxu0
          %v2458 = vadd.f32 0.0, %v2457
          %v2459 = vpop.f32.mrb[0].mxu0
          %2460 = vmatprep.mubr.f32.mxu0 0.0
          %2461 = vmatmul.mubr.f32.gmra.mrb[0].mxu0 %v2343
          %v2462 = vpop.f32.mrb[0].mxu0
          %v2463 = vadd.f32 0.0, %v2462
          %v2464 = vpop.f32.mrb[0].mxu0
          %2465 = vmatprep.mubr.f32.mxu0 0.0
          %2466 = vmatmul.mubr.f32.gmra.mrb[0].mxu0 %v2346
          %v2467 = vpop.f32.mrb[0].mxu0
          %v2468 = vadd.f32 0.0, %v2467
          %v2469 = vpop.f32.mrb[0].mxu0
          %2470 = vmatprep.mubr.f32.mxu0 0.0
          %2471 = vmatmul.mubr.f32.gmra.mrb[0].mxu0 %v2349
          %v2472 = vpop.f32.mrb[0].mxu0
          %v2473 = vadd.f32 0.0, %v2472
          %v2474 = vpop.f32.mrb[0].mxu0
          %2475 = vmatprep.mubr.f32.mxu0 0.0
          %2476 = vmatmul.mubr.f32.gmra.mrb[0].mxu0 %v2352
          %v2477 = vpop.f32.mrb[0].mxu0
          %v2478 = vadd.f32 0.0, %v2477
          %v2479 = vpop.f32.mrb[0].mxu0
          %2480 = vmatprep.mubr.f32.mxu0 0.0
          %2481 = vmatmul.mubr.f32.gmra.mrb[0].mxu0 %v2355
          %v2482 = vpop.f32.mrb[0].mxu0
          %v2483 = vadd.f32 0.0, %v2482
          %v2484 = vpop.f32.mrb[0].mxu0
          %2485 = vmatprep.mubr.f32.mxu0 0.0
          %2486 = vmatmul.mubr.f32.gmra.mrb[0].mxu0 %v2358
          %v2487 = vpop.f32.mrb[0].mxu0
          %v2488 = vadd.f32 0.0, %v2487
          %v2489 = vpop.f32.mrb[0].mxu0
          %2490 = vmatprep.mubr.f32.mxu0 0.0
          %2491 = vmatmul.mubr.f32.gmra.mrb[0].mxu0 %v2361
          %v2492 = vpop.f32.mrb[0].mxu0
          %v2493 = vadd.f32 0.0, %v2492
          %v2494 = vpop.f32.mrb[0].mxu0
          %2495 = vmatprep.mubr.f32.mxu0 0.0
          %2496 = vmatmul.mubr.f32.gmra.mrb[0].mxu0 %v2364
          %v2497 = vpop.f32.mrb[0].mxu0
          %v2498 = vadd.f32 0.0, %v2497
          %v2499 = vpop.f32.mrb[0].mxu0
          %2500 = vmatprep.mubr.f32.mxu0 0.0
          %2501 = vmatmul.mubr.f32.gmra.mrb[0].mxu0 %v2367
          %v2502 = vpop.f32.mrb[0].mxu0
          %v2503 = vadd.f32 0.0, %v2502
          %v2504 = vpop.f32.mrb[0].mxu0
          %2505 = vmatprep.mubr.f32.mxu0 0.0
          %2506 = vmatmul.mubr.f32.gmra.mrb[0].mxu0 %v2370
          %v2507 = vpop.f32.mrb[0].mxu0
          %v2508 = vadd.f32 0.0, %v2507
          %v2509 = vpop.f32.mrb[0].mxu0
          %2510 = vmatprep.mubr.f32.mxu0 0.0
          %2511 = vmatmul.mubr.f32.gmra.mrb[0].mxu0 %v2373
          %v2512 = vpop.f32.mrb[0].mxu0
          %v2513 = vadd.f32 0.0, %v2512
          %v2514 = vpop.f32.mrb[0].mxu0
          %2515 = vmatprep.mubr.f32.mxu0 0.0
          %2516 = vmatmul.mubr.f32.gmra.mrb[0].mxu0 %v2376
          %v2517 = vpop.f32.mrb[0].mxu0
          %v2518 = vadd.f32 0.0, %v2517
          %v2519 = vpop.f32.mrb[0].mxu0
          %2520 = vmatprep.mubr.f32.mxu0 0.0
          %2521 = vmatmul.mubr.f32.gmra.mrb[0].mxu0 %v2379
          %v2522 = vpop.f32.mrb[0].mxu0
          %v2523 = vadd.f32 0.0, %v2522
          %v2524 = vpop.f32.mrb[0].mxu0
          %2525 = vdwg.mxu0
          %v2526 = vpack.c.bf16 %v2453, %v2448
          %v2527 = vpack.c.bf16 %v2463, %v2458
          %v2528 = vpack.c.bf16 %v2473, %v2468
          %v2529 = vpack.c.bf16 %v2483, %v2478
          %v2530 = vpack.c.bf16 %v2493, %v2488
          %v2531 = vpack.c.bf16 %v2503, %v2498
          %v2532 = vpack.c.bf16 %v2513, %v2508
          %v2533 = vpack.c.bf16 %v2523, %v2518
          %s2534 = sshra.s32 %s631, 4
          %s2535 = sand.u32 %s631, 15
          %s2536 = smul.addr %s2534, 8
          %s2537 = scalar_lea.vmem [#allocation4], %s2536
          %2538 = vst.msk [vmem:[%s2537] sm:$0xff] %vm2120, %v2526
          %2539 = vst.msk [vmem:[%s2537 + $0x8] sm:$0xff] %vm2120, %v2527
          %2540 = vst.msk [vmem:[%s2537 + $0x10] sm:$0xff] %vm2120, %v2528
          %2541 = vst.msk [vmem:[%s2537 + $0x18] sm:$0xff] %vm2120, %v2529
          %2542 = vst.msk [vmem:[%s2537 + $0x20] sm:$0xff] %vm2120, %v2530
          %2543 = vst.msk [vmem:[%s2537 + $0x28] sm:$0xff] %vm2120, %v2531
          %2544 = vst.msk [vmem:[%s2537 + $0x30] sm:$0xff] %vm2120, %v2532
          %2545 = vst.msk [vmem:[%s2537 + $0x38] sm:$0xff] %vm2120, %v2533
          %v2546 = vld [vmem:[%s11] sm:$0xff]
          %v2547 = vld [vmem:[%s11 + $0x8] sm:$0xff]
          %v2548 = vld [vmem:[%s11 + $0x10] sm:$0xff]
          %v2549 = vld [vmem:[%s11 + $0x18] sm:$0xff]
          %v2550 = vld [vmem:[%s11 + $0x20] sm:$0xff]
          %v2551 = vld [vmem:[%s11 + $0x28] sm:$0xff]
          %v2552 = vld [vmem:[%s11 + $0x30] sm:$0xff]
          %v2553 = vld [vmem:[%s11 + $0x38] sm:$0xff]
          %v2555 = vsel %vm2120, %v2448, 0
          %v2558 = vsel %vm2120, %v2453, 0
          %v2561 = vsel %vm2120, %v2458, 0
          %v2564 = vsel %vm2120, %v2463, 0
          %v2567 = vsel %vm2120, %v2468, 0
          %v2570 = vsel %vm2120, %v2473, 0
          %v2573 = vsel %vm2120, %v2478, 0
          %v2576 = vsel %vm2120, %v2483, 0
          %v2579 = vsel %vm2120, %v2488, 0
          %v2582 = vsel %vm2120, %v2493, 0
          %v2585 = vsel %vm2120, %v2498, 0
          %v2588 = vsel %vm2120, %v2503, 0
          %v2591 = vsel %vm2120, %v2508, 0
          %v2594 = vsel %vm2120, %v2513, 0
          %v2597 = vsel %vm2120, %v2518, 0
          %v2600 = vsel %vm2120, %v2523, 0
          %2602 = vmatprep.subr.mxu0 0.0
          %2603 = vmatpush1.msra.mxu0 %v2546
          %2604 = vmatprep.subr.mxu0 0.0
          %2605 = vmatpush1.msra.mxu0 %v2547
          %2606 = vmatprep.subr.mxu0 0.0
          %2607 = vmatpush1.msra.mxu0 %v2548
          %2608 = vmatprep.subr.mxu0 0.0
          %2609 = vmatpush1.msra.mxu0 %v2549
          %2610 = vmatprep.subr.mxu0 0.0
          %2611 = vmatpush1.msra.mxu0 %v2550
          %2612 = vmatprep.subr.mxu0 0.0
          %2613 = vmatpush1.msra.mxu0 %v2551
          %2614 = vmatprep.subr.mxu0 0.0
          %2615 = vmatpush1.msra.mxu0 %v2552
          %2616 = vmatprep.subr.mxu0 0.0
          %2617 = vmatpush1.msra.mxu0 %v2553
          %2618 = vmatprep.subr.mxu0 0.0
          %2619 = vmatpush1.msra.mxu0 0.0
          %2620 = vmatprep.subr.mxu0 0.0
          %2621 = vmatpush1.msra.mxu0 0.0
          %2622 = vmatprep.subr.mxu0 0.0
          %2623 = vmatpush1.msra.mxu0 0.0
          %2624 = vmatprep.subr.mxu0 0.0
          %2625 = vmatpush1.msra.mxu0 0.0
          %2626 = vmatprep.subr.mxu0 0.0
          %2627 = vmatpush1.msra.mxu0 0.0
          %2628 = vmatprep.subr.mxu0 0.0
          %2629 = vmatpush1.msra.mxu0 0.0
          %2630 = vmatprep.subr.mxu0 0.0
          %2631 = vmatpush1.msra.mxu0 0.0
          %2632 = vmatprep.subr.mxu0 0.0
          %2633 = vmatpush1.msra.mxu0 0.0
          %2634 = vmatprep.subr.mxu0 0.0
          %2635 = vmatpush1.msra.mxu0 0.0
          %2636 = vmatprep.subr.mxu0 0.0
          %2637 = vmatpush1.msra.mxu0 0.0
          %2638 = vmatprep.subr.mxu0 0.0
          %2639 = vmatpush1.msra.mxu0 0.0
          %2640 = vmatprep.subr.mxu0 0.0
          %2641 = vmatpush1.msra.mxu0 0.0
          %2642 = vmatprep.subr.mxu0 0.0
          %2643 = vmatpush1.msra.mxu0 0.0
          %2644 = vmatprep.subr.mxu0 0.0
          %2645 = vmatpush1.msra.mxu0 0.0
          %2646 = vmatprep.subr.mxu0 0.0
          %2647 = vmatpush1.msra.mxu0 0.0
          %2648 = vmatprep.subr.mxu0 0.0
          %2649 = vmatpush1.msra.mxu0 0.0
          %2650 = vmatprep.subr.mxu0 0.0
          %2651 = vmatpush1.msra.mxu0 0.0
          %2652 = vmatprep.subr.mxu0 0.0
          %2653 = vmatpush1.msra.mxu0 0.0
          %2654 = vmatprep.subr.mxu0 0.0
          %2655 = vmatpush1.msra.mxu0 0.0
          %2656 = vmatprep.subr.mxu0 0.0
          %2657 = vmatpush1.msra.mxu0 0.0
          %2658 = vmatprep.subr.mxu0 0.0
          %2659 = vmatpush1.msra.mxu0 0.0
          %2660 = vmatprep.subr.mxu0 0.0
          %2661 = vmatpush1.msra.mxu0 0.0
          %2662 = vmatprep.subr.mxu0 0.0
          %2663 = vmatpush1.msra.mxu0 0.0
          %2664 = vmatprep.subr.mxu0 0.0
          %2665 = vmatpush1.msra.mxu0 0.0
          %2666 = vmatprep.mubr.f32.mxu0 0.0
          %2667 = vmatmul.mubr.f32.gmra.mrb[0].mxu0 %v2555
          %v2668 = vpop.f32.mrb[0].mxu0
          %v2669 = vadd.f32 0.0, %v2668
          %v2670 = vpop.f32.mrb[0].mxu0
          %2671 = vmatprep.mubr.f32.mxu0 0.0
          %2672 = vmatmul.mubr.f32.gmra.mrb[0].mxu0 %v2558
          %v2673 = vpop.f32.mrb[0].mxu0
          %v2674 = vadd.f32 0.0, %v2673
          %v2675 = vpop.f32.mrb[0].mxu0
          %2676 = vmatprep.mubr.f32.mxu0 0.0
          %2677 = vmatmul.mubr.f32.gmra.mrb[0].mxu0 %v2561
          %v2678 = vpop.f32.mrb[0].mxu0
          %v2679 = vadd.f32 0.0, %v2678
          %v2680 = vpop.f32.mrb[0].mxu0
          %2681 = vmatprep.mubr.f32.mxu0 0.0
          %2682 = vmatmul.mubr.f32.gmra.mrb[0].mxu0 %v2564
          %v2683 = vpop.f32.mrb[0].mxu0
          %v2684 = vadd.f32 0.0, %v2683
          %v2685 = vpop.f32.mrb[0].mxu0
          %2686 = vmatprep.mubr.f32.mxu0 0.0
          %2687 = vmatmul.mubr.f32.gmra.mrb[0].mxu0 %v2567
          %v2688 = vpop.f32.mrb[0].mxu0
          %v2689 = vadd.f32 0.0, %v2688
          %v2690 = vpop.f32.mrb[0].mxu0
          %2691 = vmatprep.mubr.f32.mxu0 0.0
          %2692 = vmatmul.mubr.f32.gmra.mrb[0].mxu0 %v2570
          %v2693 = vpop.f32.mrb[0].mxu0
          %v2694 = vadd.f32 0.0, %v2693
          %v2695 = vpop.f32.mrb[0].mxu0
          %2696 = vmatprep.mubr.f32.mxu0 0.0
          %2697 = vmatmul.mubr.f32.gmra.mrb[0].mxu0 %v2573
          %v2698 = vpop.f32.mrb[0].mxu0
          %v2699 = vadd.f32 0.0, %v2698
          %v2700 = vpop.f32.mrb[0].mxu0
          %2701 = vmatprep.mubr.f32.mxu0 0.0
          %2702 = vmatmul.mubr.f32.gmra.mrb[0].mxu0 %v2576
          %v2703 = vpop.f32.mrb[0].mxu0
          %v2704 = vadd.f32 0.0, %v2703
          %v2705 = vpop.f32.mrb[0].mxu0
          %2706 = vmatprep.mubr.f32.mxu0 0.0
          %2707 = vmatmul.mubr.f32.gmra.mrb[0].mxu0 %v2579
          %v2708 = vpop.f32.mrb[0].mxu0
          %v2709 = vadd.f32 0.0, %v2708
          %v2710 = vpop.f32.mrb[0].mxu0
          %2711 = vmatprep.mubr.f32.mxu0 0.0
          %2712 = vmatmul.mubr.f32.gmra.mrb[0].mxu0 %v2582
          %v2713 = vpop.f32.mrb[0].mxu0
          %v2714 = vadd.f32 0.0, %v2713
          %v2715 = vpop.f32.mrb[0].mxu0
          %2716 = vmatprep.mubr.f32.mxu0 0.0
          %2717 = vmatmul.mubr.f32.gmra.mrb[0].mxu0 %v2585
          %v2718 = vpop.f32.mrb[0].mxu0
          %v2719 = vadd.f32 0.0, %v2718
          %v2720 = vpop.f32.mrb[0].mxu0
          %2721 = vmatprep.mubr.f32.mxu0 0.0
          %2722 = vmatmul.mubr.f32.gmra.mrb[0].mxu0 %v2588
          %v2723 = vpop.f32.mrb[0].mxu0
          %v2724 = vadd.f32 0.0, %v2723
          %v2725 = vpop.f32.mrb[0].mxu0
          %2726 = vmatprep.mubr.f32.mxu0 0.0
          %2727 = vmatmul.mubr.f32.gmra.mrb[0].mxu0 %v2591
          %v2728 = vpop.f32.mrb[0].mxu0
          %v2729 = vadd.f32 0.0, %v2728
          %v2730 = vpop.f32.mrb[0].mxu0
          %2731 = vmatprep.mubr.f32.mxu0 0.0
          %2732 = vmatmul.mubr.f32.gmra.mrb[0].mxu0 %v2594
          %v2733 = vpop.f32.mrb[0].mxu0
          %v2734 = vadd.f32 0.0, %v2733
          %v2735 = vpop.f32.mrb[0].mxu0
          %2736 = vmatprep.mubr.f32.mxu0 0.0
          %2737 = vmatmul.mubr.f32.gmra.mrb[0].mxu0 %v2597
          %v2738 = vpop.f32.mrb[0].mxu0
          %v2739 = vadd.f32 0.0, %v2738
          %v2740 = vpop.f32.mrb[0].mxu0
          %2741 = vmatprep.mubr.f32.mxu0 0.0
          %2742 = vmatmul.mubr.f32.gmra.mrb[0].mxu0 %v2600
          %v2743 = vpop.f32.mrb[0].mxu0
          %v2744 = vadd.f32 0.0, %v2743
          %v2745 = vpop.f32.mrb[0].mxu0
          %2746 = vdwg.mxu0
          %2763 = vrot.lane.b32.xlu0 %v2669, 124
          %v2764 = vpop.permute.xlu0 %2763
          %2765 = vrot.lane.b32.xlu0 %v2674, 124
          %v2766 = vpop.permute.xlu0 %2765
          %2767 = vrot.lane.b32.xlu0 %v2679, 124
          %v2768 = vpop.permute.xlu0 %2767
          %2769 = vrot.lane.b32.xlu0 %v2684, 124
          %v2770 = vpop.permute.xlu0 %2769
          %2771 = vrot.lane.b32.xlu0 %v2689, 124
          %v2772 = vpop.permute.xlu0 %2771
          %2773 = vrot.lane.b32.xlu0 %v2694, 124
          %v2774 = vpop.permute.xlu0 %2773
          %2775 = vrot.lane.b32.xlu0 %v2699, 124
          %v2776 = vpop.permute.xlu0 %2775
          %2777 = vrot.lane.b32.xlu0 %v2704, 124
          %v2778 = vpop.permute.xlu0 %2777
          %2779 = vrot.lane.b32.xlu0 %v2709, 124
          %v2780 = vpop.permute.xlu0 %2779
          %2781 = vrot.lane.b32.xlu0 %v2714, 124
          %v2782 = vpop.permute.xlu0 %2781
          %2783 = vrot.lane.b32.xlu0 %v2719, 124
          %v2784 = vpop.permute.xlu0 %2783
          %2785 = vrot.lane.b32.xlu0 %v2724, 124
          %v2786 = vpop.permute.xlu0 %2785
          %2787 = vrot.lane.b32.xlu0 %v2729, 124
          %v2788 = vpop.permute.xlu0 %2787
          %2789 = vrot.lane.b32.xlu0 %v2734, 124
          %v2790 = vpop.permute.xlu0 %2789
          %2791 = vrot.lane.b32.xlu0 %v2739, 124
          %v2792 = vpop.permute.xlu0 %2791
          %2793 = vrot.lane.b32.xlu0 %v2744, 124
          %v2794 = vpop.permute.xlu0 %2793
          %s2811 = scalar_lea.vmem [#allocation5], %s631
          %vm2812 = vcmask 31744
          %2813 = vst.msk [vmem:[%s2811] sm:$0xff] %vm2812, %v2764
          %2814 = vst.msk [vmem:[%s2811 + $0x8] sm:$0xff] %vm2812, %v2766
          %2815 = vst.msk [vmem:[%s2811 + $0x10] sm:$0xff] %vm2812, %v2768
          %2816 = vst.msk [vmem:[%s2811 + $0x18] sm:$0xff] %vm2812, %v2770
          %2817 = vst.msk [vmem:[%s2811 + $0x20] sm:$0xff] %vm2812, %v2772
          %2818 = vst.msk [vmem:[%s2811 + $0x28] sm:$0xff] %vm2812, %v2774
          %2819 = vst.msk [vmem:[%s2811 + $0x30] sm:$0xff] %vm2812, %v2776
          %2820 = vst.msk [vmem:[%s2811 + $0x38] sm:$0xff] %vm2812, %v2778
          %2821 = vst.msk [vmem:[%s2811 + $0x40] sm:$0xff] %vm2812, %v2780
          %2822 = vst.msk [vmem:[%s2811 + $0x48] sm:$0xff] %vm2812, %v2782
          %2823 = vst.msk [vmem:[%s2811 + $0x50] sm:$0xff] %vm2812, %v2784
          %2824 = vst.msk [vmem:[%s2811 + $0x58] sm:$0xff] %vm2812, %v2786
          %2825 = vst.msk [vmem:[%s2811 + $0x60] sm:$0xff] %vm2812, %v2788
          %2826 = vst.msk [vmem:[%s2811 + $0x68] sm:$0xff] %vm2812, %v2790
          %2827 = vst.msk [vmem:[%s2811 + $0x70] sm:$0xff] %vm2812, %v2792
          %2828 = vst.msk [vmem:[%s2811 + $0x78] sm:$0xff] %vm2812, %v2794
          %2829 = vxpose.xlu0.b32.start [1/16] %v2669, 128
          %2830 = vxpose.xlu0.b32.cont [2/16] %v2674, 128
          %2831 = vxpose.xlu0.b32.cont [3/16] %v2679, 128
          %2832 = vxpose.xlu0.b32.cont [4/16] %v2684, 128
          %2833 = vxpose.xlu0.b32.cont [5/16] %v2689, 128
          %2834 = vxpose.xlu0.b32.cont [6/16] %v2694, 128
          %2835 = vxpose.xlu0.b32.cont [7/16] %v2699, 128
          %2836 = vxpose.xlu0.b32.cont [8/16] %v2704, 128
          %2837 = vxpose.xlu0.b32.cont [9/16] %v2709, 128
          %2838 = vxpose.xlu0.b32.cont [10/16] %v2714, 128
          %2839 = vxpose.xlu0.b32.cont [11/16] %v2719, 128
          %2840 = vxpose.xlu0.b32.cont [12/16] %v2724, 128
          %2841 = vxpose.xlu0.b32.cont [13/16] %v2729, 128
          %2842 = vxpose.xlu0.b32.cont [14/16] %v2734, 128
          %2843 = vxpose.xlu0.b32.cont [15/16] %v2739, 128
          %2844 = vxpose.xlu0.b32.end [16/16] %v2744, 128
          %v2845 = vpop.trf.xlu0
          %v2846 = vpop.trf.xlu0
          %v2847 = vpop.trf.xlu0
          %v2848 = vpop.trf.xlu0
          %v2849 = vpop.trf.xlu0
          %v2850 = vpop.trf.xlu0
          %v2851 = vpop.trf.xlu0
          %v2852 = vpop.trf.xlu0
          %v2853 = vpop.trf.xlu0
          %v2854 = vpop.trf.xlu0
          %v2855 = vpop.trf.xlu0
          %v2856 = vpop.trf.xlu0
          %v2857 = vpop.trf.xlu0
          %v2858 = vpop.trf.xlu0
          %v2859 = vpop.trf.xlu0
          %v2860 = vpop.trf.xlu0
          %s2861 = sshra.s32 %s631, 7
          %s2862 = sand.u32 %s631, 127
          %s2863 = smul.addr %s2861, 8
          %s2864 = scalar_lea.vmem [#allocation6], %s2863
          %2865 = vst [vmem:[%s2864] sm:$0xff] %v2845
        $region100: #{persuasion_gnn_forward.1} parent=87 // pred_fallthru
          _
        %p2866 = scmp.eq.s32.totalorder %s35, 3
        // Predicated region
        $region101: #{persuasion_gnn_forward.1} parent=87 // pred_check
          %p2867 = pneg %p2866
        $region102: #{persuasion_gnn_forward.1} parent=87 // pred_check_branch
          %2869 = sbr.rel (%p2867) target = $region104
        $region103: #{persuasion_gnn_forward.1} parent=87 // pred_region
          %v2870 = vld [vmem:[%s626] sm:$0xff]
          %v2871 = vld [vmem:[%s626 + $0x8] sm:$0xff]
          %v2872 = vld [vmem:[%s626 + $0x10] sm:$0xff]
          %v2873 = vld [vmem:[%s626 + $0x18] sm:$0xff]
          %v2874 = vld [vmem:[%s626 + $0x20] sm:$0xff]
          %v2875 = vld [vmem:[%s626 + $0x28] sm:$0xff]
          %v2876 = vld [vmem:[%s626 + $0x30] sm:$0xff]
          %v2877 = vld [vmem:[%s626 + $0x38] sm:$0xff]
          %v2878 = vld [vmem:[%s626 + $0x40] sm:$0xff]
          %v2879 = vld [vmem:[%s626 + $0x48] sm:$0xff]
          %v2880 = vld [vmem:[%s626 + $0x50] sm:$0xff]
          %v2881 = vld [vmem:[%s626 + $0x58] sm:$0xff]
          %v2882 = vld [vmem:[%s626 + $0x60] sm:$0xff]
          %v2883 = vld [vmem:[%s626 + $0x68] sm:$0xff]
          %v2884 = vld [vmem:[%s626 + $0x70] sm:$0xff]
          %v2885 = vld [vmem:[%s626 + $0x78] sm:$0xff]
          %v2886 = vunpack.c.l.bf16 %v2870
          %v2887 = vunpack.c.h.bf16 %v2870
          %v2888 = vunpack.c.l.bf16 %v2871
          %v2889 = vunpack.c.h.bf16 %v2871
          %v2890 = vunpack.c.l.bf16 %v2872
          %v2891 = vunpack.c.h.bf16 %v2872
          %v2892 = vunpack.c.l.bf16 %v2873
          %v2893 = vunpack.c.h.bf16 %v2873
          %v2894 = vunpack.c.l.bf16 %v2874
          %v2895 = vunpack.c.h.bf16 %v2874
          %v2896 = vunpack.c.l.bf16 %v2875
          %v2897 = vunpack.c.h.bf16 %v2875
          %v2898 = vunpack.c.l.bf16 %v2876
          %v2899 = vunpack.c.h.bf16 %v2876
          %v2900 = vunpack.c.l.bf16 %v2877
          %v2901 = vunpack.c.h.bf16 %v2877
          %v2902 = vunpack.c.l.bf16 %v2878
          %v2903 = vunpack.c.h.bf16 %v2878
          %v2904 = vunpack.c.l.bf16 %v2879
          %v2905 = vunpack.c.h.bf16 %v2879
          %v2906 = vunpack.c.l.bf16 %v2880
          %v2907 = vunpack.c.h.bf16 %v2880
          %v2908 = vunpack.c.l.bf16 %v2881
          %v2909 = vunpack.c.h.bf16 %v2881
          %v2910 = vunpack.c.l.bf16 %v2882
          %v2911 = vunpack.c.h.bf16 %v2882
          %v2912 = vunpack.c.l.bf16 %v2883
          %v2913 = vunpack.c.h.bf16 %v2883
          %v2914 = vunpack.c.l.bf16 %v2884
          %v2915 = vunpack.c.h.bf16 %v2884
          %v2916 = vunpack.c.l.bf16 %v2885
          %v2917 = vunpack.c.h.bf16 %v2885
          %v2918 = vld [vmem:[#allocation4] sm:$0xff]
          %v2919 = vld [vmem:[#allocation4 + $0x8] sm:$0xff]
          %v2920 = vld [vmem:[#allocation4 + $0x10] sm:$0xff]
          %v2921 = vld [vmem:[#allocation4 + $0x18] sm:$0xff]
          %v2922 = vld [vmem:[#allocation4 + $0x20] sm:$0xff]
          %v2923 = vld [vmem:[#allocation4 + $0x28] sm:$0xff]
          %v2924 = vld [vmem:[#allocation4 + $0x30] sm:$0xff]
          %v2925 = vld [vmem:[#allocation4 + $0x38] sm:$0xff]
          %v2926 = vld [vmem:[#allocation4 + $0x40] sm:$0xff]
          %v2927 = vld [vmem:[#allocation4 + $0x48] sm:$0xff]
          %v2928 = vld [vmem:[#allocation4 + $0x50] sm:$0xff]
          %v2929 = vld [vmem:[#allocation4 + $0x58] sm:$0xff]
          %v2930 = vld [vmem:[#allocation4 + $0x60] sm:$0xff]
          %v2931 = vld [vmem:[#allocation4 + $0x68] sm:$0xff]
          %v2932 = vld [vmem:[#allocation4 + $0x70] sm:$0xff]
          %v2933 = vld [vmem:[#allocation4 + $0x78] sm:$0xff]
          %s2934 = scalar_lea.vmem [#allocation5], %s631
          %v2935 = vld [vmem:[%s2934] sm:$0xff]
          %v2936 = vld [vmem:[%s2934 + $0x8] sm:$0xff]
          %v2937 = vld [vmem:[%s2934 + $0x10] sm:$0xff]
          %v2938 = vld [vmem:[%s2934 + $0x18] sm:$0xff]
          %v2939 = vld [vmem:[%s2934 + $0x20] sm:$0xff]
          %v2940 = vld [vmem:[%s2934 + $0x28] sm:$0xff]
          %v2941 = vld [vmem:[%s2934 + $0x30] sm:$0xff]
          %v2942 = vld [vmem:[%s2934 + $0x38] sm:$0xff]
          %v2943 = vld [vmem:[%s2934 + $0x40] sm:$0xff]
          %v2944 = vld [vmem:[%s2934 + $0x48] sm:$0xff]
          %v2945 = vld [vmem:[%s2934 + $0x50] sm:$0xff]
          %v2946 = vld [vmem:[%s2934 + $0x58] sm:$0xff]
          %v2947 = vld [vmem:[%s2934 + $0x60] sm:$0xff]
          %v2948 = vld [vmem:[%s2934 + $0x68] sm:$0xff]
          %v2949 = vld [vmem:[%s2934 + $0x70] sm:$0xff]
          %v2950 = vld [vmem:[%s2934 + $0x78] sm:$0xff]
          %v2951 = vld [vmem:[#allocation6] sm:$0xff]
          %v2952 = vld [vmem:[#allocation6 + $0x8] sm:$0xff]
          %2954 = vset.pattern.permute.xlu0 0
          %2955 = vperm.xlu0 %2954, %v2935
          %v2956 = vpop.permute.xlu0 %2955
          %2959 = vset.pattern.permute.xlu0 0
          %2960 = vperm.xlu0 %2959, %v2936
          %v2961 = vpop.permute.xlu0 %2960
          %2964 = vset.pattern.permute.xlu0 0
          %2965 = vperm.xlu0 %2964, %v2937
          %v2966 = vpop.permute.xlu0 %2965
          %2969 = vset.pattern.permute.xlu0 0
          %2970 = vperm.xlu0 %2969, %v2938
          %v2971 = vpop.permute.xlu0 %2970
          %2974 = vset.pattern.permute.xlu0 0
          %2975 = vperm.xlu0 %2974, %v2939
          %v2976 = vpop.permute.xlu0 %2975
          %2979 = vset.pattern.permute.xlu0 0
          %2980 = vperm.xlu0 %2979, %v2940
          %v2981 = vpop.permute.xlu0 %2980
          %2984 = vset.pattern.permute.xlu0 0
          %2985 = vperm.xlu0 %2984, %v2941
          %v2986 = vpop.permute.xlu0 %2985
          %2989 = vset.pattern.permute.xlu0 0
          %2990 = vperm.xlu0 %2989, %v2942
          %v2991 = vpop.permute.xlu0 %2990
          %2994 = vset.pattern.permute.xlu0 0
          %2995 = vperm.xlu0 %2994, %v2943
          %v2996 = vpop.permute.xlu0 %2995
          %2999 = vset.pattern.permute.xlu0 0
          %3000 = vperm.xlu0 %2999, %v2944
          %v3001 = vpop.permute.xlu0 %3000
          %3004 = vset.pattern.permute.xlu0 0
          %3005 = vperm.xlu0 %3004, %v2945
          %v3006 = vpop.permute.xlu0 %3005
          %3009 = vset.pattern.permute.xlu0 0
          %3010 = vperm.xlu0 %3009, %v2946
          %v3011 = vpop.permute.xlu0 %3010
          %3014 = vset.pattern.permute.xlu0 0
          %3015 = vperm.xlu0 %3014, %v2947
          %v3016 = vpop.permute.xlu0 %3015
          %3019 = vset.pattern.permute.xlu0 0
          %3020 = vperm.xlu0 %3019, %v2948
          %v3021 = vpop.permute.xlu0 %3020
          %3024 = vset.pattern.permute.xlu0 0
          %3025 = vperm.xlu0 %3024, %v2949
          %v3026 = vpop.permute.xlu0 %3025
          %3029 = vset.pattern.permute.xlu0 0
          %3030 = vperm.xlu0 %3029, %v2950
          %v3031 = vpop.permute.xlu0 %3030
          %v3033 = vlaneseq
          %v3034 = vshrl.u32 %v3033, 7
          %v3035 = vsub.s32 0, %v3034
          %v3036 = vrot.slane %v2951, %v3035
          %v3037 = vlaneseq
          %v3038 = vshrl.u32 %v3037, 7
          %v3039 = vsub.s32 0, %v3038
          %v3040 = vrot.slane %v2952, %v3039
          %v3041 = vadd.f32 %v2956, %v3036
          %v3042 = vadd.f32 %v2956, %v3040
          %v3043 = vadd.f32 %v2961, %v3036
          %v3044 = vadd.f32 %v2961, %v3040
          %v3045 = vadd.f32 %v2966, %v3036
          %v3046 = vadd.f32 %v2966, %v3040
          %v3047 = vadd.f32 %v2971, %v3036
          %v3048 = vadd.f32 %v2971, %v3040
          %v3049 = vadd.f32 %v2976, %v3036
          %v3050 = vadd.f32 %v2976, %v3040
          %v3051 = vadd.f32 %v2981, %v3036
          %v3052 = vadd.f32 %v2981, %v3040
          %v3053 = vadd.f32 %v2986, %v3036
          %v3054 = vadd.f32 %v2986, %v3040
          %v3055 = vadd.f32 %v2991, %v3036
          %v3056 = vadd.f32 %v2991, %v3040
          %v3057 = vadd.f32 %v2996, %v3036
          %v3058 = vadd.f32 %v2996, %v3040
          %v3059 = vadd.f32 %v3001, %v3036
          %v3060 = vadd.f32 %v3001, %v3040
          %v3061 = vadd.f32 %v3006, %v3036
          %v3062 = vadd.f32 %v3006, %v3040
          %v3063 = vadd.f32 %v3011, %v3036
          %v3064 = vadd.f32 %v3011, %v3040
          %v3065 = vadd.f32 %v3016, %v3036
          %v3066 = vadd.f32 %v3016, %v3040
          %v3067 = vadd.f32 %v3021, %v3036
          %v3068 = vadd.f32 %v3021, %v3040
          %v3069 = vadd.f32 %v3026, %v3036
          %v3070 = vadd.f32 %v3026, %v3040
          %v3071 = vadd.f32 %v3031, %v3036
          %v3072 = vadd.f32 %v3031, %v3040
          %v3073 = vmul.f32 %v3041, 0.2
          %v3074 = vmul.f32 %v3042, 0.2
          %v3075 = vmul.f32 %v3043, 0.2
          %v3076 = vmul.f32 %v3044, 0.2
          %v3077 = vmul.f32 %v3045, 0.2
          %v3078 = vmul.f32 %v3046, 0.2
          %v3079 = vmul.f32 %v3047, 0.2
          %v3080 = vmul.f32 %v3048, 0.2
          %v3081 = vmul.f32 %v3049, 0.2
          %v3082 = vmul.f32 %v3050, 0.2
          %v3083 = vmul.f32 %v3051, 0.2
          %v3084 = vmul.f32 %v3052, 0.2
          %v3085 = vmul.f32 %v3053, 0.2
          %v3086 = vmul.f32 %v3054, 0.2
          %v3087 = vmul.f32 %v3055, 0.2
          %v3088 = vmul.f32 %v3056, 0.2
          %v3089 = vmul.f32 %v3057, 0.2
          %v3090 = vmul.f32 %v3058, 0.2
          %v3091 = vmul.f32 %v3059, 0.2
          %v3092 = vmul.f32 %v3060, 0.2
          %v3093 = vmul.f32 %v3061, 0.2
          %v3094 = vmul.f32 %v3062, 0.2
          %v3095 = vmul.f32 %v3063, 0.2
          %v3096 = vmul.f32 %v3064, 0.2
          %v3097 = vmul.f32 %v3065, 0.2
          %v3098 = vmul.f32 %v3066, 0.2
          %v3099 = vmul.f32 %v3067, 0.2
          %v3100 = vmul.f32 %v3068, 0.2
          %v3101 = vmul.f32 %v3069, 0.2
          %v3102 = vmul.f32 %v3070, 0.2
          %v3103 = vmul.f32 %v3071, 0.2
          %v3104 = vmul.f32 %v3072, 0.2
          %v3105 = vmax.f32 %v3041, %v3073
          %v3106 = vmax.f32 %v3042, %v3074
          %v3107 = vmax.f32 %v3043, %v3075
          %v3108 = vmax.f32 %v3044, %v3076
          %v3109 = vmax.f32 %v3045, %v3077
          %v3110 = vmax.f32 %v3046, %v3078
          %v3111 = vmax.f32 %v3047, %v3079
          %v3112 = vmax.f32 %v3048, %v3080
          %v3113 = vmax.f32 %v3049, %v3081
          %v3114 = vmax.f32 %v3050, %v3082
          %v3115 = vmax.f32 %v3051, %v3083
          %v3116 = vmax.f32 %v3052, %v3084
          %v3117 = vmax.f32 %v3053, %v3085
          %v3118 = vmax.f32 %v3054, %v3086
          %v3119 = vmax.f32 %v3055, %v3087
          %v3120 = vmax.f32 %v3056, %v3088
          %v3121 = vmax.f32 %v3057, %v3089
          %v3122 = vmax.f32 %v3058, %v3090
          %v3123 = vmax.f32 %v3059, %v3091
          %v3124 = vmax.f32 %v3060, %v3092
          %v3125 = vmax.f32 %v3061, %v3093
          %v3126 = vmax.f32 %v3062, %v3094
          %v3127 = vmax.f32 %v3063, %v3095
          %v3128 = vmax.f32 %v3064, %v3096
          %v3129 = vmax.f32 %v3065, %v3097
          %v3130 = vmax.f32 %v3066, %v3098
          %v3131 = vmax.f32 %v3067, %v3099
          %v3132 = vmax.f32 %v3068, %v3100
          %v3133 = vmax.f32 %v3069, %v3101
          %v3134 = vmax.f32 %v3070, %v3102
          %v3135 = vmax.f32 %v3071, %v3103
          %v3136 = vmax.f32 %v3072, %v3104
          %v3137 = vadd.f32 %v3105, %v2886
          %v3138 = vadd.f32 %v3106, %v2887
          %v3139 = vadd.f32 %v3107, %v2888
          %v3140 = vadd.f32 %v3108, %v2889
          %v3141 = vadd.f32 %v3109, %v2890
          %v3142 = vadd.f32 %v3110, %v2891
          %v3143 = vadd.f32 %v3111, %v2892
          %v3144 = vadd.f32 %v3112, %v2893
          %v3145 = vadd.f32 %v3113, %v2894
          %v3146 = vadd.f32 %v3114, %v2895
          %v3147 = vadd.f32 %v3115, %v2896
          %v3148 = vadd.f32 %v3116, %v2897
          %v3149 = vadd.f32 %v3117, %v2898
          %v3150 = vadd.f32 %v3118, %v2899
          %v3151 = vadd.f32 %v3119, %v2900
          %v3152 = vadd.f32 %v3120, %v2901
          %v3153 = vadd.f32 %v3121, %v2902
          %v3154 = vadd.f32 %v3122, %v2903
          %v3155 = vadd.f32 %v3123, %v2904
          %v3156 = vadd.f32 %v3124, %v2905
          %v3157 = vadd.f32 %v3125, %v2906
          %v3158 = vadd.f32 %v3126, %v2907
          %v3159 = vadd.f32 %v3127, %v2908
          %v3160 = vadd.f32 %v3128, %v2909
          %v3161 = vadd.f32 %v3129, %v2910
          %v3162 = vadd.f32 %v3130, %v2911
          %v3163 = vadd.f32 %v3131, %v2912
          %v3164 = vadd.f32 %v3132, %v2913
          %v3165 = vadd.f32 %v3133, %v2914
          %v3166 = vadd.f32 %v3134, %v2915
          %v3167 = vadd.f32 %v3135, %v2916
          %v3168 = vadd.f32 %v3136, %v2917
          %v3169 = vmax.f32 %v3137, %v3138
          %3170 = vmax.xlane.f32.xlu0 %v3169
          %v3171 = vpop.xlane.xlu0 %3170
          %v3172 = vmax.f32 %v3139, %v3140
          %3173 = vmax.xlane.f32.xlu0 %v3172
          %v3174 = vpop.xlane.xlu0 %3173
          %v3175 = vmax.f32 %v3141, %v3142
          %3176 = vmax.xlane.f32.xlu0 %v3175
          %v3177 = vpop.xlane.xlu0 %3176
          %v3178 = vmax.f32 %v3143, %v3144
          %3179 = vmax.xlane.f32.xlu0 %v3178
          %v3180 = vpop.xlane.xlu0 %3179
          %v3181 = vmax.f32 %v3145, %v3146
          %3182 = vmax.xlane.f32.xlu0 %v3181
          %v3183 = vpop.xlane.xlu0 %3182
          %v3184 = vmax.f32 %v3147, %v3148
          %3185 = vmax.xlane.f32.xlu0 %v3184
          %v3186 = vpop.xlane.xlu0 %3185
          %v3187 = vmax.f32 %v3149, %v3150
          %3188 = vmax.xlane.f32.xlu0 %v3187
          %v3189 = vpop.xlane.xlu0 %3188
          %v3190 = vmax.f32 %v3151, %v3152
          %3191 = vmax.xlane.f32.xlu0 %v3190
          %v3192 = vpop.xlane.xlu0 %3191
          %v3193 = vmax.f32 %v3153, %v3154
          %3194 = vmax.xlane.f32.xlu0 %v3193
          %v3195 = vpop.xlane.xlu0 %3194
          %v3196 = vmax.f32 %v3155, %v3156
          %3197 = vmax.xlane.f32.xlu0 %v3196
          %v3198 = vpop.xlane.xlu0 %3197
          %v3199 = vmax.f32 %v3157, %v3158
          %3200 = vmax.xlane.f32.xlu0 %v3199
          %v3201 = vpop.xlane.xlu0 %3200
          %v3202 = vmax.f32 %v3159, %v3160
          %3203 = vmax.xlane.f32.xlu0 %v3202
          %v3204 = vpop.xlane.xlu0 %3203
          %v3205 = vmax.f32 %v3161, %v3162
          %3206 = vmax.xlane.f32.xlu0 %v3205
          %v3207 = vpop.xlane.xlu0 %3206
          %v3208 = vmax.f32 %v3163, %v3164
          %3209 = vmax.xlane.f32.xlu0 %v3208
          %v3210 = vpop.xlane.xlu0 %3209
          %v3211 = vmax.f32 %v3165, %v3166
          %3212 = vmax.xlane.f32.xlu0 %v3211
          %v3213 = vpop.xlane.xlu0 %3212
          %v3214 = vmax.f32 %v3167, %v3168
          %3215 = vmax.xlane.f32.xlu0 %v3214
          %v3216 = vpop.xlane.xlu0 %3215
          %v3217 = vsub.f32 %v3137, %v3171
          %v3218 = vsub.f32 %v3138, %v3171
          %v3219 = vsub.f32 %v3139, %v3174
          %v3220 = vsub.f32 %v3140, %v3174
          %v3221 = vsub.f32 %v3141, %v3177
          %v3222 = vsub.f32 %v3142, %v3177
          %v3223 = vsub.f32 %v3143, %v3180
          %v3224 = vsub.f32 %v3144, %v3180
          %v3225 = vsub.f32 %v3145, %v3183
          %v3226 = vsub.f32 %v3146, %v3183
          %v3227 = vsub.f32 %v3147, %v3186
          %v3228 = vsub.f32 %v3148, %v3186
          %v3229 = vsub.f32 %v3149, %v3189
          %v3230 = vsub.f32 %v3150, %v3189
          %v3231 = vsub.f32 %v3151, %v3192
          %v3232 = vsub.f32 %v3152, %v3192
          %v3233 = vsub.f32 %v3153, %v3195
          %v3234 = vsub.f32 %v3154, %v3195
          %v3235 = vsub.f32 %v3155, %v3198
          %v3236 = vsub.f32 %v3156, %v3198
          %v3237 = vsub.f32 %v3157, %v3201
          %v3238 = vsub.f32 %v3158, %v3201
          %v3239 = vsub.f32 %v3159, %v3204
          %v3240 = vsub.f32 %v3160, %v3204
          %v3241 = vsub.f32 %v3161, %v3207
          %v3242 = vsub.f32 %v3162, %v3207
          %v3243 = vsub.f32 %v3163, %v3210
          %v3244 = vsub.f32 %v3164, %v3210
          %v3245 = vsub.f32 %v3165, %v3213
          %v3246 = vsub.f32 %v3166, %v3213
          %v3247 = vsub.f32 %v3167, %v3216
          %v3248 = vsub.f32 %v3168, %v3216
          %v3249 = vmul.f32 %v3217, 1.442695
          %v3250 = vpow.pop %v3249
          %v3251 = vmul.f32 %v3218, 1.442695
          %v3252 = vpow.pop %v3251
          %v3253 = vmul.f32 %v3219, 1.442695
          %v3254 = vpow.pop %v3253
          %v3255 = vmul.f32 %v3220, 1.442695
          %v3256 = vpow.pop %v3255
          %v3257 = vmul.f32 %v3221, 1.442695
          %v3258 = vpow.pop %v3257
          %v3259 = vmul.f32 %v3222, 1.442695
          %v3260 = vpow.pop %v3259
          %v3261 = vmul.f32 %v3223, 1.442695
          %v3262 = vpow.pop %v3261
          %v3263 = vmul.f32 %v3224, 1.442695
          %v3264 = vpow.pop %v3263
          %v3265 = vmul.f32 %v3225, 1.442695
          %v3266 = vpow.pop %v3265
          %v3267 = vmul.f32 %v3226, 1.442695
          %v3268 = vpow.pop %v3267
          %v3269 = vmul.f32 %v3227, 1.442695
          %v3270 = vpow.pop %v3269
          %v3271 = vmul.f32 %v3228, 1.442695
          %v3272 = vpow.pop %v3271
          %v3273 = vmul.f32 %v3229, 1.442695
          %v3274 = vpow.pop %v3273
          %v3275 = vmul.f32 %v3230, 1.442695
          %v3276 = vpow.pop %v3275
          %v3277 = vmul.f32 %v3231, 1.442695
          %v3278 = vpow.pop %v3277
          %v3279 = vmul.f32 %v3232, 1.442695
          %v3280 = vpow.pop %v3279
          %v3281 = vmul.f32 %v3233, 1.442695
          %v3282 = vpow.pop %v3281
          %v3283 = vmul.f32 %v3234, 1.442695
          %v3284 = vpow.pop %v3283
          %v3285 = vmul.f32 %v3235, 1.442695
          %v3286 = vpow.pop %v3285
          %v3287 = vmul.f32 %v3236, 1.442695
          %v3288 = vpow.pop %v3287
          %v3289 = vmul.f32 %v3237, 1.442695
          %v3290 = vpow.pop %v3289
          %v3291 = vmul.f32 %v3238, 1.442695
          %v3292 = vpow.pop %v3291
          %v3293 = vmul.f32 %v3239, 1.442695
          %v3294 = vpow.pop %v3293
          %v3295 = vmul.f32 %v3240, 1.442695
          %v3296 = vpow.pop %v3295
          %v3297 = vmul.f32 %v3241, 1.442695
          %v3298 = vpow.pop %v3297
          %v3299 = vmul.f32 %v3242, 1.442695
          %v3300 = vpow.pop %v3299
          %v3301 = vmul.f32 %v3243, 1.442695
          %v3302 = vpow.pop %v3301
          %v3303 = vmul.f32 %v3244, 1.442695
          %v3304 = vpow.pop %v3303
          %v3305 = vmul.f32 %v3245, 1.442695
          %v3306 = vpow.pop %v3305
          %v3307 = vmul.f32 %v3246, 1.442695
          %v3308 = vpow.pop %v3307
          %v3309 = vmul.f32 %v3247, 1.442695
          %v3310 = vpow.pop %v3309
          %v3311 = vmul.f32 %v3248, 1.442695
          %v3312 = vpow.pop %v3311
          %v3313 = vadd.f32 %v3250, %v3252
          %3314 = vadd.xlane.f32.xlu0 %v3313
          %v3315 = vpop.xlane.xlu0 %3314
          %v3316 = vadd.f32 %v3254, %v3256
          %3317 = vadd.xlane.f32.xlu0 %v3316
          %v3318 = vpop.xlane.xlu0 %3317
          %v3319 = vadd.f32 %v3258, %v3260
          %3320 = vadd.xlane.f32.xlu0 %v3319
          %v3321 = vpop.xlane.xlu0 %3320
          %v3322 = vadd.f32 %v3262, %v3264
          %3323 = vadd.xlane.f32.xlu0 %v3322
          %v3324 = vpop.xlane.xlu0 %3323
          %v3325 = vadd.f32 %v3266, %v3268
          %3326 = vadd.xlane.f32.xlu0 %v3325
          %v3327 = vpop.xlane.xlu0 %3326
          %v3328 = vadd.f32 %v3270, %v3272
          %3329 = vadd.xlane.f32.xlu0 %v3328
          %v3330 = vpop.xlane.xlu0 %3329
          %v3331 = vadd.f32 %v3274, %v3276
          %3332 = vadd.xlane.f32.xlu0 %v3331
          %v3333 = vpop.xlane.xlu0 %3332
          %v3334 = vadd.f32 %v3278, %v3280
          %3335 = vadd.xlane.f32.xlu0 %v3334
          %v3336 = vpop.xlane.xlu0 %3335
          %v3337 = vadd.f32 %v3282, %v3284
          %3338 = vadd.xlane.f32.xlu0 %v3337
          %v3339 = vpop.xlane.xlu0 %3338
          %v3340 = vadd.f32 %v3286, %v3288
          %3341 = vadd.xlane.f32.xlu0 %v3340
          %v3342 = vpop.xlane.xlu0 %3341
          %v3343 = vadd.f32 %v3290, %v3292
          %3344 = vadd.xlane.f32.xlu0 %v3343
          %v3345 = vpop.xlane.xlu0 %3344
          %v3346 = vadd.f32 %v3294, %v3296
          %3347 = vadd.xlane.f32.xlu0 %v3346
          %v3348 = vpop.xlane.xlu0 %3347
          %v3349 = vadd.f32 %v3298, %v3300
          %3350 = vadd.xlane.f32.xlu0 %v3349
          %v3351 = vpop.xlane.xlu0 %3350
          %v3352 = vadd.f32 %v3302, %v3304
          %3353 = vadd.xlane.f32.xlu0 %v3352
          %v3354 = vpop.xlane.xlu0 %3353
          %v3355 = vadd.f32 %v3306, %v3308
          %3356 = vadd.xlane.f32.xlu0 %v3355
          %v3357 = vpop.xlane.xlu0 %3356
          %v3358 = vadd.f32 %v3310, %v3312
          %3359 = vadd.xlane.f32.xlu0 %v3358
          %v3360 = vpop.xlane.xlu0 %3359
          %v3361 = vrcp.pop %v3315
          %v3362 = vrcp.pop %v3318
          %v3363 = vrcp.pop %v3321
          %v3364 = vrcp.pop %v3324
          %v3365 = vrcp.pop %v3327
          %v3366 = vrcp.pop %v3330
          %v3367 = vrcp.pop %v3333
          %v3368 = vrcp.pop %v3336
          %v3369 = vrcp.pop %v3339
          %v3370 = vrcp.pop %v3342
          %v3371 = vrcp.pop %v3345
          %v3372 = vrcp.pop %v3348
          %v3373 = vrcp.pop %v3351
          %v3374 = vrcp.pop %v3354
          %v3375 = vrcp.pop %v3357
          %v3376 = vrcp.pop %v3360
          %v3377 = vpack.c.bf16 %v3254, %v3250
          %v3378 = vpack.c.bf16 %v3256, %v3252
          %v3379 = vpack.c.bf16 %v3262, %v3258
          %v3380 = vpack.c.bf16 %v3264, %v3260
          %v3381 = vpack.c.bf16 %v3270, %v3266
          %v3382 = vpack.c.bf16 %v3272, %v3268
          %v3383 = vpack.c.bf16 %v3278, %v3274
          %v3384 = vpack.c.bf16 %v3280, %v3276
          %v3385 = vpack.c.bf16 %v3286, %v3282
          %v3386 = vpack.c.bf16 %v3288, %v3284
          %v3387 = vpack.c.bf16 %v3294, %v3290
          %v3388 = vpack.c.bf16 %v3296, %v3292
          %v3389 = vpack.c.bf16 %v3302, %v3298
          %v3390 = vpack.c.bf16 %v3304, %v3300
          %v3391 = vpack.c.bf16 %v3310, %v3306
          %v3392 = vpack.c.bf16 %v3312, %v3308
          %3393 = vmatprep.subr.bf16.mxu0 0
          %3394 = vmatpush1.bf16.msra.mxu0 %v2918
          %3395 = vmatprep.subr.bf16.mxu0 0
          %3396 = vmatpush1.bf16.msra.mxu0 %v2919
          %3397 = vmatprep.subr.bf16.mxu0 0
          %3398 = vmatpush1.bf16.msra.mxu0 %v2920
          %3399 = vmatprep.subr.bf16.mxu0 0
          %3400 = vmatpush1.bf16.msra.mxu0 %v2921
          %3401 = vmatprep.subr.bf16.mxu0 0
          %3402 = vmatpush1.bf16.msra.mxu0 %v2922
          %3403 = vmatprep.subr.bf16.mxu0 0
          %3404 = vmatpush1.bf16.msra.mxu0 %v2923
          %3405 = vmatprep.subr.bf16.mxu0 0
          %3406 = vmatpush1.bf16.msra.mxu0 %v2924
          %3407 = vmatprep.subr.bf16.mxu0 0
          %3408 = vmatpush1.bf16.msra.mxu0 %v2925
          %3409 = vmatprep.subr.bf16.mxu0 0
          %3410 = vmatpush1.bf16.msra.mxu0 %v2926
          %3411 = vmatprep.subr.bf16.mxu0 0
          %3412 = vmatpush1.bf16.msra.mxu0 %v2927
          %3413 = vmatprep.subr.bf16.mxu0 0
          %3414 = vmatpush1.bf16.msra.mxu0 %v2928
          %3415 = vmatprep.subr.bf16.mxu0 0
          %3416 = vmatpush1.bf16.msra.mxu0 %v2929
          %3417 = vmatprep.subr.bf16.mxu0 0
          %3418 = vmatpush1.bf16.msra.mxu0 %v2930
          %3419 = vmatprep.subr.bf16.mxu0 0
          %3420 = vmatpush1.bf16.msra.mxu0 %v2931
          %3421 = vmatprep.subr.bf16.mxu0 0
          %3422 = vmatpush1.bf16.msra.mxu0 %v2932
          %3423 = vmatprep.subr.bf16.mxu0 0
          %3424 = vmatpush1.bf16.msra.mxu0 %v2933
          %3425 = vmatprep.mubr.bf16.mxu0 %v3378
          %3426 = vmatmul.mubr.bf16.gmra.mrb[0].mxu0 %v3377
          %v3427 = vpop.f32.mrb[0].mxu0
          %v3428 = vadd.f32 0.0, %v3427
          %v3429 = vpop.f32.mrb[0].mxu0
          %v3430 = vpop.f32.mrb[0].mxu0
          %v3431 = vadd.f32 0.0, %v3430
          %v3432 = vpop.f32.mrb[0].mxu0
          %3433 = vmatprep.mubr.bf16.mxu0 %v3380
          %3434 = vmatmul.mubr.bf16.gmra.mrb[0].mxu0 %v3379
          %v3435 = vpop.f32.mrb[0].mxu0
          %v3436 = vadd.f32 0.0, %v3435
          %v3437 = vpop.f32.mrb[0].mxu0
          %v3438 = vpop.f32.mrb[0].mxu0
          %v3439 = vadd.f32 0.0, %v3438
          %v3440 = vpop.f32.mrb[0].mxu0
          %3441 = vmatprep.mubr.bf16.mxu0 %v3382
          %3442 = vmatmul.mubr.bf16.gmra.mrb[0].mxu0 %v3381
          %v3443 = vpop.f32.mrb[0].mxu0
          %v3444 = vadd.f32 0.0, %v3443
          %v3445 = vpop.f32.mrb[0].mxu0
          %v3446 = vpop.f32.mrb[0].mxu0
          %v3447 = vadd.f32 0.0, %v3446
          %v3448 = vpop.f32.mrb[0].mxu0
          %3449 = vmatprep.mubr.bf16.mxu0 %v3384
          %3450 = vmatmul.mubr.bf16.gmra.mrb[0].mxu0 %v3383
          %v3451 = vpop.f32.mrb[0].mxu0
          %v3452 = vadd.f32 0.0, %v3451
          %v3453 = vpop.f32.mrb[0].mxu0
          %v3454 = vpop.f32.mrb[0].mxu0
          %v3455 = vadd.f32 0.0, %v3454
          %v3456 = vpop.f32.mrb[0].mxu0
          %3457 = vmatprep.mubr.bf16.mxu0 %v3386
          %3458 = vmatmul.mubr.bf16.gmra.mrb[0].mxu0 %v3385
          %v3459 = vpop.f32.mrb[0].mxu0
          %v3460 = vadd.f32 0.0, %v3459
          %v3461 = vpop.f32.mrb[0].mxu0
          %v3462 = vpop.f32.mrb[0].mxu0
          %v3463 = vadd.f32 0.0, %v3462
          %v3464 = vpop.f32.mrb[0].mxu0
          %3465 = vmatprep.mubr.bf16.mxu0 %v3388
          %3466 = vmatmul.mubr.bf16.gmra.mrb[0].mxu0 %v3387
          %v3467 = vpop.f32.mrb[0].mxu0
          %v3468 = vadd.f32 0.0, %v3467
          %v3469 = vpop.f32.mrb[0].mxu0
          %v3470 = vpop.f32.mrb[0].mxu0
          %v3471 = vadd.f32 0.0, %v3470
          %v3472 = vpop.f32.mrb[0].mxu0
          %3473 = vmatprep.mubr.bf16.mxu0 %v3390
          %3474 = vmatmul.mubr.bf16.gmra.mrb[0].mxu0 %v3389
          %v3475 = vpop.f32.mrb[0].mxu0
          %v3476 = vadd.f32 0.0, %v3475
          %v3477 = vpop.f32.mrb[0].mxu0
          %v3478 = vpop.f32.mrb[0].mxu0
          %v3479 = vadd.f32 0.0, %v3478
          %v3480 = vpop.f32.mrb[0].mxu0
          %3481 = vmatprep.mubr.bf16.mxu0 %v3392
          %3482 = vmatmul.mubr.bf16.gmra.mrb[0].mxu0 %v3391
          %v3483 = vpop.f32.mrb[0].mxu0
          %v3484 = vadd.f32 0.0, %v3483
          %v3485 = vpop.f32.mrb[0].mxu0
          %v3486 = vpop.f32.mrb[0].mxu0
          %v3487 = vadd.f32 0.0, %v3486
          %v3488 = vpop.f32.mrb[0].mxu0
          %3489 = vdwg.mxu0
          %v3490 = vmul.f32 %v3428, %v3361
          %v3491 = vmul.f32 %v3431, %v3362
          %v3492 = vmul.f32 %v3436, %v3363
          %v3493 = vmul.f32 %v3439, %v3364
          %v3494 = vmul.f32 %v3444, %v3365
          %v3495 = vmul.f32 %v3447, %v3366
          %v3496 = vmul.f32 %v3452, %v3367
          %v3497 = vmul.f32 %v3455, %v3368
          %v3498 = vmul.f32 %v3460, %v3369
          %v3499 = vmul.f32 %v3463, %v3370
          %v3500 = vmul.f32 %v3468, %v3371
          %v3501 = vmul.f32 %v3471, %v3372
          %v3502 = vmul.f32 %v3476, %v3373
          %v3503 = vmul.f32 %v3479, %v3374
          %v3504 = vmul.f32 %v3484, %v3375
          %v3505 = vmul.f32 %v3487, %v3376
          %v3506 = vadd.f32 %v3490, 0.0
          %v3507 = vadd.f32 %v3491, 0.0
          %v3508 = vadd.f32 %v3492, 0.0
          %v3509 = vadd.f32 %v3493, 0.0
          %v3510 = vadd.f32 %v3494, 0.0
          %v3511 = vadd.f32 %v3495, 0.0
          %v3512 = vadd.f32 %v3496, 0.0
          %v3513 = vadd.f32 %v3497, 0.0
          %v3514 = vadd.f32 %v3498, 0.0
          %v3515 = vadd.f32 %v3499, 0.0
          %v3516 = vadd.f32 %v3500, 0.0
          %v3517 = vadd.f32 %v3501, 0.0
          %v3518 = vadd.f32 %v3502, 0.0
          %v3519 = vadd.f32 %v3503, 0.0
          %v3520 = vadd.f32 %v3504, 0.0
          %v3521 = vadd.f32 %v3505, 0.0
          %3522 = vset.pattern.permute.xlu0 1
          %3523 = vperm.xlu0 %3522, %v2935
          %v3524 = vpop.permute.xlu0 %3523
          %3526 = vset.pattern.permute.xlu0 1
          %3527 = vperm.xlu0 %3526, %v2936
          %v3528 = vpop.permute.xlu0 %3527
          %3530 = vset.pattern.permute.xlu0 1
          %3531 = vperm.xlu0 %3530, %v2937
          %v3532 = vpop.permute.xlu0 %3531
          %3534 = vset.pattern.permute.xlu0 1
          %3535 = vperm.xlu0 %3534, %v2938
          %v3536 = vpop.permute.xlu0 %3535
          %3538 = vset.pattern.permute.xlu0 1
          %3539 = vperm.xlu0 %3538, %v2939
          %v3540 = vpop.permute.xlu0 %3539
          %3542 = vset.pattern.permute.xlu0 1
          %3543 = vperm.xlu0 %3542, %v2940
          %v3544 = vpop.permute.xlu0 %3543
          %3546 = vset.pattern.permute.xlu0 1
          %3547 = vperm.xlu0 %3546, %v2941
          %v3548 = vpop.permute.xlu0 %3547
          %3550 = vset.pattern.permute.xlu0 1
          %3551 = vperm.xlu0 %3550, %v2942
          %v3552 = vpop.permute.xlu0 %3551
          %3554 = vset.pattern.permute.xlu0 1
          %3555 = vperm.xlu0 %3554, %v2943
          %v3556 = vpop.permute.xlu0 %3555
          %3558 = vset.pattern.permute.xlu0 1
          %3559 = vperm.xlu0 %3558, %v2944
          %v3560 = vpop.permute.xlu0 %3559
          %3562 = vset.pattern.permute.xlu0 1
          %3563 = vperm.xlu0 %3562, %v2945
          %v3564 = vpop.permute.xlu0 %3563
          %3566 = vset.pattern.permute.xlu0 1
          %3567 = vperm.xlu0 %3566, %v2946
          %v3568 = vpop.permute.xlu0 %3567
          %3570 = vset.pattern.permute.xlu0 1
          %3571 = vperm.xlu0 %3570, %v2947
          %v3572 = vpop.permute.xlu0 %3571
          %3574 = vset.pattern.permute.xlu0 1
          %3575 = vperm.xlu0 %3574, %v2948
          %v3576 = vpop.permute.xlu0 %3575
          %3578 = vset.pattern.permute.xlu0 1
          %3579 = vperm.xlu0 %3578, %v2949
          %v3580 = vpop.permute.xlu0 %3579
          %3582 = vset.pattern.permute.xlu0 1
          %3583 = vperm.xlu0 %3582, %v2950
          %v3584 = vpop.permute.xlu0 %3583
          %v3586 = vlaneseq
          %v3587 = vshrl.u32 %v3586, 7
          %v3588 = vsub.s32 1, %v3587
          %v3589 = vrot.slane %v2951, %v3588
          %v3590 = vlaneseq
          %v3591 = vshrl.u32 %v3590, 7
          %v3592 = vsub.s32 1, %v3591
          %v3593 = vrot.slane %v2952, %v3592
          %v3594 = vadd.f32 %v3524, %v3589
          %v3595 = vadd.f32 %v3524, %v3593
          %v3596 = vadd.f32 %v3528, %v3589
          %v3597 = vadd.f32 %v3528, %v3593
          %v3598 = vadd.f32 %v3532, %v3589
          %v3599 = vadd.f32 %v3532, %v3593
          %v3600 = vadd.f32 %v3536, %v3589
          %v3601 = vadd.f32 %v3536, %v3593
          %v3602 = vadd.f32 %v3540, %v3589
          %v3603 = vadd.f32 %v3540, %v3593
          %v3604 = vadd.f32 %v3544, %v3589
          %v3605 = vadd.f32 %v3544, %v3593
          %v3606 = vadd.f32 %v3548, %v3589
          %v3607 = vadd.f32 %v3548, %v3593
          %v3608 = vadd.f32 %v3552, %v3589
          %v3609 = vadd.f32 %v3552, %v3593
          %v3610 = vadd.f32 %v3556, %v3589
          %v3611 = vadd.f32 %v3556, %v3593
          %v3612 = vadd.f32 %v3560, %v3589
          %v3613 = vadd.f32 %v3560, %v3593
          %v3614 = vadd.f32 %v3564, %v3589
          %v3615 = vadd.f32 %v3564, %v3593
          %v3616 = vadd.f32 %v3568, %v3589
          %v3617 = vadd.f32 %v3568, %v3593
          %v3618 = vadd.f32 %v3572, %v3589
          %v3619 = vadd.f32 %v3572, %v3593
          %v3620 = vadd.f32 %v3576, %v3589
          %v3621 = vadd.f32 %v3576, %v3593
          %v3622 = vadd.f32 %v3580, %v3589
          %v3623 = vadd.f32 %v3580, %v3593
          %v3624 = vadd.f32 %v3584, %v3589
          %v3625 = vadd.f32 %v3584, %v3593
          %v3626 = vmul.f32 %v3594, 0.2
          %v3627 = vmul.f32 %v3595, 0.2
          %v3628 = vmul.f32 %v3596, 0.2
          %v3629 = vmul.f32 %v3597, 0.2
          %v3630 = vmul.f32 %v3598, 0.2
          %v3631 = vmul.f32 %v3599, 0.2
          %v3632 = vmul.f32 %v3600, 0.2
          %v3633 = vmul.f32 %v3601, 0.2
          %v3634 = vmul.f32 %v3602, 0.2
          %v3635 = vmul.f32 %v3603, 0.2
          %v3636 = vmul.f32 %v3604, 0.2
          %v3637 = vmul.f32 %v3605, 0.2
          %v3638 = vmul.f32 %v3606, 0.2
          %v3639 = vmul.f32 %v3607, 0.2
          %v3640 = vmul.f32 %v3608, 0.2
          %v3641 = vmul.f32 %v3609, 0.2
          %v3642 = vmul.f32 %v3610, 0.2
          %v3643 = vmul.f32 %v3611, 0.2
          %v3644 = vmul.f32 %v3612, 0.2
          %v3645 = vmul.f32 %v3613, 0.2
          %v3646 = vmul.f32 %v3614, 0.2
          %v3647 = vmul.f32 %v3615, 0.2
          %v3648 = vmul.f32 %v3616, 0.2
          %v3649 = vmul.f32 %v3617, 0.2
          %v3650 = vmul.f32 %v3618, 0.2
          %v3651 = vmul.f32 %v3619, 0.2
          %v3652 = vmul.f32 %v3620, 0.2
          %v3653 = vmul.f32 %v3621, 0.2
          %v3654 = vmul.f32 %v3622, 0.2
          %v3655 = vmul.f32 %v3623, 0.2
          %v3656 = vmul.f32 %v3624, 0.2
          %v3657 = vmul.f32 %v3625, 0.2
          %v3658 = vmax.f32 %v3594, %v3626
          %v3659 = vmax.f32 %v3595, %v3627
          %v3660 = vmax.f32 %v3596, %v3628
          %v3661 = vmax.f32 %v3597, %v3629
          %v3662 = vmax.f32 %v3598, %v3630
          %v3663 = vmax.f32 %v3599, %v3631
          %v3664 = vmax.f32 %v3600, %v3632
          %v3665 = vmax.f32 %v3601, %v3633
          %v3666 = vmax.f32 %v3602, %v3634
          %v3667 = vmax.f32 %v3603, %v3635
          %v3668 = vmax.f32 %v3604, %v3636
          %v3669 = vmax.f32 %v3605, %v3637
          %v3670 = vmax.f32 %v3606, %v3638
          %v3671 = vmax.f32 %v3607, %v3639
          %v3672 = vmax.f32 %v3608, %v3640
          %v3673 = vmax.f32 %v3609, %v3641
          %v3674 = vmax.f32 %v3610, %v3642
          %v3675 = vmax.f32 %v3611, %v3643
          %v3676 = vmax.f32 %v3612, %v3644
          %v3677 = vmax.f32 %v3613, %v3645
          %v3678 = vmax.f32 %v3614, %v3646
          %v3679 = vmax.f32 %v3615, %v3647
          %v3680 = vmax.f32 %v3616, %v3648
          %v3681 = vmax.f32 %v3617, %v3649
          %v3682 = vmax.f32 %v3618, %v3650
          %v3683 = vmax.f32 %v3619, %v3651
          %v3684 = vmax.f32 %v3620, %v3652
          %v3685 = vmax.f32 %v3621, %v3653
          %v3686 = vmax.f32 %v3622, %v3654
          %v3687 = vmax.f32 %v3623, %v3655
          %v3688 = vmax.f32 %v3624, %v3656
          %v3689 = vmax.f32 %v3625, %v3657
          %v3690 = vadd.f32 %v3658, %v2886
          %v3691 = vadd.f32 %v3659, %v2887
          %v3692 = vadd.f32 %v3660, %v2888
          %v3693 = vadd.f32 %v3661, %v2889
          %v3694 = vadd.f32 %v3662, %v2890
          %v3695 = vadd.f32 %v3663, %v2891
          %v3696 = vadd.f32 %v3664, %v2892
          %v3697 = vadd.f32 %v3665, %v2893
          %v3698 = vadd.f32 %v3666, %v2894
          %v3699 = vadd.f32 %v3667, %v2895
          %v3700 = vadd.f32 %v3668, %v2896
          %v3701 = vadd.f32 %v3669, %v2897
          %v3702 = vadd.f32 %v3670, %v2898
          %v3703 = vadd.f32 %v3671, %v2899
          %v3704 = vadd.f32 %v3672, %v2900
          %v3705 = vadd.f32 %v3673, %v2901
          %v3706 = vadd.f32 %v3674, %v2902
          %v3707 = vadd.f32 %v3675, %v2903
          %v3708 = vadd.f32 %v3676, %v2904
          %v3709 = vadd.f32 %v3677, %v2905
          %v3710 = vadd.f32 %v3678, %v2906
          %v3711 = vadd.f32 %v3679, %v2907
          %v3712 = vadd.f32 %v3680, %v2908
          %v3713 = vadd.f32 %v3681, %v2909
          %v3714 = vadd.f32 %v3682, %v2910
          %v3715 = vadd.f32 %v3683, %v2911
          %v3716 = vadd.f32 %v3684, %v2912
          %v3717 = vadd.f32 %v3685, %v2913
          %v3718 = vadd.f32 %v3686, %v2914
          %v3719 = vadd.f32 %v3687, %v2915
          %v3720 = vadd.f32 %v3688, %v2916
          %v3721 = vadd.f32 %v3689, %v2917
          %v3722 = vmax.f32 %v3690, %v3691
          %3723 = vmax.xlane.f32.xlu0 %v3722
          %v3724 = vpop.xlane.xlu0 %3723
          %v3725 = vmax.f32 %v3692, %v3693
          %3726 = vmax.xlane.f32.xlu0 %v3725
          %v3727 = vpop.xlane.xlu0 %3726
          %v3728 = vmax.f32 %v3694, %v3695
          %3729 = vmax.xlane.f32.xlu0 %v3728
          %v3730 = vpop.xlane.xlu0 %3729
          %v3731 = vmax.f32 %v3696, %v3697
          %3732 = vmax.xlane.f32.xlu0 %v3731
          %v3733 = vpop.xlane.xlu0 %3732
          %v3734 = vmax.f32 %v3698, %v3699
          %3735 = vmax.xlane.f32.xlu0 %v3734
          %v3736 = vpop.xlane.xlu0 %3735
          %v3737 = vmax.f32 %v3700, %v3701
          %3738 = vmax.xlane.f32.xlu0 %v3737
          %v3739 = vpop.xlane.xlu0 %3738
          %v3740 = vmax.f32 %v3702, %v3703
          %3741 = vmax.xlane.f32.xlu0 %v3740
          %v3742 = vpop.xlane.xlu0 %3741
          %v3743 = vmax.f32 %v3704, %v3705
          %3744 = vmax.xlane.f32.xlu0 %v3743
          %v3745 = vpop.xlane.xlu0 %3744
          %v3746 = vmax.f32 %v3706, %v3707
          %3747 = vmax.xlane.f32.xlu0 %v3746
          %v3748 = vpop.xlane.xlu0 %3747
          %v3749 = vmax.f32 %v3708, %v3709
          %3750 = vmax.xlane.f32.xlu0 %v3749
          %v3751 = vpop.xlane.xlu0 %3750
          %v3752 = vmax.f32 %v3710, %v3711
          %3753 = vmax.xlane.f32.xlu0 %v3752
          %v3754 = vpop.xlane.xlu0 %3753
          %v3755 = vmax.f32 %v3712, %v3713
          %3756 = vmax.xlane.f32.xlu0 %v3755
          %v3757 = vpop.xlane.xlu0 %3756
          %v3758 = vmax.f32 %v3714, %v3715
          %3759 = vmax.xlane.f32.xlu0 %v3758
          %v3760 = vpop.xlane.xlu0 %3759
          %v3761 = vmax.f32 %v3716, %v3717
          %3762 = vmax.xlane.f32.xlu0 %v3761
          %v3763 = vpop.xlane.xlu0 %3762
          %v3764 = vmax.f32 %v3718, %v3719
          %3765 = vmax.xlane.f32.xlu0 %v3764
          %v3766 = vpop.xlane.xlu0 %3765
          %v3767 = vmax.f32 %v3720, %v3721
          %3768 = vmax.xlane.f32.xlu0 %v3767
          %v3769 = vpop.xlane.xlu0 %3768
          %v3770 = vsub.f32 %v3690, %v3724
          %v3771 = vsub.f32 %v3691, %v3724
          %v3772 = vsub.f32 %v3692, %v3727
          %v3773 = vsub.f32 %v3693, %v3727
          %v3774 = vsub.f32 %v3694, %v3730
          %v3775 = vsub.f32 %v3695, %v3730
          %v3776 = vsub.f32 %v3696, %v3733
          %v3777 = vsub.f32 %v3697, %v3733
          %v3778 = vsub.f32 %v3698, %v3736
          %v3779 = vsub.f32 %v3699, %v3736
          %v3780 = vsub.f32 %v3700, %v3739
          %v3781 = vsub.f32 %v3701, %v3739
          %v3782 = vsub.f32 %v3702, %v3742
          %v3783 = vsub.f32 %v3703, %v3742
          %v3784 = vsub.f32 %v3704, %v3745
          %v3785 = vsub.f32 %v3705, %v3745
          %v3786 = vsub.f32 %v3706, %v3748
          %v3787 = vsub.f32 %v3707, %v3748
          %v3788 = vsub.f32 %v3708, %v3751
          %v3789 = vsub.f32 %v3709, %v3751
          %v3790 = vsub.f32 %v3710, %v3754
          %v3791 = vsub.f32 %v3711, %v3754
          %v3792 = vsub.f32 %v3712, %v3757
          %v3793 = vsub.f32 %v3713, %v3757
          %v3794 = vsub.f32 %v3714, %v3760
          %v3795 = vsub.f32 %v3715, %v3760
          %v3796 = vsub.f32 %v3716, %v3763
          %v3797 = vsub.f32 %v3717, %v3763
          %v3798 = vsub.f32 %v3718, %v3766
          %v3799 = vsub.f32 %v3719, %v3766
          %v3800 = vsub.f32 %v3720, %v3769
          %v3801 = vsub.f32 %v3721, %v3769
          %v3802 = vmul.f32 %v3770, 1.442695
          %v3803 = vpow.pop %v3802
          %v3804 = vmul.f32 %v3771, 1.442695
          %v3805 = vpow.pop %v3804
          %v3806 = vmul.f32 %v3772, 1.442695
          %v3807 = vpow.pop %v3806
          %v3808 = vmul.f32 %v3773, 1.442695
          %v3809 = vpow.pop %v3808
          %v3810 = vmul.f32 %v3774, 1.442695
          %v3811 = vpow.pop %v3810
          %v3812 = vmul.f32 %v3775, 1.442695
          %v3813 = vpow.pop %v3812
          %v3814 = vmul.f32 %v3776, 1.442695
          %v3815 = vpow.pop %v3814
          %v3816 = vmul.f32 %v3777, 1.442695
          %v3817 = vpow.pop %v3816
          %v3818 = vmul.f32 %v3778, 1.442695
          %v3819 = vpow.pop %v3818
          %v3820 = vmul.f32 %v3779, 1.442695
          %v3821 = vpow.pop %v3820
          %v3822 = vmul.f32 %v3780, 1.442695
          %v3823 = vpow.pop %v3822
          %v3824 = vmul.f32 %v3781, 1.442695
          %v3825 = vpow.pop %v3824
          %v3826 = vmul.f32 %v3782, 1.442695
          %v3827 = vpow.pop %v3826
          %v3828 = vmul.f32 %v3783, 1.442695
          %v3829 = vpow.pop %v3828
          %v3830 = vmul.f32 %v3784, 1.442695
          %v3831 = vpow.pop %v3830
          %v3832 = vmul.f32 %v3785, 1.442695
          %v3833 = vpow.pop %v3832
          %v3834 = vmul.f32 %v3786, 1.442695
          %v3835 = vpow.pop %v3834
          %v3836 = vmul.f32 %v3787, 1.442695
          %v3837 = vpow.pop %v3836
          %v3838 = vmul.f32 %v3788, 1.442695
          %v3839 = vpow.pop %v3838
          %v3840 = vmul.f32 %v3789, 1.442695
          %v3841 = vpow.pop %v3840
          %v3842 = vmul.f32 %v3790, 1.442695
          %v3843 = vpow.pop %v3842
          %v3844 = vmul.f32 %v3791, 1.442695
          %v3845 = vpow.pop %v3844
          %v3846 = vmul.f32 %v3792, 1.442695
          %v3847 = vpow.pop %v3846
          %v3848 = vmul.f32 %v3793, 1.442695
          %v3849 = vpow.pop %v3848
          %v3850 = vmul.f32 %v3794, 1.442695
          %v3851 = vpow.pop %v3850
          %v3852 = vmul.f32 %v3795, 1.442695
          %v3853 = vpow.pop %v3852
          %v3854 = vmul.f32 %v3796, 1.442695
          %v3855 = vpow.pop %v3854
          %v3856 = vmul.f32 %v3797, 1.442695
          %v3857 = vpow.pop %v3856
          %v3858 = vmul.f32 %v3798, 1.442695
          %v3859 = vpow.pop %v3858
          %v3860 = vmul.f32 %v3799, 1.442695
          %v3861 = vpow.pop %v3860
          %v3862 = vmul.f32 %v3800, 1.442695
          %v3863 = vpow.pop %v3862
          %v3864 = vmul.f32 %v3801, 1.442695
          %v3865 = vpow.pop %v3864
          %v3866 = vadd.f32 %v3803, %v3805
          %3867 = vadd.xlane.f32.xlu0 %v3866
          %v3868 = vpop.xlane.xlu0 %3867
          %v3869 = vadd.f32 %v3807, %v3809
          %3870 = vadd.xlane.f32.xlu0 %v3869
          %v3871 = vpop.xlane.xlu0 %3870
          %v3872 = vadd.f32 %v3811, %v3813
          %3873 = vadd.xlane.f32.xlu0 %v3872
          %v3874 = vpop.xlane.xlu0 %3873
          %v3875 = vadd.f32 %v3815, %v3817
          %3876 = vadd.xlane.f32.xlu0 %v3875
          %v3877 = vpop.xlane.xlu0 %3876
          %v3878 = vadd.f32 %v3819, %v3821
          %3879 = vadd.xlane.f32.xlu0 %v3878
          %v3880 = vpop.xlane.xlu0 %3879
          %v3881 = vadd.f32 %v3823, %v3825
          %3882 = vadd.xlane.f32.xlu0 %v3881
          %v3883 = vpop.xlane.xlu0 %3882
          %v3884 = vadd.f32 %v3827, %v3829
          %3885 = vadd.xlane.f32.xlu0 %v3884
          %v3886 = vpop.xlane.xlu0 %3885
          %v3887 = vadd.f32 %v3831, %v3833
          %3888 = vadd.xlane.f32.xlu0 %v3887
          %v3889 = vpop.xlane.xlu0 %3888
          %v3890 = vadd.f32 %v3835, %v3837
          %3891 = vadd.xlane.f32.xlu0 %v3890
          %v3892 = vpop.xlane.xlu0 %3891
          %v3893 = vadd.f32 %v3839, %v3841
          %3894 = vadd.xlane.f32.xlu0 %v3893
          %v3895 = vpop.xlane.xlu0 %3894
          %v3896 = vadd.f32 %v3843, %v3845
          %3897 = vadd.xlane.f32.xlu0 %v3896
          %v3898 = vpop.xlane.xlu0 %3897
          %v3899 = vadd.f32 %v3847, %v3849
          %3900 = vadd.xlane.f32.xlu0 %v3899
          %v3901 = vpop.xlane.xlu0 %3900
          %v3902 = vadd.f32 %v3851, %v3853
          %3903 = vadd.xlane.f32.xlu0 %v3902
          %v3904 = vpop.xlane.xlu0 %3903
          %v3905 = vadd.f32 %v3855, %v3857
          %3906 = vadd.xlane.f32.xlu0 %v3905
          %v3907 = vpop.xlane.xlu0 %3906
          %v3908 = vadd.f32 %v3859, %v3861
          %3909 = vadd.xlane.f32.xlu0 %v3908
          %v3910 = vpop.xlane.xlu0 %3909
          %v3911 = vadd.f32 %v3863, %v3865
          %3912 = vadd.xlane.f32.xlu0 %v3911
          %v3913 = vpop.xlane.xlu0 %3912
          %v3914 = vrcp.pop %v3868
          %v3915 = vrcp.pop %v3871
          %v3916 = vrcp.pop %v3874
          %v3917 = vrcp.pop %v3877
          %v3918 = vrcp.pop %v3880
          %v3919 = vrcp.pop %v3883
          %v3920 = vrcp.pop %v3886
          %v3921 = vrcp.pop %v3889
          %v3922 = vrcp.pop %v3892
          %v3923 = vrcp.pop %v3895
          %v3924 = vrcp.pop %v3898
          %v3925 = vrcp.pop %v3901
          %v3926 = vrcp.pop %v3904
          %v3927 = vrcp.pop %v3907
          %v3928 = vrcp.pop %v3910
          %v3929 = vrcp.pop %v3913
          %v3930 = vpack.c.bf16 %v3807, %v3803
          %v3931 = vpack.c.bf16 %v3809, %v3805
          %v3932 = vpack.c.bf16 %v3815, %v3811
          %v3933 = vpack.c.bf16 %v3817, %v3813
          %v3934 = vpack.c.bf16 %v3823, %v3819
          %v3935 = vpack.c.bf16 %v3825, %v3821
          %v3936 = vpack.c.bf16 %v3831, %v3827
          %v3937 = vpack.c.bf16 %v3833, %v3829
          %v3938 = vpack.c.bf16 %v3839, %v3835
          %v3939 = vpack.c.bf16 %v3841, %v3837
          %v3940 = vpack.c.bf16 %v3847, %v3843
          %v3941 = vpack.c.bf16 %v3849, %v3845
          %v3942 = vpack.c.bf16 %v3855, %v3851
          %v3943 = vpack.c.bf16 %v3857, %v3853
          %v3944 = vpack.c.bf16 %v3863, %v3859
          %v3945 = vpack.c.bf16 %v3865, %v3861
          %3962 = vrot.lane.b32.xlu0 %v2918, 112
          %v3963 = vpop.permute.xlu0 %3962
          %3964 = vrot.lane.b32.xlu0 %v2919, 112
          %v3965 = vpop.permute.xlu0 %3964
          %3966 = vrot.lane.b32.xlu0 %v2920, 112
          %v3967 = vpop.permute.xlu0 %3966
          %3968 = vrot.lane.b32.xlu0 %v2921, 112
          %v3969 = vpop.permute.xlu0 %3968
          %3970 = vrot.lane.b32.xlu0 %v2922, 112
          %v3971 = vpop.permute.xlu0 %3970
          %3972 = vrot.lane.b32.xlu0 %v2923, 112
          %v3973 = vpop.permute.xlu0 %3972
          %3974 = vrot.lane.b32.xlu0 %v2924, 112
          %v3975 = vpop.permute.xlu0 %3974
          %3976 = vrot.lane.b32.xlu0 %v2925, 112
          %v3977 = vpop.permute.xlu0 %3976
          %3978 = vrot.lane.b32.xlu0 %v2926, 112
          %v3979 = vpop.permute.xlu0 %3978
          %3980 = vrot.lane.b32.xlu0 %v2927, 112
          %v3981 = vpop.permute.xlu0 %3980
          %3982 = vrot.lane.b32.xlu0 %v2928, 112
          %v3983 = vpop.permute.xlu0 %3982
          %3984 = vrot.lane.b32.xlu0 %v2929, 112
          %v3985 = vpop.permute.xlu0 %3984
          %3986 = vrot.lane.b32.xlu0 %v2930, 112
          %v3987 = vpop.permute.xlu0 %3986
          %3988 = vrot.lane.b32.xlu0 %v2931, 112
          %v3989 = vpop.permute.xlu0 %3988
          %3990 = vrot.lane.b32.xlu0 %v2932, 112
          %v3991 = vpop.permute.xlu0 %3990
          %3992 = vrot.lane.b32.xlu0 %v2933, 112
          %v3993 = vpop.permute.xlu0 %3992
          %4010 = vmatprep.subr.bf16.mxu0 0
          %4011 = vmatpush1.bf16.msra.mxu0 %v3963
          %4012 = vmatprep.subr.bf16.mxu0 0
          %4013 = vmatpush1.bf16.msra.mxu0 %v3965
          %4014 = vmatprep.subr.bf16.mxu0 0
          %4015 = vmatpush1.bf16.msra.mxu0 %v3967
          %4016 = vmatprep.subr.bf16.mxu0 0
          %4017 = vmatpush1.bf16.msra.mxu0 %v3969
          %4018 = vmatprep.subr.bf16.mxu0 0
          %4019 = vmatpush1.bf16.msra.mxu0 %v3971
          %4020 = vmatprep.subr.bf16.mxu0 0
          %4021 = vmatpush1.bf16.msra.mxu0 %v3973
          %4022 = vmatprep.subr.bf16.mxu0 0
          %4023 = vmatpush1.bf16.msra.mxu0 %v3975
          %4024 = vmatprep.subr.bf16.mxu0 0
          %4025 = vmatpush1.bf16.msra.mxu0 %v3977
          %4026 = vmatprep.subr.bf16.mxu0 0
          %4027 = vmatpush1.bf16.msra.mxu0 %v3979
          %4028 = vmatprep.subr.bf16.mxu0 0
          %4029 = vmatpush1.bf16.msra.mxu0 %v3981
          %4030 = vmatprep.subr.bf16.mxu0 0
          %4031 = vmatpush1.bf16.msra.mxu0 %v3983
          %4032 = vmatprep.subr.bf16.mxu0 0
          %4033 = vmatpush1.bf16.msra.mxu0 %v3985
          %4034 = vmatprep.subr.bf16.mxu0 0
          %4035 = vmatpush1.bf16.msra.mxu0 %v3987
          %4036 = vmatprep.subr.bf16.mxu0 0
          %4037 = vmatpush1.bf16.msra.mxu0 %v3989
          %4038 = vmatprep.subr.bf16.mxu0 0
          %4039 = vmatpush1.bf16.msra.mxu0 %v3991
          %4040 = vmatprep.subr.bf16.mxu0 0
          %4041 = vmatpush1.bf16.msra.mxu0 %v3993
          %4042 = vmatprep.mubr.bf16.mxu0 %v3931
          %4043 = vmatmul.mubr.bf16.gmra.mrb[0].mxu0 %v3930
          %v4044 = vpop.f32.mrb[0].mxu0
          %v4045 = vadd.f32 0.0, %v4044
          %v4046 = vpop.f32.mrb[0].mxu0
          %v4047 = vpop.f32.mrb[0].mxu0
          %v4048 = vadd.f32 0.0, %v4047
          %v4049 = vpop.f32.mrb[0].mxu0
          %4050 = vmatprep.mubr.bf16.mxu0 %v3933
          %4051 = vmatmul.mubr.bf16.gmra.mrb[0].mxu0 %v3932
          %v4052 = vpop.f32.mrb[0].mxu0
          %v4053 = vadd.f32 0.0, %v4052
          %v4054 = vpop.f32.mrb[0].mxu0
          %v4055 = vpop.f32.mrb[0].mxu0
          %v4056 = vadd.f32 0.0, %v4055
          %v4057 = vpop.f32.mrb[0].mxu0
          %4058 = vmatprep.mubr.bf16.mxu0 %v3935
          %4059 = vmatmul.mubr.bf16.gmra.mrb[0].mxu0 %v3934
          %v4060 = vpop.f32.mrb[0].mxu0
          %v4061 = vadd.f32 0.0, %v4060
          %v4062 = vpop.f32.mrb[0].mxu0
          %v4063 = vpop.f32.mrb[0].mxu0
          %v4064 = vadd.f32 0.0, %v4063
          %v4065 = vpop.f32.mrb[0].mxu0
          %4066 = vmatprep.mubr.bf16.mxu0 %v3937
          %4067 = vmatmul.mubr.bf16.gmra.mrb[0].mxu0 %v3936
          %v4068 = vpop.f32.mrb[0].mxu0
          %v4069 = vadd.f32 0.0, %v4068
          %v4070 = vpop.f32.mrb[0].mxu0
          %v4071 = vpop.f32.mrb[0].mxu0
          %v4072 = vadd.f32 0.0, %v4071
          %v4073 = vpop.f32.mrb[0].mxu0
          %4074 = vmatprep.mubr.bf16.mxu0 %v3939
          %4075 = vmatmul.mubr.bf16.gmra.mrb[0].mxu0 %v3938
          %v4076 = vpop.f32.mrb[0].mxu0
          %v4077 = vadd.f32 0.0, %v4076
          %v4078 = vpop.f32.mrb[0].mxu0
          %v4079 = vpop.f32.mrb[0].mxu0
          %v4080 = vadd.f32 0.0, %v4079
          %v4081 = vpop.f32.mrb[0].mxu0
          %4082 = vmatprep.mubr.bf16.mxu0 %v3941
          %4083 = vmatmul.mubr.bf16.gmra.mrb[0].mxu0 %v3940
          %v4084 = vpop.f32.mrb[0].mxu0
          %v4085 = vadd.f32 0.0, %v4084
          %v4086 = vpop.f32.mrb[0].mxu0
          %v4087 = vpop.f32.mrb[0].mxu0
          %v4088 = vadd.f32 0.0, %v4087
          %v4089 = vpop.f32.mrb[0].mxu0
          %4090 = vmatprep.mubr.bf16.mxu0 %v3943
          %4091 = vmatmul.mubr.bf16.gmra.mrb[0].mxu0 %v3942
          %v4092 = vpop.f32.mrb[0].mxu0
          %v4093 = vadd.f32 0.0, %v4092
          %v4094 = vpop.f32.mrb[0].mxu0
          %v4095 = vpop.f32.mrb[0].mxu0
          %v4096 = vadd.f32 0.0, %v4095
          %v4097 = vpop.f32.mrb[0].mxu0
          %4098 = vmatprep.mubr.bf16.mxu0 %v3945
          %4099 = vmatmul.mubr.bf16.gmra.mrb[0].mxu0 %v3944
          %v4100 = vpop.f32.mrb[0].mxu0
          %v4101 = vadd.f32 0.0, %v4100
          %v4102 = vpop.f32.mrb[0].mxu0
          %v4103 = vpop.f32.mrb[0].mxu0
          %v4104 = vadd.f32 0.0, %v4103
          %v4105 = vpop.f32.mrb[0].mxu0
          %4106 = vdwg.mxu0
          %v4107 = vmul.f32 %v4045, %v3914
          %v4108 = vmul.f32 %v4048, %v3915
          %v4109 = vmul.f32 %v4053, %v3916
          %v4110 = vmul.f32 %v4056, %v3917
          %v4111 = vmul.f32 %v4061, %v3918
          %v4112 = vmul.f32 %v4064, %v3919
          %v4113 = vmul.f32 %v4069, %v3920
          %v4114 = vmul.f32 %v4072, %v3921
          %v4115 = vmul.f32 %v4077, %v3922
          %v4116 = vmul.f32 %v4080, %v3923
          %v4117 = vmul.f32 %v4085, %v3924
          %v4118 = vmul.f32 %v4088, %v3925
          %v4119 = vmul.f32 %v4093, %v3926
          %v4120 = vmul.f32 %v4096, %v3927
          %v4121 = vmul.f32 %v4101, %v3928
          %v4122 = vmul.f32 %v4104, %v3929
          %v4123 = vadd.f32 %v3506, %v4107
          %v4124 = vadd.f32 %v3507, %v4108
          %v4125 = vadd.f32 %v3508, %v4109
          %v4126 = vadd.f32 %v3509, %v4110
          %v4127 = vadd.f32 %v3510, %v4111
          %v4128 = vadd.f32 %v3511, %v4112
          %v4129 = vadd.f32 %v3512, %v4113
          %v4130 = vadd.f32 %v3513, %v4114
          %v4131 = vadd.f32 %v3514, %v4115
          %v4132 = vadd.f32 %v3515, %v4116
          %v4133 = vadd.f32 %v3516, %v4117
          %v4134 = vadd.f32 %v3517, %v4118
          %v4135 = vadd.f32 %v3518, %v4119
          %v4136 = vadd.f32 %v3519, %v4120
          %v4137 = vadd.f32 %v3520, %v4121
          %v4138 = vadd.f32 %v3521, %v4122
          %4139 = vset.pattern.permute.xlu0 2
          %4140 = vperm.xlu0 %4139, %v2935
          %v4141 = vpop.permute.xlu0 %4140
          %4143 = vset.pattern.permute.xlu0 2
          %4144 = vperm.xlu0 %4143, %v2936
          %v4145 = vpop.permute.xlu0 %4144
          %4147 = vset.pattern.permute.xlu0 2
          %4148 = vperm.xlu0 %4147, %v2937
          %v4149 = vpop.permute.xlu0 %4148
          %4151 = vset.pattern.permute.xlu0 2
          %4152 = vperm.xlu0 %4151, %v2938
          %v4153 = vpop.permute.xlu0 %4152
          %4155 = vset.pattern.permute.xlu0 2
          %4156 = vperm.xlu0 %4155, %v2939
          %v4157 = vpop.permute.xlu0 %4156
          %4159 = vset.pattern.permute.xlu0 2
          %4160 = vperm.xlu0 %4159, %v2940
          %v4161 = vpop.permute.xlu0 %4160
          %4163 = vset.pattern.permute.xlu0 2
          %4164 = vperm.xlu0 %4163, %v2941
          %v4165 = vpop.permute.xlu0 %4164
          %4167 = vset.pattern.permute.xlu0 2
          %4168 = vperm.xlu0 %4167, %v2942
          %v4169 = vpop.permute.xlu0 %4168
          %4171 = vset.pattern.permute.xlu0 2
          %4172 = vperm.xlu0 %4171, %v2943
          %v4173 = vpop.permute.xlu0 %4172
          %4175 = vset.pattern.permute.xlu0 2
          %4176 = vperm.xlu0 %4175, %v2944
          %v4177 = vpop.permute.xlu0 %4176
          %4179 = vset.pattern.permute.xlu0 2
          %4180 = vperm.xlu0 %4179, %v2945
          %v4181 = vpop.permute.xlu0 %4180
          %4183 = vset.pattern.permute.xlu0 2
          %4184 = vperm.xlu0 %4183, %v2946
          %v4185 = vpop.permute.xlu0 %4184
          %4187 = vset.pattern.permute.xlu0 2
          %4188 = vperm.xlu0 %4187, %v2947
          %v4189 = vpop.permute.xlu0 %4188
          %4191 = vset.pattern.permute.xlu0 2
          %4192 = vperm.xlu0 %4191, %v2948
          %v4193 = vpop.permute.xlu0 %4192
          %4195 = vset.pattern.permute.xlu0 2
          %4196 = vperm.xlu0 %4195, %v2949
          %v4197 = vpop.permute.xlu0 %4196
          %4199 = vset.pattern.permute.xlu0 2
          %4200 = vperm.xlu0 %4199, %v2950
          %v4201 = vpop.permute.xlu0 %4200
          %v4203 = vlaneseq
          %v4204 = vshrl.u32 %v4203, 7
          %v4205 = vsub.s32 2, %v4204
          %v4206 = vrot.slane %v2951, %v4205
          %v4207 = vlaneseq
          %v4208 = vshrl.u32 %v4207, 7
          %v4209 = vsub.s32 2, %v4208
          %v4210 = vrot.slane %v2952, %v4209
          %v4211 = vadd.f32 %v4141, %v4206
          %v4212 = vadd.f32 %v4141, %v4210
          %v4213 = vadd.f32 %v4145, %v4206
          %v4214 = vadd.f32 %v4145, %v4210
          %v4215 = vadd.f32 %v4149, %v4206
          %v4216 = vadd.f32 %v4149, %v4210
          %v4217 = vadd.f32 %v4153, %v4206
          %v4218 = vadd.f32 %v4153, %v4210
          %v4219 = vadd.f32 %v4157, %v4206
          %v4220 = vadd.f32 %v4157, %v4210
          %v4221 = vadd.f32 %v4161, %v4206
          %v4222 = vadd.f32 %v4161, %v4210
          %v4223 = vadd.f32 %v4165, %v4206
          %v4224 = vadd.f32 %v4165, %v4210
          %v4225 = vadd.f32 %v4169, %v4206
          %v4226 = vadd.f32 %v4169, %v4210
          %v4227 = vadd.f32 %v4173, %v4206
          %v4228 = vadd.f32 %v4173, %v4210
          %v4229 = vadd.f32 %v4177, %v4206
          %v4230 = vadd.f32 %v4177, %v4210
          %v4231 = vadd.f32 %v4181, %v4206
          %v4232 = vadd.f32 %v4181, %v4210
          %v4233 = vadd.f32 %v4185, %v4206
          %v4234 = vadd.f32 %v4185, %v4210
          %v4235 = vadd.f32 %v4189, %v4206
          %v4236 = vadd.f32 %v4189, %v4210
          %v4237 = vadd.f32 %v4193, %v4206
          %v4238 = vadd.f32 %v4193, %v4210
          %v4239 = vadd.f32 %v4197, %v4206
          %v4240 = vadd.f32 %v4197, %v4210
          %v4241 = vadd.f32 %v4201, %v4206
          %v4242 = vadd.f32 %v4201, %v4210
          %v4243 = vmul.f32 %v4211, 0.2
          %v4244 = vmul.f32 %v4212, 0.2
          %v4245 = vmul.f32 %v4213, 0.2
          %v4246 = vmul.f32 %v4214, 0.2
          %v4247 = vmul.f32 %v4215, 0.2
          %v4248 = vmul.f32 %v4216, 0.2
          %v4249 = vmul.f32 %v4217, 0.2
          %v4250 = vmul.f32 %v4218, 0.2
          %v4251 = vmul.f32 %v4219, 0.2
          %v4252 = vmul.f32 %v4220, 0.2
          %v4253 = vmul.f32 %v4221, 0.2
          %v4254 = vmul.f32 %v4222, 0.2
          %v4255 = vmul.f32 %v4223, 0.2
          %v4256 = vmul.f32 %v4224, 0.2
          %v4257 = vmul.f32 %v4225, 0.2
          %v4258 = vmul.f32 %v4226, 0.2
          %v4259 = vmul.f32 %v4227, 0.2
          %v4260 = vmul.f32 %v4228, 0.2
          %v4261 = vmul.f32 %v4229, 0.2
          %v4262 = vmul.f32 %v4230, 0.2
          %v4263 = vmul.f32 %v4231, 0.2
          %v4264 = vmul.f32 %v4232, 0.2
          %v4265 = vmul.f32 %v4233, 0.2
          %v4266 = vmul.f32 %v4234, 0.2
          %v4267 = vmul.f32 %v4235, 0.2
          %v4268 = vmul.f32 %v4236, 0.2
          %v4269 = vmul.f32 %v4237, 0.2
          %v4270 = vmul.f32 %v4238, 0.2
          %v4271 = vmul.f32 %v4239, 0.2
          %v4272 = vmul.f32 %v4240, 0.2
          %v4273 = vmul.f32 %v4241, 0.2
          %v4274 = vmul.f32 %v4242, 0.2
          %v4275 = vmax.f32 %v4211, %v4243
          %v4276 = vmax.f32 %v4212, %v4244
          %v4277 = vmax.f32 %v4213, %v4245
          %v4278 = vmax.f32 %v4214, %v4246
          %v4279 = vmax.f32 %v4215, %v4247
          %v4280 = vmax.f32 %v4216, %v4248
          %v4281 = vmax.f32 %v4217, %v4249
          %v4282 = vmax.f32 %v4218, %v4250
          %v4283 = vmax.f32 %v4219, %v4251
          %v4284 = vmax.f32 %v4220, %v4252
          %v4285 = vmax.f32 %v4221, %v4253
          %v4286 = vmax.f32 %v4222, %v4254
          %v4287 = vmax.f32 %v4223, %v4255
          %v4288 = vmax.f32 %v4224, %v4256
          %v4289 = vmax.f32 %v4225, %v4257
          %v4290 = vmax.f32 %v4226, %v4258
          %v4291 = vmax.f32 %v4227, %v4259
          %v4292 = vmax.f32 %v4228, %v4260
          %v4293 = vmax.f32 %v4229, %v4261
          %v4294 = vmax.f32 %v4230, %v4262
          %v4295 = vmax.f32 %v4231, %v4263
          %v4296 = vmax.f32 %v4232, %v4264
          %v4297 = vmax.f32 %v4233, %v4265
          %v4298 = vmax.f32 %v4234, %v4266
          %v4299 = vmax.f32 %v4235, %v4267
          %v4300 = vmax.f32 %v4236, %v4268
          %v4301 = vmax.f32 %v4237, %v4269
          %v4302 = vmax.f32 %v4238, %v4270
          %v4303 = vmax.f32 %v4239, %v4271
          %v4304 = vmax.f32 %v4240, %v4272
          %v4305 = vmax.f32 %v4241, %v4273
          %v4306 = vmax.f32 %v4242, %v4274
          %v4307 = vadd.f32 %v4275, %v2886
          %v4308 = vadd.f32 %v4276, %v2887
          %v4309 = vadd.f32 %v4277, %v2888
          %v4310 = vadd.f32 %v4278, %v2889
          %v4311 = vadd.f32 %v4279, %v2890
          %v4312 = vadd.f32 %v4280, %v2891
          %v4313 = vadd.f32 %v4281, %v2892
          %v4314 = vadd.f32 %v4282, %v2893
          %v4315 = vadd.f32 %v4283, %v2894
          %v4316 = vadd.f32 %v4284, %v2895
          %v4317 = vadd.f32 %v4285, %v2896
          %v4318 = vadd.f32 %v4286, %v2897
          %v4319 = vadd.f32 %v4287, %v2898
          %v4320 = vadd.f32 %v4288, %v2899
          %v4321 = vadd.f32 %v4289, %v2900
          %v4322 = vadd.f32 %v4290, %v2901
          %v4323 = vadd.f32 %v4291, %v2902
          %v4324 = vadd.f32 %v4292, %v2903
          %v4325 = vadd.f32 %v4293, %v2904
          %v4326 = vadd.f32 %v4294, %v2905
          %v4327 = vadd.f32 %v4295, %v2906
          %v4328 = vadd.f32 %v4296, %v2907
          %v4329 = vadd.f32 %v4297, %v2908
          %v4330 = vadd.f32 %v4298, %v2909
          %v4331 = vadd.f32 %v4299, %v2910
          %v4332 = vadd.f32 %v4300, %v2911
          %v4333 = vadd.f32 %v4301, %v2912
          %v4334 = vadd.f32 %v4302, %v2913
          %v4335 = vadd.f32 %v4303, %v2914
          %v4336 = vadd.f32 %v4304, %v2915
          %v4337 = vadd.f32 %v4305, %v2916
          %v4338 = vadd.f32 %v4306, %v2917
          %v4339 = vmax.f32 %v4307, %v4308
          %4340 = vmax.xlane.f32.xlu0 %v4339
          %v4341 = vpop.xlane.xlu0 %4340
          %v4342 = vmax.f32 %v4309, %v4310
          %4343 = vmax.xlane.f32.xlu0 %v4342
          %v4344 = vpop.xlane.xlu0 %4343
          %v4345 = vmax.f32 %v4311, %v4312
          %4346 = vmax.xlane.f32.xlu0 %v4345
          %v4347 = vpop.xlane.xlu0 %4346
          %v4348 = vmax.f32 %v4313, %v4314
          %4349 = vmax.xlane.f32.xlu0 %v4348
          %v4350 = vpop.xlane.xlu0 %4349
          %v4351 = vmax.f32 %v4315, %v4316
          %4352 = vmax.xlane.f32.xlu0 %v4351
          %v4353 = vpop.xlane.xlu0 %4352
          %v4354 = vmax.f32 %v4317, %v4318
          %4355 = vmax.xlane.f32.xlu0 %v4354
          %v4356 = vpop.xlane.xlu0 %4355
          %v4357 = vmax.f32 %v4319, %v4320
          %4358 = vmax.xlane.f32.xlu0 %v4357
          %v4359 = vpop.xlane.xlu0 %4358
          %v4360 = vmax.f32 %v4321, %v4322
          %4361 = vmax.xlane.f32.xlu0 %v4360
          %v4362 = vpop.xlane.xlu0 %4361
          %v4363 = vmax.f32 %v4323, %v4324
          %4364 = vmax.xlane.f32.xlu0 %v4363
          %v4365 = vpop.xlane.xlu0 %4364
          %v4366 = vmax.f32 %v4325, %v4326
          %4367 = vmax.xlane.f32.xlu0 %v4366
          %v4368 = vpop.xlane.xlu0 %4367
          %v4369 = vmax.f32 %v4327, %v4328
          %4370 = vmax.xlane.f32.xlu0 %v4369
          %v4371 = vpop.xlane.xlu0 %4370
          %v4372 = vmax.f32 %v4329, %v4330
          %4373 = vmax.xlane.f32.xlu0 %v4372
          %v4374 = vpop.xlane.xlu0 %4373
          %v4375 = vmax.f32 %v4331, %v4332
          %4376 = vmax.xlane.f32.xlu0 %v4375
          %v4377 = vpop.xlane.xlu0 %4376
          %v4378 = vmax.f32 %v4333, %v4334
          %4379 = vmax.xlane.f32.xlu0 %v4378
          %v4380 = vpop.xlane.xlu0 %4379
          %v4381 = vmax.f32 %v4335, %v4336
          %4382 = vmax.xlane.f32.xlu0 %v4381
          %v4383 = vpop.xlane.xlu0 %4382
          %v4384 = vmax.f32 %v4337, %v4338
          %4385 = vmax.xlane.f32.xlu0 %v4384
          %v4386 = vpop.xlane.xlu0 %4385
          %v4387 = vsub.f32 %v4307, %v4341
          %v4388 = vsub.f32 %v4308, %v4341
          %v4389 = vsub.f32 %v4309, %v4344
          %v4390 = vsub.f32 %v4310, %v4344
          %v4391 = vsub.f32 %v4311, %v4347
          %v4392 = vsub.f32 %v4312, %v4347
          %v4393 = vsub.f32 %v4313, %v4350
          %v4394 = vsub.f32 %v4314, %v4350
          %v4395 = vsub.f32 %v4315, %v4353
          %v4396 = vsub.f32 %v4316, %v4353
          %v4397 = vsub.f32 %v4317, %v4356
          %v4398 = vsub.f32 %v4318, %v4356
          %v4399 = vsub.f32 %v4319, %v4359
          %v4400 = vsub.f32 %v4320, %v4359
          %v4401 = vsub.f32 %v4321, %v4362
          %v4402 = vsub.f32 %v4322, %v4362
          %v4403 = vsub.f32 %v4323, %v4365
          %v4404 = vsub.f32 %v4324, %v4365
          %v4405 = vsub.f32 %v4325, %v4368
          %v4406 = vsub.f32 %v4326, %v4368
          %v4407 = vsub.f32 %v4327, %v4371
          %v4408 = vsub.f32 %v4328, %v4371
          %v4409 = vsub.f32 %v4329, %v4374
          %v4410 = vsub.f32 %v4330, %v4374
          %v4411 = vsub.f32 %v4331, %v4377
          %v4412 = vsub.f32 %v4332, %v4377
          %v4413 = vsub.f32 %v4333, %v4380
          %v4414 = vsub.f32 %v4334, %v4380
          %v4415 = vsub.f32 %v4335, %v4383
          %v4416 = vsub.f32 %v4336, %v4383
          %v4417 = vsub.f32 %v4337, %v4386
          %v4418 = vsub.f32 %v4338, %v4386
          %v4419 = vmul.f32 %v4387, 1.442695
          %v4420 = vpow.pop %v4419
          %v4421 = vmul.f32 %v4388, 1.442695
          %v4422 = vpow.pop %v4421
          %v4423 = vmul.f32 %v4389, 1.442695
          %v4424 = vpow.pop %v4423
          %v4425 = vmul.f32 %v4390, 1.442695
          %v4426 = vpow.pop %v4425
          %v4427 = vmul.f32 %v4391, 1.442695
          %v4428 = vpow.pop %v4427
          %v4429 = vmul.f32 %v4392, 1.442695
          %v4430 = vpow.pop %v4429
          %v4431 = vmul.f32 %v4393, 1.442695
          %v4432 = vpow.pop %v4431
          %v4433 = vmul.f32 %v4394, 1.442695
          %v4434 = vpow.pop %v4433
          %v4435 = vmul.f32 %v4395, 1.442695
          %v4436 = vpow.pop %v4435
          %v4437 = vmul.f32 %v4396, 1.442695
          %v4438 = vpow.pop %v4437
          %v4439 = vmul.f32 %v4397, 1.442695
          %v4440 = vpow.pop %v4439
          %v4441 = vmul.f32 %v4398, 1.442695
          %v4442 = vpow.pop %v4441
          %v4443 = vmul.f32 %v4399, 1.442695
          %v4444 = vpow.pop %v4443
          %v4445 = vmul.f32 %v4400, 1.442695
          %v4446 = vpow.pop %v4445
          %v4447 = vmul.f32 %v4401, 1.442695
          %v4448 = vpow.pop %v4447
          %v4449 = vmul.f32 %v4402, 1.442695
          %v4450 = vpow.pop %v4449
          %v4451 = vmul.f32 %v4403, 1.442695
          %v4452 = vpow.pop %v4451
          %v4453 = vmul.f32 %v4404, 1.442695
          %v4454 = vpow.pop %v4453
          %v4455 = vmul.f32 %v4405, 1.442695
          %v4456 = vpow.pop %v4455
          %v4457 = vmul.f32 %v4406, 1.442695
          %v4458 = vpow.pop %v4457
          %v4459 = vmul.f32 %v4407, 1.442695
          %v4460 = vpow.pop %v4459
          %v4461 = vmul.f32 %v4408, 1.442695
          %v4462 = vpow.pop %v4461
          %v4463 = vmul.f32 %v4409, 1.442695
          %v4464 = vpow.pop %v4463
          %v4465 = vmul.f32 %v4410, 1.442695
          %v4466 = vpow.pop %v4465
          %v4467 = vmul.f32 %v4411, 1.442695
          %v4468 = vpow.pop %v4467
          %v4469 = vmul.f32 %v4412, 1.442695
          %v4470 = vpow.pop %v4469
          %v4471 = vmul.f32 %v4413, 1.442695
          %v4472 = vpow.pop %v4471
          %v4473 = vmul.f32 %v4414, 1.442695
          %v4474 = vpow.pop %v4473
          %v4475 = vmul.f32 %v4415, 1.442695
          %v4476 = vpow.pop %v4475
          %v4477 = vmul.f32 %v4416, 1.442695
          %v4478 = vpow.pop %v4477
          %v4479 = vmul.f32 %v4417, 1.442695
          %v4480 = vpow.pop %v4479
          %v4481 = vmul.f32 %v4418, 1.442695
          %v4482 = vpow.pop %v4481
          %v4483 = vadd.f32 %v4420, %v4422
          %4484 = vadd.xlane.f32.xlu0 %v4483
          %v4485 = vpop.xlane.xlu0 %4484
          %v4486 = vadd.f32 %v4424, %v4426
          %4487 = vadd.xlane.f32.xlu0 %v4486
          %v4488 = vpop.xlane.xlu0 %4487
          %v4489 = vadd.f32 %v4428, %v4430
          %4490 = vadd.xlane.f32.xlu0 %v4489
          %v4491 = vpop.xlane.xlu0 %4490
          %v4492 = vadd.f32 %v4432, %v4434
          %4493 = vadd.xlane.f32.xlu0 %v4492
          %v4494 = vpop.xlane.xlu0 %4493
          %v4495 = vadd.f32 %v4436, %v4438
          %4496 = vadd.xlane.f32.xlu0 %v4495
          %v4497 = vpop.xlane.xlu0 %4496
          %v4498 = vadd.f32 %v4440, %v4442
          %4499 = vadd.xlane.f32.xlu0 %v4498
          %v4500 = vpop.xlane.xlu0 %4499
          %v4501 = vadd.f32 %v4444, %v4446
          %4502 = vadd.xlane.f32.xlu0 %v4501
          %v4503 = vpop.xlane.xlu0 %4502
          %v4504 = vadd.f32 %v4448, %v4450
          %4505 = vadd.xlane.f32.xlu0 %v4504
          %v4506 = vpop.xlane.xlu0 %4505
          %v4507 = vadd.f32 %v4452, %v4454
          %4508 = vadd.xlane.f32.xlu0 %v4507
          %v4509 = vpop.xlane.xlu0 %4508
          %v4510 = vadd.f32 %v4456, %v4458
          %4511 = vadd.xlane.f32.xlu0 %v4510
          %v4512 = vpop.xlane.xlu0 %4511
          %v4513 = vadd.f32 %v4460, %v4462
          %4514 = vadd.xlane.f32.xlu0 %v4513
          %v4515 = vpop.xlane.xlu0 %4514
          %v4516 = vadd.f32 %v4464, %v4466
          %4517 = vadd.xlane.f32.xlu0 %v4516
          %v4518 = vpop.xlane.xlu0 %4517
          %v4519 = vadd.f32 %v4468, %v4470
          %4520 = vadd.xlane.f32.xlu0 %v4519
          %v4521 = vpop.xlane.xlu0 %4520
          %v4522 = vadd.f32 %v4472, %v4474
          %4523 = vadd.xlane.f32.xlu0 %v4522
          %v4524 = vpop.xlane.xlu0 %4523
          %v4525 = vadd.f32 %v4476, %v4478
          %4526 = vadd.xlane.f32.xlu0 %v4525
          %v4527 = vpop.xlane.xlu0 %4526
          %v4528 = vadd.f32 %v4480, %v4482
          %4529 = vadd.xlane.f32.xlu0 %v4528
          %v4530 = vpop.xlane.xlu0 %4529
          %v4531 = vrcp.pop %v4485
          %v4532 = vrcp.pop %v4488
          %v4533 = vrcp.pop %v4491
          %v4534 = vrcp.pop %v4494
          %v4535 = vrcp.pop %v4497
          %v4536 = vrcp.pop %v4500
          %v4537 = vrcp.pop %v4503
          %v4538 = vrcp.pop %v4506
          %v4539 = vrcp.pop %v4509
          %v4540 = vrcp.pop %v4512
          %v4541 = vrcp.pop %v4515
          %v4542 = vrcp.pop %v4518
          %v4543 = vrcp.pop %v4521
          %v4544 = vrcp.pop %v4524
          %v4545 = vrcp.pop %v4527
          %v4546 = vrcp.pop %v4530
          %v4547 = vpack.c.bf16 %v4424, %v4420
          %v4548 = vpack.c.bf16 %v4426, %v4422
          %v4549 = vpack.c.bf16 %v4432, %v4428
          %v4550 = vpack.c.bf16 %v4434, %v4430
          %v4551 = vpack.c.bf16 %v4440, %v4436
          %v4552 = vpack.c.bf16 %v4442, %v4438
          %v4553 = vpack.c.bf16 %v4448, %v4444
          %v4554 = vpack.c.bf16 %v4450, %v4446
          %v4555 = vpack.c.bf16 %v4456, %v4452
          %v4556 = vpack.c.bf16 %v4458, %v4454
          %v4557 = vpack.c.bf16 %v4464, %v4460
          %v4558 = vpack.c.bf16 %v4466, %v4462
          %v4559 = vpack.c.bf16 %v4472, %v4468
          %v4560 = vpack.c.bf16 %v4474, %v4470
          %v4561 = vpack.c.bf16 %v4480, %v4476
          %v4562 = vpack.c.bf16 %v4482, %v4478
          %4563 = vrot.lane.b32.xlu0 %v2918, 96
          %v4564 = vpop.permute.xlu0 %4563
          %4565 = vrot.lane.b32.xlu0 %v2919, 96
          %v4566 = vpop.permute.xlu0 %4565
          %4567 = vrot.lane.b32.xlu0 %v2920, 96
          %v4568 = vpop.permute.xlu0 %4567
          %4569 = vrot.lane.b32.xlu0 %v2921, 96
          %v4570 = vpop.permute.xlu0 %4569
          %4571 = vrot.lane.b32.xlu0 %v2922, 96
          %v4572 = vpop.permute.xlu0 %4571
          %4573 = vrot.lane.b32.xlu0 %v2923, 96
          %v4574 = vpop.permute.xlu0 %4573
          %4575 = vrot.lane.b32.xlu0 %v2924, 96
          %v4576 = vpop.permute.xlu0 %4575
          %4577 = vrot.lane.b32.xlu0 %v2925, 96
          %v4578 = vpop.permute.xlu0 %4577
          %4579 = vrot.lane.b32.xlu0 %v2926, 96
          %v4580 = vpop.permute.xlu0 %4579
          %4581 = vrot.lane.b32.xlu0 %v2927, 96
          %v4582 = vpop.permute.xlu0 %4581
          %4583 = vrot.lane.b32.xlu0 %v2928, 96
          %v4584 = vpop.permute.xlu0 %4583
          %4585 = vrot.lane.b32.xlu0 %v2929, 96
          %v4586 = vpop.permute.xlu0 %4585
          %4587 = vrot.lane.b32.xlu0 %v2930, 96
          %v4588 = vpop.permute.xlu0 %4587
          %4589 = vrot.lane.b32.xlu0 %v2931, 96
          %v4590 = vpop.permute.xlu0 %4589
          %4591 = vrot.lane.b32.xlu0 %v2932, 96
          %v4592 = vpop.permute.xlu0 %4591
          %4593 = vrot.lane.b32.xlu0 %v2933, 96
          %v4594 = vpop.permute.xlu0 %4593
          %4611 = vmatprep.subr.bf16.mxu0 0
          %4612 = vmatpush1.bf16.msra.mxu0 %v4564
          %4613 = vmatprep.subr.bf16.mxu0 0
          %4614 = vmatpush1.bf16.msra.mxu0 %v4566
          %4615 = vmatprep.subr.bf16.mxu0 0
          %4616 = vmatpush1.bf16.msra.mxu0 %v4568
          %4617 = vmatprep.subr.bf16.mxu0 0
          %4618 = vmatpush1.bf16.msra.mxu0 %v4570
          %4619 = vmatprep.subr.bf16.mxu0 0
          %4620 = vmatpush1.bf16.msra.mxu0 %v4572
          %4621 = vmatprep.subr.bf16.mxu0 0
          %4622 = vmatpush1.bf16.msra.mxu0 %v4574
          %4623 = vmatprep.subr.bf16.mxu0 0
          %4624 = vmatpush1.bf16.msra.mxu0 %v4576
          %4625 = vmatprep.subr.bf16.mxu0 0
          %4626 = vmatpush1.bf16.msra.mxu0 %v4578
          %4627 = vmatprep.subr.bf16.mxu0 0
          %4628 = vmatpush1.bf16.msra.mxu0 %v4580
          %4629 = vmatprep.subr.bf16.mxu0 0
          %4630 = vmatpush1.bf16.msra.mxu0 %v4582
          %4631 = vmatprep.subr.bf16.mxu0 0
          %4632 = vmatpush1.bf16.msra.mxu0 %v4584
          %4633 = vmatprep.subr.bf16.mxu0 0
          %4634 = vmatpush1.bf16.msra.mxu0 %v4586
          %4635 = vmatprep.subr.bf16.mxu0 0
          %4636 = vmatpush1.bf16.msra.mxu0 %v4588
          %4637 = vmatprep.subr.bf16.mxu0 0
          %4638 = vmatpush1.bf16.msra.mxu0 %v4590
          %4639 = vmatprep.subr.bf16.mxu0 0
          %4640 = vmatpush1.bf16.msra.mxu0 %v4592
          %4641 = vmatprep.subr.bf16.mxu0 0
          %4642 = vmatpush1.bf16.msra.mxu0 %v4594
          %4643 = vmatprep.mubr.bf16.mxu0 %v4548
          %4644 = vmatmul.mubr.bf16.gmra.mrb[0].mxu0 %v4547
          %v4645 = vpop.f32.mrb[0].mxu0
          %v4646 = vadd.f32 0.0, %v4645
          %v4647 = vpop.f32.mrb[0].mxu0
          %v4648 = vpop.f32.mrb[0].mxu0
          %v4649 = vadd.f32 0.0, %v4648
          %v4650 = vpop.f32.mrb[0].mxu0
          %4651 = vmatprep.mubr.bf16.mxu0 %v4550
          %4652 = vmatmul.mubr.bf16.gmra.mrb[0].mxu0 %v4549
          %v4653 = vpop.f32.mrb[0].mxu0
          %v4654 = vadd.f32 0.0, %v4653
          %v4655 = vpop.f32.mrb[0].mxu0
          %v4656 = vpop.f32.mrb[0].mxu0
          %v4657 = vadd.f32 0.0, %v4656
          %v4658 = vpop.f32.mrb[0].mxu0
          %4659 = vmatprep.mubr.bf16.mxu0 %v4552
          %4660 = vmatmul.mubr.bf16.gmra.mrb[0].mxu0 %v4551
          %v4661 = vpop.f32.mrb[0].mxu0
          %v4662 = vadd.f32 0.0, %v4661
          %v4663 = vpop.f32.mrb[0].mxu0
          %v4664 = vpop.f32.mrb[0].mxu0
          %v4665 = vadd.f32 0.0, %v4664
          %v4666 = vpop.f32.mrb[0].mxu0
          %4667 = vmatprep.mubr.bf16.mxu0 %v4554
          %4668 = vmatmul.mubr.bf16.gmra.mrb[0].mxu0 %v4553
          %v4669 = vpop.f32.mrb[0].mxu0
          %v4670 = vadd.f32 0.0, %v4669
          %v4671 = vpop.f32.mrb[0].mxu0
          %v4672 = vpop.f32.mrb[0].mxu0
          %v4673 = vadd.f32 0.0, %v4672
          %v4674 = vpop.f32.mrb[0].mxu0
          %4675 = vmatprep.mubr.bf16.mxu0 %v4556
          %4676 = vmatmul.mubr.bf16.gmra.mrb[0].mxu0 %v4555
          %v4677 = vpop.f32.mrb[0].mxu0
          %v4678 = vadd.f32 0.0, %v4677
          %v4679 = vpop.f32.mrb[0].mxu0
          %v4680 = vpop.f32.mrb[0].mxu0
          %v4681 = vadd.f32 0.0, %v4680
          %v4682 = vpop.f32.mrb[0].mxu0
          %4683 = vmatprep.mubr.bf16.mxu0 %v4558
          %4684 = vmatmul.mubr.bf16.gmra.mrb[0].mxu0 %v4557
          %v4685 = vpop.f32.mrb[0].mxu0
          %v4686 = vadd.f32 0.0, %v4685
          %v4687 = vpop.f32.mrb[0].mxu0
          %v4688 = vpop.f32.mrb[0].mxu0
          %v4689 = vadd.f32 0.0, %v4688
          %v4690 = vpop.f32.mrb[0].mxu0
          %4691 = vmatprep.mubr.bf16.mxu0 %v4560
          %4692 = vmatmul.mubr.bf16.gmra.mrb[0].mxu0 %v4559
          %v4693 = vpop.f32.mrb[0].mxu0
          %v4694 = vadd.f32 0.0, %v4693
          %v4695 = vpop.f32.mrb[0].mxu0
          %v4696 = vpop.f32.mrb[0].mxu0
          %v4697 = vadd.f32 0.0, %v4696
          %v4698 = vpop.f32.mrb[0].mxu0
          %4699 = vmatprep.mubr.bf16.mxu0 %v4562
          %4700 = vmatmul.mubr.bf16.gmra.mrb[0].mxu0 %v4561
          %v4701 = vpop.f32.mrb[0].mxu0
          %v4702 = vadd.f32 0.0, %v4701
          %v4703 = vpop.f32.mrb[0].mxu0
          %v4704 = vpop.f32.mrb[0].mxu0
          %v4705 = vadd.f32 0.0, %v4704
          %v4706 = vpop.f32.mrb[0].mxu0
          %4707 = vdwg.mxu0
          %v4708 = vmul.f32 %v4646, %v4531
          %v4709 = vmul.f32 %v4649, %v4532
          %v4710 = vmul.f32 %v4654, %v4533
          %v4711 = vmul.f32 %v4657, %v4534
          %v4712 = vmul.f32 %v4662, %v4535
          %v4713 = vmul.f32 %v4665, %v4536
          %v4714 = vmul.f32 %v4670, %v4537
          %v4715 = vmul.f32 %v4673, %v4538
          %v4716 = vmul.f32 %v4678, %v4539
          %v4717 = vmul.f32 %v4681, %v4540
          %v4718 = vmul.f32 %v4686, %v4541
          %v4719 = vmul.f32 %v4689, %v4542
          %v4720 = vmul.f32 %v4694, %v4543
          %v4721 = vmul.f32 %v4697, %v4544
          %v4722 = vmul.f32 %v4702, %v4545
          %v4723 = vmul.f32 %v4705, %v4546
          %v4724 = vadd.f32 %v4123, %v4708
          %v4725 = vadd.f32 %v4124, %v4709
          %v4726 = vadd.f32 %v4125, %v4710
          %v4727 = vadd.f32 %v4126, %v4711
          %v4728 = vadd.f32 %v4127, %v4712
          %v4729 = vadd.f32 %v4128, %v4713
          %v4730 = vadd.f32 %v4129, %v4714
          %v4731 = vadd.f32 %v4130, %v4715
          %v4732 = vadd.f32 %v4131, %v4716
          %v4733 = vadd.f32 %v4132, %v4717
          %v4734 = vadd.f32 %v4133, %v4718
          %v4735 = vadd.f32 %v4134, %v4719
          %v4736 = vadd.f32 %v4135, %v4720
          %v4737 = vadd.f32 %v4136, %v4721
          %v4738 = vadd.f32 %v4137, %v4722
          %v4739 = vadd.f32 %v4138, %v4723
          %4740 = vset.pattern.permute.xlu0 3
          %4741 = vperm.xlu0 %4740, %v2935
          %v4742 = vpop.permute.xlu0 %4741
          %4744 = vset.pattern.permute.xlu0 3
          %4745 = vperm.xlu0 %4744, %v2936
          %v4746 = vpop.permute.xlu0 %4745
          %4748 = vset.pattern.permute.xlu0 3
          %4749 = vperm.xlu0 %4748, %v2937
          %v4750 = vpop.permute.xlu0 %4749
          %4752 = vset.pattern.permute.xlu0 3
          %4753 = vperm.xlu0 %4752, %v2938
          %v4754 = vpop.permute.xlu0 %4753
          %4756 = vset.pattern.permute.xlu0 3
          %4757 = vperm.xlu0 %4756, %v2939
          %v4758 = vpop.permute.xlu0 %4757
          %4760 = vset.pattern.permute.xlu0 3
          %4761 = vperm.xlu0 %4760, %v2940
          %v4762 = vpop.permute.xlu0 %4761
          %4764 = vset.pattern.permute.xlu0 3
          %4765 = vperm.xlu0 %4764, %v2941
          %v4766 = vpop.permute.xlu0 %4765
          %4768 = vset.pattern.permute.xlu0 3
          %4769 = vperm.xlu0 %4768, %v2942
          %v4770 = vpop.permute.xlu0 %4769
          %4772 = vset.pattern.permute.xlu0 3
          %4773 = vperm.xlu0 %4772, %v2943
          %v4774 = vpop.permute.xlu0 %4773
          %4776 = vset.pattern.permute.xlu0 3
          %4777 = vperm.xlu0 %4776, %v2944
          %v4778 = vpop.permute.xlu0 %4777
          %4780 = vset.pattern.permute.xlu0 3
          %4781 = vperm.xlu0 %4780, %v2945
          %v4782 = vpop.permute.xlu0 %4781
          %4784 = vset.pattern.permute.xlu0 3
          %4785 = vperm.xlu0 %4784, %v2946
          %v4786 = vpop.permute.xlu0 %4785
          %4788 = vset.pattern.permute.xlu0 3
          %4789 = vperm.xlu0 %4788, %v2947
          %v4790 = vpop.permute.xlu0 %4789
          %4792 = vset.pattern.permute.xlu0 3
          %4793 = vperm.xlu0 %4792, %v2948
          %v4794 = vpop.permute.xlu0 %4793
          %4796 = vset.pattern.permute.xlu0 3
          %4797 = vperm.xlu0 %4796, %v2949
          %v4798 = vpop.permute.xlu0 %4797
          %4800 = vset.pattern.permute.xlu0 3
          %4801 = vperm.xlu0 %4800, %v2950
          %v4802 = vpop.permute.xlu0 %4801
          %v4804 = vlaneseq
          %v4805 = vshrl.u32 %v4804, 7
          %v4806 = vsub.s32 3, %v4805
          %v4807 = vrot.slane %v2951, %v4806
          %v4808 = vlaneseq
          %v4809 = vshrl.u32 %v4808, 7
          %v4810 = vsub.s32 3, %v4809
          %v4811 = vrot.slane %v2952, %v4810
          %v4812 = vadd.f32 %v4742, %v4807
          %v4813 = vadd.f32 %v4742, %v4811
          %v4814 = vadd.f32 %v4746, %v4807
          %v4815 = vadd.f32 %v4746, %v4811
          %v4816 = vadd.f32 %v4750, %v4807
          %v4817 = vadd.f32 %v4750, %v4811
          %v4818 = vadd.f32 %v4754, %v4807
          %v4819 = vadd.f32 %v4754, %v4811
          %v4820 = vadd.f32 %v4758, %v4807
          %v4821 = vadd.f32 %v4758, %v4811
          %v4822 = vadd.f32 %v4762, %v4807
          %v4823 = vadd.f32 %v4762, %v4811
          %v4824 = vadd.f32 %v4766, %v4807
          %v4825 = vadd.f32 %v4766, %v4811
          %v4826 = vadd.f32 %v4770, %v4807
          %v4827 = vadd.f32 %v4770, %v4811
          %v4828 = vadd.f32 %v4774, %v4807
          %v4829 = vadd.f32 %v4774, %v4811
          %v4830 = vadd.f32 %v4778, %v4807
          %v4831 = vadd.f32 %v4778, %v4811
          %v4832 = vadd.f32 %v4782, %v4807
          %v4833 = vadd.f32 %v4782, %v4811
          %v4834 = vadd.f32 %v4786, %v4807
          %v4835 = vadd.f32 %v4786, %v4811
          %v4836 = vadd.f32 %v4790, %v4807
          %v4837 = vadd.f32 %v4790, %v4811
          %v4838 = vadd.f32 %v4794, %v4807
          %v4839 = vadd.f32 %v4794, %v4811
          %v4840 = vadd.f32 %v4798, %v4807
          %v4841 = vadd.f32 %v4798, %v4811
          %v4842 = vadd.f32 %v4802, %v4807
          %v4843 = vadd.f32 %v4802, %v4811
          %v4844 = vmul.f32 %v4812, 0.2
          %v4845 = vmul.f32 %v4813, 0.2
          %v4846 = vmul.f32 %v4814, 0.2
          %v4847 = vmul.f32 %v4815, 0.2
          %v4848 = vmul.f32 %v4816, 0.2
          %v4849 = vmul.f32 %v4817, 0.2
          %v4850 = vmul.f32 %v4818, 0.2
          %v4851 = vmul.f32 %v4819, 0.2
          %v4852 = vmul.f32 %v4820, 0.2
          %v4853 = vmul.f32 %v4821, 0.2
          %v4854 = vmul.f32 %v4822, 0.2
          %v4855 = vmul.f32 %v4823, 0.2
          %v4856 = vmul.f32 %v4824, 0.2
          %v4857 = vmul.f32 %v4825, 0.2
          %v4858 = vmul.f32 %v4826, 0.2
          %v4859 = vmul.f32 %v4827, 0.2
          %v4860 = vmul.f32 %v4828, 0.2
          %v4861 = vmul.f32 %v4829, 0.2
          %v4862 = vmul.f32 %v4830, 0.2
          %v4863 = vmul.f32 %v4831, 0.2
          %v4864 = vmul.f32 %v4832, 0.2
          %v4865 = vmul.f32 %v4833, 0.2
          %v4866 = vmul.f32 %v4834, 0.2
          %v4867 = vmul.f32 %v4835, 0.2
          %v4868 = vmul.f32 %v4836, 0.2
          %v4869 = vmul.f32 %v4837, 0.2
          %v4870 = vmul.f32 %v4838, 0.2
          %v4871 = vmul.f32 %v4839, 0.2
          %v4872 = vmul.f32 %v4840, 0.2
          %v4873 = vmul.f32 %v4841, 0.2
          %v4874 = vmul.f32 %v4842, 0.2
          %v4875 = vmul.f32 %v4843, 0.2
          %v4876 = vmax.f32 %v4812, %v4844
          %v4877 = vmax.f32 %v4813, %v4845
          %v4878 = vmax.f32 %v4814, %v4846
          %v4879 = vmax.f32 %v4815, %v4847
          %v4880 = vmax.f32 %v4816, %v4848
          %v4881 = vmax.f32 %v4817, %v4849
          %v4882 = vmax.f32 %v4818, %v4850
          %v4883 = vmax.f32 %v4819, %v4851
          %v4884 = vmax.f32 %v4820, %v4852
          %v4885 = vmax.f32 %v4821, %v4853
          %v4886 = vmax.f32 %v4822, %v4854
          %v4887 = vmax.f32 %v4823, %v4855
          %v4888 = vmax.f32 %v4824, %v4856
          %v4889 = vmax.f32 %v4825, %v4857
          %v4890 = vmax.f32 %v4826, %v4858
          %v4891 = vmax.f32 %v4827, %v4859
          %v4892 = vmax.f32 %v4828, %v4860
          %v4893 = vmax.f32 %v4829, %v4861
          %v4894 = vmax.f32 %v4830, %v4862
          %v4895 = vmax.f32 %v4831, %v4863
          %v4896 = vmax.f32 %v4832, %v4864
          %v4897 = vmax.f32 %v4833, %v4865
          %v4898 = vmax.f32 %v4834, %v4866
          %v4899 = vmax.f32 %v4835, %v4867
          %v4900 = vmax.f32 %v4836, %v4868
          %v4901 = vmax.f32 %v4837, %v4869
          %v4902 = vmax.f32 %v4838, %v4870
          %v4903 = vmax.f32 %v4839, %v4871
          %v4904 = vmax.f32 %v4840, %v4872
          %v4905 = vmax.f32 %v4841, %v4873
          %v4906 = vmax.f32 %v4842, %v4874
          %v4907 = vmax.f32 %v4843, %v4875
          %v4908 = vadd.f32 %v4876, %v2886
          %v4909 = vadd.f32 %v4877, %v2887
          %v4910 = vadd.f32 %v4878, %v2888
          %v4911 = vadd.f32 %v4879, %v2889
          %v4912 = vadd.f32 %v4880, %v2890
          %v4913 = vadd.f32 %v4881, %v2891
          %v4914 = vadd.f32 %v4882, %v2892
          %v4915 = vadd.f32 %v4883, %v2893
          %v4916 = vadd.f32 %v4884, %v2894
          %v4917 = vadd.f32 %v4885, %v2895
          %v4918 = vadd.f32 %v4886, %v2896
          %v4919 = vadd.f32 %v4887, %v2897
          %v4920 = vadd.f32 %v4888, %v2898
          %v4921 = vadd.f32 %v4889, %v2899
          %v4922 = vadd.f32 %v4890, %v2900
          %v4923 = vadd.f32 %v4891, %v2901
          %v4924 = vadd.f32 %v4892, %v2902
          %v4925 = vadd.f32 %v4893, %v2903
          %v4926 = vadd.f32 %v4894, %v2904
          %v4927 = vadd.f32 %v4895, %v2905
          %v4928 = vadd.f32 %v4896, %v2906
          %v4929 = vadd.f32 %v4897, %v2907
          %v4930 = vadd.f32 %v4898, %v2908
          %v4931 = vadd.f32 %v4899, %v2909
          %v4932 = vadd.f32 %v4900, %v2910
          %v4933 = vadd.f32 %v4901, %v2911
          %v4934 = vadd.f32 %v4902, %v2912
          %v4935 = vadd.f32 %v4903, %v2913
          %v4936 = vadd.f32 %v4904, %v2914
          %v4937 = vadd.f32 %v4905, %v2915
          %v4938 = vadd.f32 %v4906, %v2916
          %v4939 = vadd.f32 %v4907, %v2917
          %v4940 = vmax.f32 %v4908, %v4909
          %4941 = vmax.xlane.f32.xlu0 %v4940
          %v4942 = vpop.xlane.xlu0 %4941
          %v4943 = vmax.f32 %v4910, %v4911
          %4944 = vmax.xlane.f32.xlu0 %v4943
          %v4945 = vpop.xlane.xlu0 %4944
          %v4946 = vmax.f32 %v4912, %v4913
          %4947 = vmax.xlane.f32.xlu0 %v4946
          %v4948 = vpop.xlane.xlu0 %4947
          %v4949 = vmax.f32 %v4914, %v4915
          %4950 = vmax.xlane.f32.xlu0 %v4949
          %v4951 = vpop.xlane.xlu0 %4950
          %v4952 = vmax.f32 %v4916, %v4917
          %4953 = vmax.xlane.f32.xlu0 %v4952
          %v4954 = vpop.xlane.xlu0 %4953
          %v4955 = vmax.f32 %v4918, %v4919
          %4956 = vmax.xlane.f32.xlu0 %v4955
          %v4957 = vpop.xlane.xlu0 %4956
          %v4958 = vmax.f32 %v4920, %v4921
          %4959 = vmax.xlane.f32.xlu0 %v4958
          %v4960 = vpop.xlane.xlu0 %4959
          %v4961 = vmax.f32 %v4922, %v4923
          %4962 = vmax.xlane.f32.xlu0 %v4961
          %v4963 = vpop.xlane.xlu0 %4962
          %v4964 = vmax.f32 %v4924, %v4925
          %4965 = vmax.xlane.f32.xlu0 %v4964
          %v4966 = vpop.xlane.xlu0 %4965
          %v4967 = vmax.f32 %v4926, %v4927
          %4968 = vmax.xlane.f32.xlu0 %v4967
          %v4969 = vpop.xlane.xlu0 %4968
          %v4970 = vmax.f32 %v4928, %v4929
          %4971 = vmax.xlane.f32.xlu0 %v4970
          %v4972 = vpop.xlane.xlu0 %4971
          %v4973 = vmax.f32 %v4930, %v4931
          %4974 = vmax.xlane.f32.xlu0 %v4973
          %v4975 = vpop.xlane.xlu0 %4974
          %v4976 = vmax.f32 %v4932, %v4933
          %4977 = vmax.xlane.f32.xlu0 %v4976
          %v4978 = vpop.xlane.xlu0 %4977
          %v4979 = vmax.f32 %v4934, %v4935
          %4980 = vmax.xlane.f32.xlu0 %v4979
          %v4981 = vpop.xlane.xlu0 %4980
          %v4982 = vmax.f32 %v4936, %v4937
          %4983 = vmax.xlane.f32.xlu0 %v4982
          %v4984 = vpop.xlane.xlu0 %4983
          %v4985 = vmax.f32 %v4938, %v4939
          %4986 = vmax.xlane.f32.xlu0 %v4985
          %v4987 = vpop.xlane.xlu0 %4986
          %v4988 = vsub.f32 %v4908, %v4942
          %v4989 = vsub.f32 %v4909, %v4942
          %v4990 = vsub.f32 %v4910, %v4945
          %v4991 = vsub.f32 %v4911, %v4945
          %v4992 = vsub.f32 %v4912, %v4948
          %v4993 = vsub.f32 %v4913, %v4948
          %v4994 = vsub.f32 %v4914, %v4951
          %v4995 = vsub.f32 %v4915, %v4951
          %v4996 = vsub.f32 %v4916, %v4954
          %v4997 = vsub.f32 %v4917, %v4954
          %v4998 = vsub.f32 %v4918, %v4957
          %v4999 = vsub.f32 %v4919, %v4957
          %v5000 = vsub.f32 %v4920, %v4960
          %v5001 = vsub.f32 %v4921, %v4960
          %v5002 = vsub.f32 %v4922, %v4963
          %v5003 = vsub.f32 %v4923, %v4963
          %v5004 = vsub.f32 %v4924, %v4966
          %v5005 = vsub.f32 %v4925, %v4966
          %v5006 = vsub.f32 %v4926, %v4969
          %v5007 = vsub.f32 %v4927, %v4969
          %v5008 = vsub.f32 %v4928, %v4972
          %v5009 = vsub.f32 %v4929, %v4972
          %v5010 = vsub.f32 %v4930, %v4975
          %v5011 = vsub.f32 %v4931, %v4975
          %v5012 = vsub.f32 %v4932, %v4978
          %v5013 = vsub.f32 %v4933, %v4978
          %v5014 = vsub.f32 %v4934, %v4981
          %v5015 = vsub.f32 %v4935, %v4981
          %v5016 = vsub.f32 %v4936, %v4984
          %v5017 = vsub.f32 %v4937, %v4984
          %v5018 = vsub.f32 %v4938, %v4987
          %v5019 = vsub.f32 %v4939, %v4987
          %v5020 = vmul.f32 %v4988, 1.442695
          %v5021 = vpow.pop %v5020
          %v5022 = vmul.f32 %v4989, 1.442695
          %v5023 = vpow.pop %v5022
          %v5024 = vmul.f32 %v4990, 1.442695
          %v5025 = vpow.pop %v5024
          %v5026 = vmul.f32 %v4991, 1.442695
          %v5027 = vpow.pop %v5026
          %v5028 = vmul.f32 %v4992, 1.442695
          %v5029 = vpow.pop %v5028
          %v5030 = vmul.f32 %v4993, 1.442695
          %v5031 = vpow.pop %v5030
          %v5032 = vmul.f32 %v4994, 1.442695
          %v5033 = vpow.pop %v5032
          %v5034 = vmul.f32 %v4995, 1.442695
          %v5035 = vpow.pop %v5034
          %v5036 = vmul.f32 %v4996, 1.442695
          %v5037 = vpow.pop %v5036
          %v5038 = vmul.f32 %v4997, 1.442695
          %v5039 = vpow.pop %v5038
          %v5040 = vmul.f32 %v4998, 1.442695
          %v5041 = vpow.pop %v5040
          %v5042 = vmul.f32 %v4999, 1.442695
          %v5043 = vpow.pop %v5042
          %v5044 = vmul.f32 %v5000, 1.442695
          %v5045 = vpow.pop %v5044
          %v5046 = vmul.f32 %v5001, 1.442695
          %v5047 = vpow.pop %v5046
          %v5048 = vmul.f32 %v5002, 1.442695
          %v5049 = vpow.pop %v5048
          %v5050 = vmul.f32 %v5003, 1.442695
          %v5051 = vpow.pop %v5050
          %v5052 = vmul.f32 %v5004, 1.442695
          %v5053 = vpow.pop %v5052
          %v5054 = vmul.f32 %v5005, 1.442695
          %v5055 = vpow.pop %v5054
          %v5056 = vmul.f32 %v5006, 1.442695
          %v5057 = vpow.pop %v5056
          %v5058 = vmul.f32 %v5007, 1.442695
          %v5059 = vpow.pop %v5058
          %v5060 = vmul.f32 %v5008, 1.442695
          %v5061 = vpow.pop %v5060
          %v5062 = vmul.f32 %v5009, 1.442695
          %v5063 = vpow.pop %v5062
          %v5064 = vmul.f32 %v5010, 1.442695
          %v5065 = vpow.pop %v5064
          %v5066 = vmul.f32 %v5011, 1.442695
          %v5067 = vpow.pop %v5066
          %v5068 = vmul.f32 %v5012, 1.442695
          %v5069 = vpow.pop %v5068
          %v5070 = vmul.f32 %v5013, 1.442695
          %v5071 = vpow.pop %v5070
          %v5072 = vmul.f32 %v5014, 1.442695
          %v5073 = vpow.pop %v5072
          %v5074 = vmul.f32 %v5015, 1.442695
          %v5075 = vpow.pop %v5074
          %v5076 = vmul.f32 %v5016, 1.442695
          %v5077 = vpow.pop %v5076
          %v5078 = vmul.f32 %v5017, 1.442695
          %v5079 = vpow.pop %v5078
          %v5080 = vmul.f32 %v5018, 1.442695
          %v5081 = vpow.pop %v5080
          %v5082 = vmul.f32 %v5019, 1.442695
          %v5083 = vpow.pop %v5082
          %v5084 = vadd.f32 %v5021, %v5023
          %5085 = vadd.xlane.f32.xlu0 %v5084
          %v5086 = vpop.xlane.xlu0 %5085
          %v5087 = vadd.f32 %v5025, %v5027
          %5088 = vadd.xlane.f32.xlu0 %v5087
          %v5089 = vpop.xlane.xlu0 %5088
          %v5090 = vadd.f32 %v5029, %v5031
          %5091 = vadd.xlane.f32.xlu0 %v5090
          %v5092 = vpop.xlane.xlu0 %5091
          %v5093 = vadd.f32 %v5033, %v5035
          %5094 = vadd.xlane.f32.xlu0 %v5093
          %v5095 = vpop.xlane.xlu0 %5094
          %v5096 = vadd.f32 %v5037, %v5039
          %5097 = vadd.xlane.f32.xlu0 %v5096
          %v5098 = vpop.xlane.xlu0 %5097
          %v5099 = vadd.f32 %v5041, %v5043
          %5100 = vadd.xlane.f32.xlu0 %v5099
          %v5101 = vpop.xlane.xlu0 %5100
          %v5102 = vadd.f32 %v5045, %v5047
          %5103 = vadd.xlane.f32.xlu0 %v5102
          %v5104 = vpop.xlane.xlu0 %5103
          %v5105 = vadd.f32 %v5049, %v5051
          %5106 = vadd.xlane.f32.xlu0 %v5105
          %v5107 = vpop.xlane.xlu0 %5106
          %v5108 = vadd.f32 %v5053, %v5055
          %5109 = vadd.xlane.f32.xlu0 %v5108
          %v5110 = vpop.xlane.xlu0 %5109
          %v5111 = vadd.f32 %v5057, %v5059
          %5112 = vadd.xlane.f32.xlu0 %v5111
          %v5113 = vpop.xlane.xlu0 %5112
          %v5114 = vadd.f32 %v5061, %v5063
          %5115 = vadd.xlane.f32.xlu0 %v5114
          %v5116 = vpop.xlane.xlu0 %5115
          %v5117 = vadd.f32 %v5065, %v5067
          %5118 = vadd.xlane.f32.xlu0 %v5117
          %v5119 = vpop.xlane.xlu0 %5118
          %v5120 = vadd.f32 %v5069, %v5071
          %5121 = vadd.xlane.f32.xlu0 %v5120
          %v5122 = vpop.xlane.xlu0 %5121
          %v5123 = vadd.f32 %v5073, %v5075
          %5124 = vadd.xlane.f32.xlu0 %v5123
          %v5125 = vpop.xlane.xlu0 %5124
          %v5126 = vadd.f32 %v5077, %v5079
          %5127 = vadd.xlane.f32.xlu0 %v5126
          %v5128 = vpop.xlane.xlu0 %5127
          %v5129 = vadd.f32 %v5081, %v5083
          %5130 = vadd.xlane.f32.xlu0 %v5129
          %v5131 = vpop.xlane.xlu0 %5130
          %v5132 = vrcp.pop %v5086
          %v5133 = vrcp.pop %v5089
          %v5134 = vrcp.pop %v5092
          %v5135 = vrcp.pop %v5095
          %v5136 = vrcp.pop %v5098
          %v5137 = vrcp.pop %v5101
          %v5138 = vrcp.pop %v5104
          %v5139 = vrcp.pop %v5107
          %v5140 = vrcp.pop %v5110
          %v5141 = vrcp.pop %v5113
          %v5142 = vrcp.pop %v5116
          %v5143 = vrcp.pop %v5119
          %v5144 = vrcp.pop %v5122
          %v5145 = vrcp.pop %v5125
          %v5146 = vrcp.pop %v5128
          %v5147 = vrcp.pop %v5131
          %v5148 = vpack.c.bf16 %v5025, %v5021
          %v5149 = vpack.c.bf16 %v5027, %v5023
          %v5150 = vpack.c.bf16 %v5033, %v5029
          %v5151 = vpack.c.bf16 %v5035, %v5031
          %v5152 = vpack.c.bf16 %v5041, %v5037
          %v5153 = vpack.c.bf16 %v5043, %v5039
          %v5154 = vpack.c.bf16 %v5049, %v5045
          %v5155 = vpack.c.bf16 %v5051, %v5047
          %v5156 = vpack.c.bf16 %v5057, %v5053
          %v5157 = vpack.c.bf16 %v5059, %v5055
          %v5158 = vpack.c.bf16 %v5065, %v5061
          %v5159 = vpack.c.bf16 %v5067, %v5063
          %v5160 = vpack.c.bf16 %v5073, %v5069
          %v5161 = vpack.c.bf16 %v5075, %v5071
          %v5162 = vpack.c.bf16 %v5081, %v5077
          %v5163 = vpack.c.bf16 %v5083, %v5079
          %5164 = vrot.lane.b32.xlu0 %v2918, 80
          %v5165 = vpop.permute.xlu0 %5164
          %5166 = vrot.lane.b32.xlu0 %v2919, 80
          %v5167 = vpop.permute.xlu0 %5166
          %5168 = vrot.lane.b32.xlu0 %v2920, 80
          %v5169 = vpop.permute.xlu0 %5168
          %5170 = vrot.lane.b32.xlu0 %v2921, 80
          %v5171 = vpop.permute.xlu0 %5170
          %5172 = vrot.lane.b32.xlu0 %v2922, 80
          %v5173 = vpop.permute.xlu0 %5172
          %5174 = vrot.lane.b32.xlu0 %v2923, 80
          %v5175 = vpop.permute.xlu0 %5174
          %5176 = vrot.lane.b32.xlu0 %v2924, 80
          %v5177 = vpop.permute.xlu0 %5176
          %5178 = vrot.lane.b32.xlu0 %v2925, 80
          %v5179 = vpop.permute.xlu0 %5178
          %5180 = vrot.lane.b32.xlu0 %v2926, 80
          %v5181 = vpop.permute.xlu0 %5180
          %5182 = vrot.lane.b32.xlu0 %v2927, 80
          %v5183 = vpop.permute.xlu0 %5182
          %5184 = vrot.lane.b32.xlu0 %v2928, 80
          %v5185 = vpop.permute.xlu0 %5184
          %5186 = vrot.lane.b32.xlu0 %v2929, 80
          %v5187 = vpop.permute.xlu0 %5186
          %5188 = vrot.lane.b32.xlu0 %v2930, 80
          %v5189 = vpop.permute.xlu0 %5188
          %5190 = vrot.lane.b32.xlu0 %v2931, 80
          %v5191 = vpop.permute.xlu0 %5190
          %5192 = vrot.lane.b32.xlu0 %v2932, 80
          %v5193 = vpop.permute.xlu0 %5192
          %5194 = vrot.lane.b32.xlu0 %v2933, 80
          %v5195 = vpop.permute.xlu0 %5194
          %5212 = vmatprep.subr.bf16.mxu0 0
          %5213 = vmatpush1.bf16.msra.mxu0 %v5165
          %5214 = vmatprep.subr.bf16.mxu0 0
          %5215 = vmatpush1.bf16.msra.mxu0 %v5167
          %5216 = vmatprep.subr.bf16.mxu0 0
          %5217 = vmatpush1.bf16.msra.mxu0 %v5169
          %5218 = vmatprep.subr.bf16.mxu0 0
          %5219 = vmatpush1.bf16.msra.mxu0 %v5171
          %5220 = vmatprep.subr.bf16.mxu0 0
          %5221 = vmatpush1.bf16.msra.mxu0 %v5173
          %5222 = vmatprep.subr.bf16.mxu0 0
          %5223 = vmatpush1.bf16.msra.mxu0 %v5175
          %5224 = vmatprep.subr.bf16.mxu0 0
          %5225 = vmatpush1.bf16.msra.mxu0 %v5177
          %5226 = vmatprep.subr.bf16.mxu0 0
          %5227 = vmatpush1.bf16.msra.mxu0 %v5179
          %5228 = vmatprep.subr.bf16.mxu0 0
          %5229 = vmatpush1.bf16.msra.mxu0 %v5181
          %5230 = vmatprep.subr.bf16.mxu0 0
          %5231 = vmatpush1.bf16.msra.mxu0 %v5183
          %5232 = vmatprep.subr.bf16.mxu0 0
          %5233 = vmatpush1.bf16.msra.mxu0 %v5185
          %5234 = vmatprep.subr.bf16.mxu0 0
          %5235 = vmatpush1.bf16.msra.mxu0 %v5187
          %5236 = vmatprep.subr.bf16.mxu0 0
          %5237 = vmatpush1.bf16.msra.mxu0 %v5189
          %5238 = vmatprep.subr.bf16.mxu0 0
          %5239 = vmatpush1.bf16.msra.mxu0 %v5191
          %5240 = vmatprep.subr.bf16.mxu0 0
          %5241 = vmatpush1.bf16.msra.mxu0 %v5193
          %5242 = vmatprep.subr.bf16.mxu0 0
          %5243 = vmatpush1.bf16.msra.mxu0 %v5195
          %5244 = vmatprep.mubr.bf16.mxu0 %v5149
          %5245 = vmatmul.mubr.bf16.gmra.mrb[0].mxu0 %v5148
          %v5246 = vpop.f32.mrb[0].mxu0
          %v5247 = vadd.f32 0.0, %v5246
          %v5248 = vpop.f32.mrb[0].mxu0
          %v5249 = vpop.f32.mrb[0].mxu0
          %v5250 = vadd.f32 0.0, %v5249
          %v5251 = vpop.f32.mrb[0].mxu0
          %5252 = vmatprep.mubr.bf16.mxu0 %v5151
          %5253 = vmatmul.mubr.bf16.gmra.mrb[0].mxu0 %v5150
          %v5254 = vpop.f32.mrb[0].mxu0
          %v5255 = vadd.f32 0.0, %v5254
          %v5256 = vpop.f32.mrb[0].mxu0
          %v5257 = vpop.f32.mrb[0].mxu0
          %v5258 = vadd.f32 0.0, %v5257
          %v5259 = vpop.f32.mrb[0].mxu0
          %5260 = vmatprep.mubr.bf16.mxu0 %v5153
          %5261 = vmatmul.mubr.bf16.gmra.mrb[0].mxu0 %v5152
          %v5262 = vpop.f32.mrb[0].mxu0
          %v5263 = vadd.f32 0.0, %v5262
          %v5264 = vpop.f32.mrb[0].mxu0
          %v5265 = vpop.f32.mrb[0].mxu0
          %v5266 = vadd.f32 0.0, %v5265
          %v5267 = vpop.f32.mrb[0].mxu0
          %5268 = vmatprep.mubr.bf16.mxu0 %v5155
          %5269 = vmatmul.mubr.bf16.gmra.mrb[0].mxu0 %v5154
          %v5270 = vpop.f32.mrb[0].mxu0
          %v5271 = vadd.f32 0.0, %v5270
          %v5272 = vpop.f32.mrb[0].mxu0
          %v5273 = vpop.f32.mrb[0].mxu0
          %v5274 = vadd.f32 0.0, %v5273
          %v5275 = vpop.f32.mrb[0].mxu0
          %5276 = vmatprep.mubr.bf16.mxu0 %v5157
          %5277 = vmatmul.mubr.bf16.gmra.mrb[0].mxu0 %v5156
          %v5278 = vpop.f32.mrb[0].mxu0
          %v5279 = vadd.f32 0.0, %v5278
          %v5280 = vpop.f32.mrb[0].mxu0
          %v5281 = vpop.f32.mrb[0].mxu0
          %v5282 = vadd.f32 0.0, %v5281
          %v5283 = vpop.f32.mrb[0].mxu0
          %5284 = vmatprep.mubr.bf16.mxu0 %v5159
          %5285 = vmatmul.mubr.bf16.gmra.mrb[0].mxu0 %v5158
          %v5286 = vpop.f32.mrb[0].mxu0
          %v5287 = vadd.f32 0.0, %v5286
          %v5288 = vpop.f32.mrb[0].mxu0
          %v5289 = vpop.f32.mrb[0].mxu0
          %v5290 = vadd.f32 0.0, %v5289
          %v5291 = vpop.f32.mrb[0].mxu0
          %5292 = vmatprep.mubr.bf16.mxu0 %v5161
          %5293 = vmatmul.mubr.bf16.gmra.mrb[0].mxu0 %v5160
          %v5294 = vpop.f32.mrb[0].mxu0
          %v5295 = vadd.f32 0.0, %v5294
          %v5296 = vpop.f32.mrb[0].mxu0
          %v5297 = vpop.f32.mrb[0].mxu0
          %v5298 = vadd.f32 0.0, %v5297
          %v5299 = vpop.f32.mrb[0].mxu0
          %5300 = vmatprep.mubr.bf16.mxu0 %v5163
          %5301 = vmatmul.mubr.bf16.gmra.mrb[0].mxu0 %v5162
          %v5302 = vpop.f32.mrb[0].mxu0
          %v5303 = vadd.f32 0.0, %v5302
          %v5304 = vpop.f32.mrb[0].mxu0
          %v5305 = vpop.f32.mrb[0].mxu0
          %v5306 = vadd.f32 0.0, %v5305
          %v5307 = vpop.f32.mrb[0].mxu0
          %5308 = vdwg.mxu0
          %v5309 = vmul.f32 %v5247, %v5132
          %v5310 = vmul.f32 %v5250, %v5133
          %v5311 = vmul.f32 %v5255, %v5134
          %v5312 = vmul.f32 %v5258, %v5135
          %v5313 = vmul.f32 %v5263, %v5136
          %v5314 = vmul.f32 %v5266, %v5137
          %v5315 = vmul.f32 %v5271, %v5138
          %v5316 = vmul.f32 %v5274, %v5139
          %v5317 = vmul.f32 %v5279, %v5140
          %v5318 = vmul.f32 %v5282, %v5141
          %v5319 = vmul.f32 %v5287, %v5142
          %v5320 = vmul.f32 %v5290, %v5143
          %v5321 = vmul.f32 %v5295, %v5144
          %v5322 = vmul.f32 %v5298, %v5145
          %v5323 = vmul.f32 %v5303, %v5146
          %v5324 = vmul.f32 %v5306, %v5147
          %v5325 = vadd.f32 %v4724, %v5309
          %v5326 = vadd.f32 %v4725, %v5310
          %v5327 = vadd.f32 %v4726, %v5311
          %v5328 = vadd.f32 %v4727, %v5312
          %v5329 = vadd.f32 %v4728, %v5313
          %v5330 = vadd.f32 %v4729, %v5314
          %v5331 = vadd.f32 %v4730, %v5315
          %v5332 = vadd.f32 %v4731, %v5316
          %v5333 = vadd.f32 %v4732, %v5317
          %v5334 = vadd.f32 %v4733, %v5318
          %v5335 = vadd.f32 %v4734, %v5319
          %v5336 = vadd.f32 %v4735, %v5320
          %v5337 = vadd.f32 %v4736, %v5321
          %v5338 = vadd.f32 %v4737, %v5322
          %v5339 = vadd.f32 %v4738, %v5323
          %v5340 = vadd.f32 %v4739, %v5324
          %v5341 = vmul.f32 %v5325, 0.25
          %v5342 = vmul.f32 %v5326, 0.25
          %v5343 = vmul.f32 %v5327, 0.25
          %v5344 = vmul.f32 %v5328, 0.25
          %v5345 = vmul.f32 %v5329, 0.25
          %v5346 = vmul.f32 %v5330, 0.25
          %v5347 = vmul.f32 %v5331, 0.25
          %v5348 = vmul.f32 %v5332, 0.25
          %v5349 = vmul.f32 %v5333, 0.25
          %v5350 = vmul.f32 %v5334, 0.25
          %v5351 = vmul.f32 %v5335, 0.25
          %v5352 = vmul.f32 %v5336, 0.25
          %v5353 = vmul.f32 %v5337, 0.25
          %v5354 = vmul.f32 %v5338, 0.25
          %v5355 = vmul.f32 %v5339, 0.25
          %v5356 = vmul.f32 %v5340, 0.25
          %v5357 = vld [vmem:[%s12] sm:$0x1]
          %v5359 = vlaneseq
          %v5360 = vshrl.u32 %v5359, 7
          %v5361 = vsub.s32 0, %v5360
          %v5362 = vrot.slane %v5357, %v5361
          %v5364 = vadd.f32 %v5341, %v5362
          %v5365 = vadd.f32 %v5342, %v5362
          %v5366 = vadd.f32 %v5343, %v5362
          %v5367 = vadd.f32 %v5344, %v5362
          %v5368 = vadd.f32 %v5345, %v5362
          %v5369 = vadd.f32 %v5346, %v5362
          %v5370 = vadd.f32 %v5347, %v5362
          %v5371 = vadd.f32 %v5348, %v5362
          %v5372 = vadd.f32 %v5349, %v5362
          %v5373 = vadd.f32 %v5350, %v5362
          %v5374 = vadd.f32 %v5351, %v5362
          %v5375 = vadd.f32 %v5352, %v5362
          %v5376 = vadd.f32 %v5353, %v5362
          %v5377 = vadd.f32 %v5354, %v5362
          %v5378 = vadd.f32 %v5355, %v5362
          %v5379 = vadd.f32 %v5356, %v5362
          %s5380 = scalar_lea.vmem [#allocation7], %s631
          %vm5381 = vcmask 130048
          %5382 = vst.msk [vmem:[%s5380] sm:$0xff] %vm5381, %v5364
          %5383 = vst.msk [vmem:[%s5380 + $0x8] sm:$0xff] %vm5381, %v5365
          %5384 = vst.msk [vmem:[%s5380 + $0x10] sm:$0xff] %vm5381, %v5366
          %5385 = vst.msk [vmem:[%s5380 + $0x18] sm:$0xff] %vm5381, %v5367
          %5386 = vst.msk [vmem:[%s5380 + $0x20] sm:$0xff] %vm5381, %v5368
          %5387 = vst.msk [vmem:[%s5380 + $0x28] sm:$0xff] %vm5381, %v5369
          %5388 = vst.msk [vmem:[%s5380 + $0x30] sm:$0xff] %vm5381, %v5370
          %5389 = vst.msk [vmem:[%s5380 + $0x38] sm:$0xff] %vm5381, %v5371
          %5390 = vst.msk [vmem:[%s5380 + $0x40] sm:$0xff] %vm5381, %v5372
          %5391 = vst.msk [vmem:[%s5380 + $0x48] sm:$0xff] %vm5381, %v5373
          %5392 = vst.msk [vmem:[%s5380 + $0x50] sm:$0xff] %vm5381, %v5374
          %5393 = vst.msk [vmem:[%s5380 + $0x58] sm:$0xff] %vm5381, %v5375
          %5394 = vst.msk [vmem:[%s5380 + $0x60] sm:$0xff] %vm5381, %v5376
          %5395 = vst.msk [vmem:[%s5380 + $0x68] sm:$0xff] %vm5381, %v5377
          %5396 = vst.msk [vmem:[%s5380 + $0x70] sm:$0xff] %vm5381, %v5378
          %5397 = vst.msk [vmem:[%s5380 + $0x78] sm:$0xff] %vm5381, %v5379
          %p5398 = scmp.eq.s32.totalorder %s36, 1
          // Predicated region
          $region105: #{persuasion_gnn_forward.1} parent=103 // pred_check
            %p5399 = pneg %p5398
          $region106: #{persuasion_gnn_forward.1} parent=103 // pred_check_branch
            %5401 = sbr.rel (%p5399) target = $region108
          $region107: #{persuasion_gnn_forward.1} parent=103 // pred_region
            %v5402 = vld [vmem:[%s3] sm:$0xf]
            %v5403 = vld [vmem:[#allocation7] sm:$0xff]
            %v5404 = vld [vmem:[#allocation7 + $0x8] sm:$0xff]
            %v5405 = vld [vmem:[#allocation7 + $0x10] sm:$0xff]
            %v5406 = vld [vmem:[#allocation7 + $0x18] sm:$0xff]
            %v5407 = vld [vmem:[#allocation7 + $0x20] sm:$0xff]
            %v5408 = vld [vmem:[#allocation7 + $0x28] sm:$0xff]
            %v5409 = vld [vmem:[#allocation7 + $0x30] sm:$0xff]
            %v5410 = vld [vmem:[#allocation7 + $0x38] sm:$0xff]
            %v5411 = vld [vmem:[#allocation7 + $0x40] sm:$0xff]
            %v5412 = vld [vmem:[#allocation7 + $0x48] sm:$0xff]
            %v5413 = vld [vmem:[#allocation7 + $0x50] sm:$0xff]
            %v5414 = vld [vmem:[#allocation7 + $0x58] sm:$0xff]
            %v5415 = vld [vmem:[#allocation7 + $0x60] sm:$0xff]
            %v5416 = vld [vmem:[#allocation7 + $0x68] sm:$0xff]
            %v5417 = vld [vmem:[#allocation7 + $0x70] sm:$0xff]
            %v5418 = vld [vmem:[#allocation7 + $0x78] sm:$0xff]
            %v5419 = vld [vmem:[#allocation7 + $0x80] sm:$0xff]
            %v5420 = vld [vmem:[#allocation7 + $0x88] sm:$0xff]
            %v5421 = vld [vmem:[#allocation7 + $0x90] sm:$0xff]
            %v5422 = vld [vmem:[#allocation7 + $0x98] sm:$0xff]
            %v5423 = vld [vmem:[#allocation7 + $0xa0] sm:$0xff]
            %v5424 = vld [vmem:[#allocation7 + $0xa8] sm:$0xff]
            %v5425 = vld [vmem:[#allocation7 + $0xb0] sm:$0xff]
            %v5426 = vld [vmem:[#allocation7 + $0xb8] sm:$0xff]
            %v5427 = vld [vmem:[#allocation7 + $0xc0] sm:$0xff]
            %v5428 = vld [vmem:[#allocation7 + $0xc8] sm:$0xff]
            %v5429 = vld [vmem:[#allocation7 + $0xd0] sm:$0xff]
            %v5430 = vld [vmem:[#allocation7 + $0xd8] sm:$0xff]
            %v5431 = vld [vmem:[#allocation7 + $0xe0] sm:$0xff]
            %v5432 = vld [vmem:[#allocation7 + $0xe8] sm:$0xff]
            %v5433 = vld [vmem:[#allocation7 + $0xf0] sm:$0xff]
            %v5434 = vld [vmem:[#allocation7 + $0xf8] sm:$0xff]
            %v5437 = vunpack.c.l.s4 1983009808
            %v5438 = vunpack.c.0.s8 %v5437
            %v5439 = vlaneseq
            %v5440 = vshrl.u32 %v5439, 7
            %v5441 = vsub.s32 %v5438, %v5440
            %v5442 = vrot.slane %v5402, %v5441
            %v5443 = vcombine.high %v5442, %v5442
            %5446 = vmatprep.subr.mxu0 0.0
            %5447 = vmatpush1.msra.mxu0 %v5403
            %5448 = vmatprep.subr.mxu0 0.0
            %5449 = vmatpush1.msra.mxu0 %v5404
            %5450 = vmatprep.subr.mxu0 0.0
            %5451 = vmatpush1.msra.mxu0 %v5405
            %5452 = vmatprep.subr.mxu0 0.0
            %5453 = vmatpush1.msra.mxu0 %v5406
            %5454 = vmatprep.subr.mxu0 0.0
            %5455 = vmatpush1.msra.mxu0 %v5407
            %5456 = vmatprep.subr.mxu0 0.0
            %5457 = vmatpush1.msra.mxu0 %v5408
            %5458 = vmatprep.subr.mxu0 0.0
            %5459 = vmatpush1.msra.mxu0 %v5409
            %5460 = vmatprep.subr.mxu0 0.0
            %5461 = vmatpush1.msra.mxu0 %v5410
            %5462 = vmatprep.subr.mxu0 0.0
            %5463 = vmatpush1.msra.mxu0 %v5411
            %5464 = vmatprep.subr.mxu0 0.0
            %5465 = vmatpush1.msra.mxu0 %v5412
            %5466 = vmatprep.subr.mxu0 0.0
            %5467 = vmatpush1.msra.mxu0 %v5413
            %5468 = vmatprep.subr.mxu0 0.0
            %5469 = vmatpush1.msra.mxu0 %v5414
            %5470 = vmatprep.subr.mxu0 0.0
            %5471 = vmatpush1.msra.mxu0 %v5415
            %5472 = vmatprep.subr.mxu0 0.0
            %5473 = vmatpush1.msra.mxu0 %v5416
            %5474 = vmatprep.subr.mxu0 0.0
            %5475 = vmatpush1.msra.mxu0 %v5417
            %5476 = vmatprep.subr.mxu0 0.0
            %5477 = vmatpush1.msra.mxu0 %v5418
            %5478 = vmatprep.subr.mxu0 0.0
            %5479 = vmatpush1.msra.mxu0 %v5419
            %5480 = vmatprep.subr.mxu0 0.0
            %5481 = vmatpush1.msra.mxu0 %v5420
            %5482 = vmatprep.subr.mxu0 0.0
            %5483 = vmatpush1.msra.mxu0 %v5421
            %5484 = vmatprep.subr.mxu0 0.0
            %5485 = vmatpush1.msra.mxu0 %v5422
            %5486 = vmatprep.subr.mxu0 0.0
            %5487 = vmatpush1.msra.mxu0 %v5423
            %5488 = vmatprep.subr.mxu0 0.0
            %5489 = vmatpush1.msra.mxu0 %v5424
            %5490 = vmatprep.subr.mxu0 0.0
            %5491 = vmatpush1.msra.mxu0 %v5425
            %5492 = vmatprep.subr.mxu0 0.0
            %5493 = vmatpush1.msra.mxu0 %v5426
            %5494 = vmatprep.subr.mxu0 0.0
            %5495 = vmatpush1.msra.mxu0 %v5427
            %5496 = vmatprep.subr.mxu0 0.0
            %5497 = vmatpush1.msra.mxu0 %v5428
            %5498 = vmatprep.subr.mxu0 0.0
            %5499 = vmatpush1.msra.mxu0 %v5429
            %5500 = vmatprep.subr.mxu0 0.0
            %5501 = vmatpush1.msra.mxu0 %v5430
            %5502 = vmatprep.subr.mxu0 0.0
            %5503 = vmatpush1.msra.mxu0 %v5431
            %5504 = vmatprep.subr.mxu0 0.0
            %5505 = vmatpush1.msra.mxu0 %v5432
            %5506 = vmatprep.subr.mxu0 0.0
            %5507 = vmatpush1.msra.mxu0 %v5433
            %5508 = vmatprep.subr.mxu0 0.0
            %5509 = vmatpush1.msra.mxu0 %v5434
            %5510 = vmatprep.mubr.f32.mxu0 %v5443
            %5511 = vmatmul.mubr.f32.gmra.mrb[0].mxu0 %v5442
            %v5512 = vpop.f32.mrb[0].mxu0
            %v5513 = vadd.f32 0.0, %v5512
            %v5514 = vpop.f32.mrb[0].mxu0
            %5515 = vdwg.mxu0
            %vm5516 = vcmask 123904
            %5517 = vst.msk [vmem:[#allocation8] sm:$0x3] %vm5516, %v5513
            %v5518 = vld [vmem:[%s13] sm:$0xff]
            %v5519 = vld [vmem:[%s13 + $0x8] sm:$0xff]
            %v5520 = vld [vmem:[%s13 + $0x10] sm:$0xff]
            %v5521 = vld [vmem:[%s13 + $0x18] sm:$0xff]
            %v5522 = vld [vmem:[%s14] sm:$0x3]
            %v5524 = vlaneseq
            %v5525 = vshrl.u32 %v5524, 7
            %v5526 = vsub.s32 0, %v5525
            %v5527 = vrot.slane %v5522, %v5526
            %v5528 = vlaneseq
            %v5529 = vshrl.u32 %v5528, 7
            %v5530 = vsub.s32 1, %v5529
            %v5531 = vrot.slane %v5522, %v5530
            %v5535 = vsel %vm5381, %v5513, 0
            %5537 = vmatprep.subr.mxu0 %v5519
            %5538 = vmatpush1.msra.mxu0 %v5518
            %5539 = vmatprep.subr.mxu0 %v5521
            %5540 = vmatpush1.msra.mxu0 %v5520
            %5541 = vmatprep.subr.mxu0 0.0
            %5542 = vmatpush1.msra.mxu0 0.0
            %5543 = vmatprep.subr.mxu0 0.0
            %5544 = vmatpush1.msra.mxu0 0.0
            %5545 = vmatprep.subr.mxu0 0.0
            %5546 = vmatpush1.msra.mxu0 0.0
            %5547 = vmatprep.subr.mxu0 0.0
            %5548 = vmatpush1.msra.mxu0 0.0
            %5549 = vmatprep.subr.mxu0 0.0
            %5550 = vmatpush1.msra.mxu0 0.0
            %5551 = vmatprep.subr.mxu0 0.0
            %5552 = vmatpush1.msra.mxu0 0.0
            %5553 = vmatprep.subr.mxu0 0.0
            %5554 = vmatpush1.msra.mxu0 0.0
            %5555 = vmatprep.subr.mxu0 0.0
            %5556 = vmatpush1.msra.mxu0 0.0
            %5557 = vmatprep.subr.mxu0 0.0
            %5558 = vmatpush1.msra.mxu0 0.0
            %5559 = vmatprep.subr.mxu0 0.0
            %5560 = vmatpush1.msra.mxu0 0.0
            %5561 = vmatprep.subr.mxu0 0.0
            %5562 = vmatpush1.msra.mxu0 0.0
            %5563 = vmatprep.subr.mxu0 0.0
            %5564 = vmatpush1.msra.mxu0 0.0
            %5565 = vmatprep.subr.mxu0 0.0
            %5566 = vmatpush1.msra.mxu0 0.0
            %5567 = vmatprep.subr.mxu0 0.0
            %5568 = vmatpush1.msra.mxu0 0.0
            %5569 = vmatprep.subr.mxu0 0.0
            %5570 = vmatpush1.msra.mxu0 0.0
            %5571 = vmatprep.subr.mxu0 0.0
            %5572 = vmatpush1.msra.mxu0 0.0
            %5573 = vmatprep.subr.mxu0 0.0
            %5574 = vmatpush1.msra.mxu0 0.0
            %5575 = vmatprep.subr.mxu0 0.0
            %5576 = vmatpush1.msra.mxu0 0.0
            %5577 = vmatprep.subr.mxu0 0.0
            %5578 = vmatpush1.msra.mxu0 0.0
            %5579 = vmatprep.subr.mxu0 0.0
            %5580 = vmatpush1.msra.mxu0 0.0
            %5581 = vmatprep.subr.mxu0 0.0
            %5582 = vmatpush1.msra.mxu0 0.0
            %5583 = vmatprep.subr.mxu0 0.0
            %5584 = vmatpush1.msra.mxu0 0.0
            %5585 = vmatprep.subr.mxu0 0.0
            %5586 = vmatpush1.msra.mxu0 0.0
            %5587 = vmatprep.subr.mxu0 0.0
            %5588 = vmatpush1.msra.mxu0 0.0
            %5589 = vmatprep.subr.mxu0 0.0
            %5590 = vmatpush1.msra.mxu0 0.0
            %5591 = vmatprep.subr.mxu0 0.0
            %5592 = vmatpush1.msra.mxu0 0.0
            %5593 = vmatprep.subr.mxu0 0.0
            %5594 = vmatpush1.msra.mxu0 0.0
            %5595 = vmatprep.subr.mxu0 0.0
            %5596 = vmatpush1.msra.mxu0 0.0
            %5597 = vmatprep.subr.mxu0 0.0
            %5598 = vmatpush1.msra.mxu0 0.0
            %5599 = vmatprep.subr.mxu0 0.0
            %5600 = vmatpush1.msra.mxu0 0.0
            %5601 = vmatprep.mubr.f32.mxu0 0.0
            %5602 = vmatmul.mubr.f32.gmra.mrb[0].mxu0 %v5535
            %v5603 = vpop.f32.mrb[0].mxu0
            %v5604 = vadd.f32 %v5527, %v5603
            %v5605 = vpop.f32.mrb[0].mxu0
            %v5606 = vadd.f32 %v5531, %v5605
            %5607 = vdwg.mxu0
            %v5608 = vmax.f32 %v5604, 0.0
            %v5609 = vmax.f32 %v5606, 0.0
            %v5610 = vld [vmem:[%s15] sm:$0xff]
            %v5611 = vld [vmem:[%s15 + $0x8] sm:$0xff]
            %v5612 = vld [vmem:[%s15 + $0x10] sm:$0xff]
            %v5613 = vld [vmem:[%s15 + $0x18] sm:$0xff]
            %v5614 = vld [vmem:[%s15 + $0x20] sm:$0xff]
            %v5615 = vld [vmem:[%s15 + $0x28] sm:$0xff]
            %v5616 = vld [vmem:[%s15 + $0x30] sm:$0xff]
            %v5617 = vld [vmem:[%s15 + $0x38] sm:$0xff]
            %v5618 = vld [vmem:[%s15 + $0x40] sm:$0xff]
            %v5619 = vld [vmem:[%s15 + $0x48] sm:$0xff]
            %v5620 = vld [vmem:[%s15 + $0x50] sm:$0xff]
            %v5621 = vld [vmem:[%s15 + $0x58] sm:$0xff]
            %v5622 = vld [vmem:[%s15 + $0x60] sm:$0xff]
            %v5623 = vld [vmem:[%s15 + $0x68] sm:$0xff]
            %v5624 = vld [vmem:[%s15 + $0x70] sm:$0xff]
            %v5625 = vld [vmem:[%s15 + $0x78] sm:$0xff]
            %v5626 = vld [vmem:[%s15 + $0x80] sm:$0xff]
            %v5627 = vld [vmem:[%s15 + $0x88] sm:$0xff]
            %v5628 = vld [vmem:[%s15 + $0x90] sm:$0xff]
            %v5629 = vld [vmem:[%s15 + $0x98] sm:$0xff]
            %v5630 = vld [vmem:[%s15 + $0xa0] sm:$0xff]
            %v5631 = vld [vmem:[%s15 + $0xa8] sm:$0xff]
            %v5632 = vld [vmem:[%s15 + $0xb0] sm:$0xff]
            %v5633 = vld [vmem:[%s15 + $0xb8] sm:$0xff]
            %v5634 = vld [vmem:[%s16] sm:$0x1]
            %v5636 = vlaneseq
            %v5637 = vshrl.u32 %v5636, 7
            %v5638 = vsub.s32 0, %v5637
            %v5639 = vrot.slane %v5634, %v5638
            %vm5641 = vcmask 523264
            %v5643 = vsel %vm5641, %v5609, 0
            %5645 = vmatprep.subr.mxu0 0.0
            %5646 = vmatpush1.msra.mxu0 %v5610
            %5647 = vmatprep.subr.mxu0 0.0
            %5648 = vmatpush1.msra.mxu0 %v5611
            %5649 = vmatprep.subr.mxu0 0.0
            %5650 = vmatpush1.msra.mxu0 %v5612
            %5651 = vmatprep.subr.mxu0 0.0
            %5652 = vmatpush1.msra.mxu0 %v5613
            %5653 = vmatprep.subr.mxu0 0.0
            %5654 = vmatpush1.msra.mxu0 %v5614
            %5655 = vmatprep.subr.mxu0 0.0
            %5656 = vmatpush1.msra.mxu0 %v5615
            %5657 = vmatprep.subr.mxu0 0.0
            %5658 = vmatpush1.msra.mxu0 %v5616
            %5659 = vmatprep.subr.mxu0 0.0
            %5660 = vmatpush1.msra.mxu0 %v5617
            %5661 = vmatprep.subr.mxu0 0.0
            %5662 = vmatpush1.msra.mxu0 %v5618
            %5663 = vmatprep.subr.mxu0 0.0
            %5664 = vmatpush1.msra.mxu0 %v5619
            %5665 = vmatprep.subr.mxu0 0.0
            %5666 = vmatpush1.msra.mxu0 %v5620
            %5667 = vmatprep.subr.mxu0 0.0
            %5668 = vmatpush1.msra.mxu0 %v5621
            %5669 = vmatprep.subr.mxu0 0.0
            %5670 = vmatpush1.msra.mxu0 %v5622
            %5671 = vmatprep.subr.mxu0 0.0
            %5672 = vmatpush1.msra.mxu0 %v5623
            %5673 = vmatprep.subr.mxu0 0.0
            %5674 = vmatpush1.msra.mxu0 %v5624
            %5675 = vmatprep.subr.mxu0 0.0
            %5676 = vmatpush1.msra.mxu0 %v5625
            %5677 = vmatprep.subr.mxu0 0.0
            %5678 = vmatpush1.msra.mxu0 %v5626
            %5679 = vmatprep.subr.mxu0 0.0
            %5680 = vmatpush1.msra.mxu0 %v5627
            %5681 = vmatprep.subr.mxu0 0.0
            %5682 = vmatpush1.msra.mxu0 %v5628
            %5683 = vmatprep.subr.mxu0 0.0
            %5684 = vmatpush1.msra.mxu0 %v5629
            %5685 = vmatprep.subr.mxu0 0.0
            %5686 = vmatpush1.msra.mxu0 %v5630
            %5687 = vmatprep.subr.mxu0 0.0
            %5688 = vmatpush1.msra.mxu0 %v5631
            %5689 = vmatprep.subr.mxu0 0.0
            %5690 = vmatpush1.msra.mxu0 %v5632
            %5691 = vmatprep.subr.mxu0 0.0
            %5692 = vmatpush1.msra.mxu0 %v5633
            %5693 = vmatprep.subr.mxu0 0.0
            %5694 = vmatpush1.msra.mxu0 0.0
            %5695 = vmatprep.subr.mxu0 0.0
            %5696 = vmatpush1.msra.mxu0 0.0
            %5697 = vmatprep.subr.mxu0 0.0
            %5698 = vmatpush1.msra.mxu0 0.0
            %5699 = vmatprep.subr.mxu0 0.0
            %5700 = vmatpush1.msra.mxu0 0.0
            %5701 = vmatprep.subr.mxu0 0.0
            %5702 = vmatpush1.msra.mxu0 0.0
            %5703 = vmatprep.subr.mxu0 0.0
            %5704 = vmatpush1.msra.mxu0 0.0
            %5705 = vmatprep.subr.mxu0 0.0
            %5706 = vmatpush1.msra.mxu0 0.0
            %5707 = vmatprep.subr.mxu0 0.0
            %5708 = vmatpush1.msra.mxu0 0.0
            %5709 = vmatprep.mubr.f32.mxu0 %v5643
            %5710 = vmatmul.mubr.f32.gmra.mrb[0].mxu0 %v5608
            %v5711 = vpop.f32.mrb[0].mxu0
            %v5712 = vadd.f32 %v5639, %v5711
            %v5713 = vpop.f32.mrb[0].mxu0
            %5714 = vdwg.mxu0
            %vm5715 = vcmask 41984
            %5716 = vst.msk [vmem:[%s18] sm:$0x3] %vm5715, %v5712
          $region108: #{persuasion_gnn_forward.1} parent=103 // pred_fallthru
            _
        $region104: #{persuasion_gnn_forward.1} parent=87 // pred_fallthru
          _
        // Predicated region
        $region109: #{persuasion_gnn_forward.1} parent=87 // pred_check
          %p5717 = pneg %p431
        $region110: #{persuasion_gnn_forward.1} parent=87 // pred_check_branch
          %5719 = sbr.rel (%p5717) target = $region112
        $region111: #{persuasion_gnn_forward.1} parent=87 // pred_region
          %s5721 = ssub.s32 32, 32
          %5722 = vsyncadd [#allocation9], %s5721
          %s5724 = sshll.u32 [#allocation8], 4
          %s5725 = int_to_ptr.vmem [resolvable:$true] %s5724
          %5727 = dma.vmem_to_hbm [thread:$0]  %s5725, 32, %s17, [#allocation9]
        $region112: #{persuasion_gnn_forward.1} parent=87 // pred_fallthru
          _
        // Predicated region
        $region113: #{persuasion_gnn_forward.1} parent=87 // pred_check
          %p5728 = pneg %p452
        $region114: #{persuasion_gnn_forward.1} parent=87 // pred_check_branch
          %5730 = sbr.rel (%p5728) target = $region116
        $region115: #{persuasion_gnn_forward.1} parent=87 // pred_region
          _
        $region116: #{persuasion_gnn_forward.1} parent=87 // pred_fallthru
          _
        // Predicated region
        $region117: #{persuasion_gnn_forward.1} parent=87 // pred_check
          %p5731 = pneg %p431
        $region118: #{persuasion_gnn_forward.1} parent=87 // pred_check_branch
          %5733 = sbr.rel (%p5731) target = $region120
        $region119: #{persuasion_gnn_forward.1} parent=87 // pred_region
          %5734 = dma.done [#allocation9], 32
        $region120: #{persuasion_gnn_forward.1} parent=87 // pred_fallthru
          _
        // Predicated region
        $region121: #{persuasion_gnn_forward.1} parent=87 // pred_check
          %p5735 = pneg %p452
        $region122: #{persuasion_gnn_forward.1} parent=87 // pred_check_branch
          %5737 = sbr.rel (%p5735) target = $region124
        $region123: #{persuasion_gnn_forward.1} parent=87 // pred_region
          _
        $region124: #{persuasion_gnn_forward.1} parent=87 // pred_fallthru
          _
      $region88: #{persuasion_gnn_forward.1} parent=5 // pred_fallthru
        _
      %p5738 = scmp.le.s32.totalorder 2, %s26
      // Predicated region
      $region125: #{persuasion_gnn_forward.1} parent=5 // pred_check
        %p5739 = pneg %p5738
      $region126: #{persuasion_gnn_forward.1} parent=5 // pred_check_branch
        %5741 = sbr.rel (%p5739) target = $region128
      $region127: #{persuasion_gnn_forward.1} parent=5 // pred_region
        %s5742 = ssub.s32 %s26, 2
      $region128: #{persuasion_gnn_forward.1} parent=5 // pred_fallthru
        _
    $region6: #{persuasion_gnn_forward.1} parent=1 // loop_footer
      %s30 = sadd.s32 1, %s26
    $region7: #{persuasion_gnn_forward.1} parent=1 // loop_footer_branch
      %25 = sbr.rel target = $region3
    $region8: #{persuasion_gnn_forward.1} parent=1 // loop_exit
      _
    %5743 = vsyncpa [#allocation9], 1
    %s5744 = scalar_lea.sflag [#allocation9], 1
    %5745 = vsyncpa %s5744, 1

</llo_original>
